<compile_context>
chip_gen: v6e
topology: v6e:2x2x1
jax: 0.10.0
libtpu: 0.0.40
codegen_flags: <defaults>
</compile_context>

<pallas_src>
import jax
import jax.numpy as jnp
from jax.experimental import pallas as pl
from jax.experimental.pallas import tpu as pltpu

# ---------------------------------------------------------------------------
# Synthetic "args" for R_Actor (small shapes).
# other_vec_size must equal 2 * ego_vec_size (forward uses ego.repeat(1, 2)).
# conv_lstm_hidden_dim must be 1 so the RNN input dim is hidden*2 + 1*h*w,
# exactly as in __init__.
# ---------------------------------------------------------------------------
CFG = dict(
    num_agents=2,
    hidden_size=32,
    recurrent_N=1,
    vis_seq=2,
    lidar_map_size=8,
    vis_channels=1,            # uncertainty_type not in ('entropy', 'aci') -> c=1
    conv_lstm_input_dim=1,
    conv_lstm_hidden_dim=1,
    conv_lstm_num_layers=1,
    ego_vec_size=4,
    other_vec_size=8,
    layer_N=1,
    action_dim=5,              # Discrete(5) action space
)

LN_EPS = 1e-5
LANE = 128


# ---------------------------------------------------------------------------
# In-kernel helpers (pure functions of values / refs, traced into the kernel)
# ---------------------------------------------------------------------------
def _ln(x, g, b):
    mu = jnp.mean(x, axis=-1, keepdims=True)
    var = jnp.mean(jnp.square(x - mu), axis=-1, keepdims=True)
    return (x - mu) * jax.lax.rsqrt(var + LN_EPS) * g + b


def _dot(a, b):
    return jnp.dot(a, b, preferred_element_type=jnp.float32)


def _mlp_base(x, p):
    # MLPBase: feature LayerNorm -> (Linear+ReLU+LayerNorm) x (1 + layer_N)
    fn_g, fn_b, w1, b1, g1, be1, w2, b2, g2, be2 = p
    x = _ln(x, fn_g[...], fn_b[...])
    x = _ln(jnp.maximum(_dot(x, w1[...]) + b1[...], 0.0), g1[...], be1[...])
    x = _ln(jnp.maximum(_dot(x, w2[...]) + b2[...], 0.0), g2[...], be2[...])
    return x


def _make_fused_kernel(T, n_conv_layers, recurrent_N):
    """Build the single fused kernel (everything: ConvLSTM, MLPs, GRU, ACT)."""
    n_mlp = 10

    def kernel(*refs):
        it = iter(refs)
        nxt = lambda: next(it)

        # -------- inputs (order must match r_actor_forward) --------
        vis_ref = nxt()            # (T, Bb, cin*HW)   flat channel-major planes
        ego_ref = nxt()            # (Bb, ego)
        oth_ref = nxt()            # (Bb, other)       already relative
        rnn_ref = nxt()            # (rN, Bb, H)
        mask_ref = nxt()           # (Bb, 1)
        conv_p = [(nxt(), nxt(), nxt()) for _ in range(n_conv_layers)]
        ego_p = tuple(nxt() for _ in range(n_mlp))
        oth_p = tuple(nxt() for _ in range(n_mlp))
        wih_vis = nxt(); wih_ego = nxt(); wih_oth = nxt()   # (3, *, H) per-gate
        whh0 = nxt(); bih0 = nxt(); bhh0 = nxt()
        gru_rest = [(nxt(), nxt(), nxt(), nxt()) for _ in range(recurrent_N - 1)]
        ln_g = nxt(); ln_b = nxt()
        act_w = nxt(); act_b = nxt()
        # -------- outputs --------
        act_out = nxt(); logp_out = nxt(); rnn_out = nxt()
        assert next(it, None) is None

        Bb = ego_ref.shape[0]

        # ---- ConvLSTM over T steps.  3x3 conv (padding=1) is a fixed linear
        # map R^{HW} -> R^{HW}, precomputed as dense band matrices -> MXU.
        xs = [vis_ref[t] for t in range(T)]                # each (Bb, cin*HW)
        for (mx_ref, mh_ref, cb_ref) in conv_p:
            ch_hw = mh_ref.shape[-1]
            h = jnp.zeros((Bb, ch_hw), jnp.float32)
            c = jnp.zeros((Bb, ch_hw), jnp.float32)
            outs = []
            for t in range(T):
                x_t = xs[t]
                pre = [_dot(x_t, mx_ref[k]) + _dot(h, mh_ref[k]) + cb_ref[k]
                       for k in range(4)]                  # gate order i,f,o,g
                gi = jax.nn.sigmoid(pre[0])
                gf = jax.nn.sigmoid(pre[1])
                go = jax.nn.sigmoid(pre[2])
                gg = jnp.tanh(pre[3])
                c = gf * c + gi * gg
                h = go * jnp.tanh(c)
                outs.append(h)
            xs = outs                                      # input to next layer

        vis_sum = xs[0]
        for x in xs[1:]:
            vis_sum = vis_sum + x
        vis_x = vis_sum * (1.0 / T)                        # mean over time

        # ---- vector MLP bases
        ego_x = _mlp_base(ego_ref[...], ego_p)
        oth_x = _mlp_base(oth_ref[...], oth_p)

        # ---- GRU (recurrent_N layers, mask-reset hidden).  The concat
        # [vis_x | ego_x | oth_x] @ W_ih is done as three per-chunk matmuls so
        # no in-kernel lane concatenation / unaligned gate slicing is needed.
        m = mask_ref[...]                                  # (Bb, 1)
        hprev = rnn_ref[0] * m
        gi = [_dot(vis_x, wih_vis[k]) + _dot(ego_x, wih_ego[k])
              + _dot(oth_x, wih_oth[k]) + bih0[k] for k in range(3)]
        gh = [_dot(hprev, whh0[k]) + bhh0[k] for k in range(3)]
        r = jax.nn.sigmoid(gi[0] + gh[0])
        z = jax.nn.sigmoid(gi[1] + gh[1])
        n = jnp.tanh(gi[2] + r * gh[2])
        h_new = (1.0 - z) * n + z * hprev
        rnn_out[0] = h_new
        x_cur = h_new
        for l, (wih, whh, bih, bhh) in enumerate(gru_rest, start=1):
            hprev = rnn_ref[l] * m
            gi = [_dot(x_cur, wih[k]) + bih[k] for k in range(3)]
            gh = [_dot(hprev, whh[k]) + bhh[k] for k in range(3)]
            r = jax.nn.sigmoid(gi[0] + gh[0])
            z = jax.nn.sigmoid(gi[1] + gh[1])
            n = jnp.tanh(gi[2] + r * gh[2])
            h_new = (1.0 - z) * n + z * hprev
            rnn_out[l] = h_new
            x_cur = h_new

        feats = _ln(x_cur, ln_g[...], ln_b[...])

        # ---- ACT head (Discrete, deterministic): argmax action + its log-prob
        logits = _dot(feats, act_w[...]) + act_b[...]
        maxv = jnp.max(logits, axis=-1, keepdims=True)
        lse = jnp.log(jnp.sum(jnp.exp(logits - maxv), axis=-1, keepdims=True)) + maxv
        col = jax.lax.broadcasted_iota(jnp.int32, logits.shape, 1)
        idx = jnp.min(jnp.where(logits == maxv, col, jnp.int32(2 ** 30)),
                      axis=-1, keepdims=True)
        # lane-dense (128-wide) output stores; wrapper slices back to width 1
        act_out[...] = jnp.broadcast_to(idx, act_out.shape)
        logp_out[...] = jnp.broadcast_to(maxv - lse, logp_out.shape)

    return kernel


# ---------------------------------------------------------------------------
# Parameter preprocessing (done once, outside the hot forward path)
# ---------------------------------------------------------------------------
def _conv3x3_to_band(w3x3, S):
    # 3x3 cross-correlation with zero padding 1 on an SxS grid, expressed as a
    # dense (HW, HW) matrix M such that  x_flat @ M == conv2d(x, w3x3)_flat,
    # where x_flat[p] = x[p // S, p % S] (row-major).
    HW = S * S
    p = jnp.arange(HW)
    yi = (p // S)[:, None]; xi = (p % S)[:, None]
    yo = (p // S)[None, :]; xo = (p % S)[None, :]
    dy = yi - yo
    dx = xi - xo
    valid = (jnp.abs(dy) <= 1) & (jnp.abs(dx) <= 1)
    ky = jnp.clip(dy + 1, 0, 2)
    kx = jnp.clip(dx + 1, 0, 2)
    return jnp.where(valid, w3x3[ky, kx], 0.0).astype(jnp.float32)


def _build_gate_matrix(w_gate, S):
    # w_gate: (out_ch, in_ch, 3, 3) -> (in_ch*HW, out_ch*HW) conv-as-matmul
    oc, ic = w_gate.shape[0], w_gate.shape[1]
    cols = []
    for o in range(oc):
        rows = [_conv3x3_to_band(w_gate[o, i], S) for i in range(ic)]
        cols.append(jnp.concatenate(rows, axis=0))        # (ic*HW, HW)
    return jnp.concatenate(cols, axis=1)                  # (ic*HW, oc*HW)


def _prep_conv_layer(w, b, cin, ch, S):
    # w: PyTorch ConvLSTMCell weight (4*ch, cin+ch, 3, 3), input channel order
    #    [x ; h] (torch.cat([input, h_cur], dim=1)); gate order i, f, o, g.
    # b: (4*ch,)
    HW = S * S
    wx = w[:, :cin]
    wh = w[:, cin:]
    Mx = jnp.stack([_build_gate_matrix(wx[k * ch:(k + 1) * ch], S) for k in range(4)])
    Mh = jnp.stack([_build_gate_matrix(wh[k * ch:(k + 1) * ch], S) for k in range(4)])
    cb = jnp.stack([jnp.repeat(b[k * ch:(k + 1) * ch], HW).reshape(1, ch * HW)
                    for k in range(4)])
    return Mx, Mh, cb


def prepare_params(params):
    """Flatten params into the fixed kernel-argument order (weights stay f32)."""
    S = CFG["lidar_map_size"]
    flat = []
    cin = CFG["conv_lstm_input_dim"]
    for lp in params["conv_lstm"]:
        ch = lp["hidden_dim"]
        Mx, Mh, cb = _prep_conv_layer(lp["w"], lp["b"], cin, ch, S)
        flat += [Mx, Mh, cb]
        cin = ch
    for base in ("ego_base", "other_base"):
        p = params[base]
        flat += [p["fn_g"], p["fn_b"], p["w1"], p["b1"], p["ln1_g"], p["ln1_b"],
                 p["w2"], p["b2"], p["ln2_g"], p["ln2_b"]]
    r = params["rnn"]
    flat += [r["w_ih_vis"], r["w_ih_ego"], r["w_ih_oth"],
             r["w_hh"][0], r["b_ih"][0], r["b_hh"][0]]
    for l in range(1, CFG["recurrent_N"]):
        flat += [r["w_ih"][l], r["w_hh"][l], r["b_ih"][l], r["b_hh"][l]]
    flat += [r["ln_g"], r["ln_b"], params["act"]["w"], params["act"]["b"]]
    return {"flat": [jnp.asarray(a, jnp.float32) for a in flat]}


def _full_spec(shape):
    nd = len(shape)

    def imap(i):
        return (0,) * nd

    return pl.BlockSpec(shape, imap)


# ---------------------------------------------------------------------------
# Forward pass: single fused pallas_call, gridded over the (B*N) batch axis.
# ---------------------------------------------------------------------------
def r_actor_forward(prep, obs, rnn_states, masks, deterministic=True):
    # TODO(synk): stochastic sampling (deterministic=False) and
    # available_actions masking are not implemented; deterministic path only.
    T = CFG["vis_seq"]
    c = CFG["vis_channels"]
    S = CFG["lidar_map_size"]
    HW = S * S
    ego_d = CFG["ego_vec_size"]
    oth_d = CFG["other_vec_size"]
    H = CFG["hidden_size"]
    rN = CFG["recurrent_N"]

    obs = obs.astype(jnp.float32)
    rnn_states = rnn_states.astype(jnp.float32)
    masks = masks.astype(jnp.float32)

    # Agents folded into the batch: R_Actor applies the SAME shared sub-modules
    # to every agent, and the torch stacking/reshaping keeps the original
    # (b*N + agent) row order, so plain batched processing is equivalent.
    BT = obs.shape[0]
    vis_flat_dim = T * c * HW

    vis = obs[:, :vis_flat_dim].reshape(BT, T, c * HW)
    vis = jnp.transpose(vis, (1, 0, 2))                              # (T, BT, c*HW)
    vec_last = obs[:, vis_flat_dim:].reshape(BT, T, ego_d + oth_d)[:, -1]
    ego_vec = vec_last[:, :ego_d]
    rel_oth = vec_last[:, ego_d:] - jnp.tile(ego_vec, (1, 2))
    rnn_t = jnp.transpose(rnn_states, (1, 0, 2))                     # (rN, BT, H)

    # Batch tiling: block is a multiple of 8 (sublane), up to 128 rows.
    BB = min(128, ((BT + 7) // 8) * 8)
    G = pl.cdiv(BT, BB)
    BTp = G * BB
    pad = BTp - BT

    vis = jnp.pad(vis, ((0, 0), (0, pad), (0, 0)))
    ego_vec = jnp.pad(ego_vec, ((0, pad), (0, 0)))
    rel_oth = jnp.pad(rel_oth, ((0, pad), (0, 0)))
    rnn_t = jnp.pad(rnn_t, ((0, 0), (0, pad), (0, 0)))
    masks_p = jnp.pad(masks, ((0, pad), (0, 0)))

    data_inputs = [vis, ego_vec, rel_oth, rnn_t, masks_p]
    data_specs = [
        pl.BlockSpec((T, BB, c * HW), lambda i: (0, i, 0)),
        pl.BlockSpec((BB, ego_d), lambda i: (i, 0)),
        pl.BlockSpec((BB, oth_d), lambda i: (i, 0)),
        pl.BlockSpec((rN, BB, H), lambda i: (0, i, 0)),
        pl.BlockSpec((BB, 1), lambda i: (i, 0)),
    ]

    param_inputs = prep["flat"]
    param_specs = [_full_spec(a.shape) for a in param_inputs]

    out_shapes = (
        jax.ShapeDtypeStruct((BTp, LANE), jnp.int32),     # actions (lane-dense)
        jax.ShapeDtypeStruct((BTp, LANE), jnp.float32),   # log-probs (lane-dense)
        jax.ShapeDtypeStruct((rN, BTp, H), jnp.float32),  # new rnn states
    )
    out_specs = (
        pl.BlockSpec((BB, LANE), lambda i: (i, 0)),
        pl.BlockSpec((BB, LANE), lambda i: (i, 0)),
        pl.BlockSpec((rN, BB, H), lambda i: (0, i, 0)),
    )

    kernel = _make_fused_kernel(T, CFG["conv_lstm_num_layers"], rN)
    act_p, logp_p, rnn_p = pl.pallas_call(
        kernel,
        out_shape=out_shapes,
        grid=(G,),
        in_specs=data_specs + param_specs,
        out_specs=out_specs,
        compiler_params=pltpu.CompilerParams(
            dimension_semantics=("parallel",)),            # megacore batch split
    )(*data_inputs, *param_inputs)

    actions = act_p[:BT, :1]
    action_log_probs = logp_p[:BT, :1]
    rnn_states_new = jnp.transpose(rnn_p, (1, 0, 2))[:BT]
    return actions, action_log_probs, rnn_states_new


# ---------------------------------------------------------------------------
# Deterministic parameter initialization (synthetic weights).
# Conv weights use the PyTorch ConvLSTM layout; Linear/GRU weights are stored
# pre-transposed ((in, out) / per-gate (3, in, H)) — the mapping from torch's
# (3H, in) weight_ih is transpose + row-block split, it does not change math.
# ---------------------------------------------------------------------------
def init_params(key):
    H = CFG["hidden_size"]
    S = CFG["lidar_map_size"]
    HW = S * S
    A = CFG["action_dim"]
    rN = CFG["recurrent_N"]
    keys = iter(jax.random.split(key, 64))

    def nrm(shape, scale=0.1):
        return (scale * jax.random.normal(next(keys), shape)).astype(jnp.float32)

    def mlp_base_params(in_dim):
        return dict(
            fn_g=jnp.ones((1, in_dim), jnp.float32),
            fn_b=jnp.zeros((1, in_dim), jnp.float32),
            w1=nrm((in_dim, H)), b1=nrm((1, H)),
            ln1_g=jnp.ones((1, H), jnp.float32), ln1_b=jnp.zeros((1, H), jnp.float32),
            w2=nrm((H, H)), b2=nrm((1, H)),
            ln2_g=jnp.ones((1, H), jnp.float32), ln2_b=jnp.zeros((1, H), jnp.float32),
        )

    conv_layers = []
    cin = CFG["conv_lstm_input_dim"]
    for _ in range(CFG["conv_lstm_num_layers"]):
        ch = CFG["conv_lstm_hidden_dim"]
        conv_layers.append(dict(
            hidden_dim=ch,
            w=nrm((4 * ch, cin + ch, 3, 3)),   # PyTorch Conv2d weight layout
            b=nrm((4 * ch,)),
        ))
        cin = ch
    ch_last = CFG["conv_lstm_hidden_dim"]
    vis_feat = ch_last * HW

    rnn = dict(
        # layer 0 input = [vis_x (ch*HW) | ego_x (H) | oth_x (H)], gates (r,z,n)
        w_ih_vis=nrm((3, vis_feat, H)),
        w_ih_ego=nrm((3, H, H)),
        w_ih_oth=nrm((3, H, H)),
        w_hh=[nrm((3, H, H)) for _ in range(rN)],
        b_ih=[nrm((3, 1, H)) for _ in range(rN)],
        b_hh=[nrm((3, 1, H)) for _ in range(rN)],
        w_ih=[None] + [nrm((3, H, H)) for _ in range(1, rN)],
        ln_g=jnp.ones((1, H), jnp.float32),
        ln_b=jnp.zeros((1, H), jnp.float32),
    )

    act = dict(w=nrm((H, A)), b=nrm((1, A)))

    return dict(
        conv_lstm=conv_layers,
        ego_base=mlp_base_params(CFG["ego_vec_size"]),
        other_base=mlp_base_params(CFG["other_vec_size"]),
        rnn=rnn,
        act=act,
    )


if __name__ == "__main__":
    key = jax.random.PRNGKey(0)
    k_par, k_obs, k_rnn = jax.random.split(key, 3)

    params = init_params(k_par)
    prep = prepare_params(params)   # once-per-model weight preprocessing

    B_roll = 2
    N = CFG["num_agents"]
    obs_dim = (CFG["vis_seq"] * CFG["vis_channels"]
               * CFG["lidar_map_size"] * CFG["lidar_map_size"]
               + CFG["vis_seq"] * (CFG["ego_vec_size"] + CFG["other_vec_size"]))

    obs = jax.random.normal(k_obs, (B_roll * N, obs_dim), jnp.float32)
    rnn_states = jax.random.normal(
        k_rnn, (B_roll * N, CFG["recurrent_N"], CFG["hidden_size"]), jnp.float32)
    masks = jnp.ones((B_roll * N, 1), jnp.float32)

    fwd = jax.jit(r_actor_forward)
    actions, action_log_probs, rnn_states_out = fwd(prep, obs, rnn_states, masks)
    jax.block_until_ready((actions, action_log_probs, rnn_states_out))

    assert actions.shape == (B_roll * N, 1)
    assert action_log_probs.shape == (B_roll * N, 1)
    assert rnn_states_out.shape == (B_roll * N, CFG["recurrent_N"], CFG["hidden_size"])
    assert bool(jnp.all(jnp.isfinite(action_log_probs)))
    assert bool(jnp.all(jnp.isfinite(rnn_states_out)))
    print("KERNEL_OK")
</pallas_src>

<mosaic_0001>
module attributes {stable_mosaic.version = 11 : i64} {
  func.func @kernel(%arg0: i32, %arg1: memref<2x8x64xf32, #tpu.memory_space<vmem>>, %arg2: memref<8x4xf32, #tpu.memory_space<vmem>>, %arg3: memref<8x8xf32, #tpu.memory_space<vmem>>, %arg4: memref<1x8x32xf32, #tpu.memory_space<vmem>>, %arg5: memref<8x1xf32, #tpu.memory_space<vmem>>, %arg6: memref<4x64x64xf32, #tpu.memory_space<vmem>>, %arg7: memref<4x64x64xf32, #tpu.memory_space<vmem>>, %arg8: memref<4x1x64xf32, #tpu.memory_space<vmem>>, %arg9: memref<1x4xf32, #tpu.memory_space<vmem>>, %arg10: memref<1x4xf32, #tpu.memory_space<vmem>>, %arg11: memref<4x32xf32, #tpu.memory_space<vmem>>, %arg12: memref<1x32xf32, #tpu.memory_space<vmem>>, %arg13: memref<1x32xf32, #tpu.memory_space<vmem>>, %arg14: memref<1x32xf32, #tpu.memory_space<vmem>>, %arg15: memref<32x32xf32, #tpu.memory_space<vmem>>, %arg16: memref<1x32xf32, #tpu.memory_space<vmem>>, %arg17: memref<1x32xf32, #tpu.memory_space<vmem>>, %arg18: memref<1x32xf32, #tpu.memory_space<vmem>>, %arg19: memref<1x8xf32, #tpu.memory_space<vmem>>, %arg20: memref<1x8xf32, #tpu.memory_space<vmem>>, %arg21: memref<8x32xf32, #tpu.memory_space<vmem>>, %arg22: memref<1x32xf32, #tpu.memory_space<vmem>>, %arg23: memref<1x32xf32, #tpu.memory_space<vmem>>, %arg24: memref<1x32xf32, #tpu.memory_space<vmem>>, %arg25: memref<32x32xf32, #tpu.memory_space<vmem>>, %arg26: memref<1x32xf32, #tpu.memory_space<vmem>>, %arg27: memref<1x32xf32, #tpu.memory_space<vmem>>, %arg28: memref<1x32xf32, #tpu.memory_space<vmem>>, %arg29: memref<3x64x32xf32, #tpu.memory_space<vmem>>, %arg30: memref<3x32x32xf32, #tpu.memory_space<vmem>>, %arg31: memref<3x32x32xf32, #tpu.memory_space<vmem>>, %arg32: memref<3x32x32xf32, #tpu.memory_space<vmem>>, %arg33: memref<3x1x32xf32, #tpu.memory_space<vmem>>, %arg34: memref<3x1x32xf32, #tpu.memory_space<vmem>>, %arg35: memref<1x32xf32, #tpu.memory_space<vmem>>, %arg36: memref<1x32xf32, #tpu.memory_space<vmem>>, %arg37: memref<32x5xf32, #tpu.memory_space<vmem>>, %arg38: memref<1x5xf32, #tpu.memory_space<vmem>>, %arg39: memref<8x128xi32, #tpu.memory_space<vmem>>, %arg40: memref<8x128xf32, #tpu.memory_space<vmem>>, %arg41: memref<1x8x32xf32, #tpu.memory_space<vmem>>) attributes {dimension_semantics = [#tpu.dimension_semantics<parallel>], iteration_bounds = array<i64: 1>, scalar_prefetch = 0 : i64, scratch_operands = 0 : i64, tpu.core_type = #tpu.core_type<tc>, window_params = [{transform_indices = @transform_0, window_bounds = array<i64: 2, 8, 64>}, {transform_indices = @transform_1, window_bounds = array<i64: 8, 4>}, {transform_indices = @transform_2, window_bounds = array<i64: 8, 8>}, {transform_indices = @transform_3, window_bounds = array<i64: 1, 8, 32>}, {transform_indices = @transform_4, window_bounds = array<i64: 8, 1>}, {pipeline_mode = #tpu.pipeline_mode<synchronous>, transform_indices = @transform_5, window_bounds = array<i64: 4, 64, 64>}, {pipeline_mode = #tpu.pipeline_mode<synchronous>, transform_indices = @transform_6, window_bounds = array<i64: 4, 64, 64>}, {pipeline_mode = #tpu.pipeline_mode<synchronous>, transform_indices = @transform_7, window_bounds = array<i64: 4, 1, 64>}, {pipeline_mode = #tpu.pipeline_mode<synchronous>, transform_indices = @transform_8, window_bounds = array<i64: 1, 4>}, {pipeline_mode = #tpu.pipeline_mode<synchronous>, transform_indices = @transform_9, window_bounds = array<i64: 1, 4>}, {pipeline_mode = #tpu.pipeline_mode<synchronous>, transform_indices = @transform_10, window_bounds = array<i64: 4, 32>}, {pipeline_mode = #tpu.pipeline_mode<synchronous>, transform_indices = @transform_11, window_bounds = array<i64: 1, 32>}, {pipeline_mode = #tpu.pipeline_mode<synchronous>, transform_indices = @transform_12, window_bounds = array<i64: 1, 32>}, {pipeline_mode = #tpu.pipeline_mode<synchronous>, transform_indices = @transform_13, window_bounds = array<i64: 1, 32>}, {pipeline_mode = #tpu.pipeline_mode<synchronous>, transform_indices = @transform_14, window_bounds = array<i64: 32, 32>}, {pipeline_mode = #tpu.pipeline_mode<synchronous>, transform_indices = @transform_15, window_bounds = array<i64: 1, 32>}, {pipeline_mode = #tpu.pipeline_mode<synchronous>, transform_indices = @transform_16, window_bounds = array<i64: 1, 32>}, {pipeline_mode = #tpu.pipeline_mode<synchronous>, transform_indices = @transform_17, window_bounds = array<i64: 1, 32>}, {pipeline_mode = #tpu.pipeline_mode<synchronous>, transform_indices = @transform_18, window_bounds = array<i64: 1, 8>}, {pipeline_mode = #tpu.pipeline_mode<synchronous>, transform_indices = @transform_19, window_bounds = array<i64: 1, 8>}, {pipeline_mode = #tpu.pipeline_mode<synchronous>, transform_indices = @transform_20, window_bounds = array<i64: 8, 32>}, {pipeline_mode = #tpu.pipeline_mode<synchronous>, transform_indices = @transform_21, window_bounds = array<i64: 1, 32>}, {pipeline_mode = #tpu.pipeline_mode<synchronous>, transform_indices = @transform_22, window_bounds = array<i64: 1, 32>}, {pipeline_mode = #tpu.pipeline_mode<synchronous>, transform_indices = @transform_23, window_bounds = array<i64: 1, 32>}, {pipeline_mode = #tpu.pipeline_mode<synchronous>, transform_indices = @transform_24, window_bounds = array<i64: 32, 32>}, {pipeline_mode = #tpu.pipeline_mode<synchronous>, transform_indices = @transform_25, window_bounds = array<i64: 1, 32>}, {pipeline_mode = #tpu.pipeline_mode<synchronous>, transform_indices = @transform_26, window_bounds = array<i64: 1, 32>}, {pipeline_mode = #tpu.pipeline_mode<synchronous>, transform_indices = @transform_27, window_bounds = array<i64: 1, 32>}, {pipeline_mode = #tpu.pipeline_mode<synchronous>, transform_indices = @transform_28, window_bounds = array<i64: 3, 64, 32>}, {pipeline_mode = #tpu.pipeline_mode<synchronous>, transform_indices = @transform_29, window_bounds = array<i64: 3, 32, 32>}, {pipeline_mode = #tpu.pipeline_mode<synchronous>, transform_indices = @transform_30, window_bounds = array<i64: 3, 32, 32>}, {pipeline_mode = #tpu.pipeline_mode<synchronous>, transform_indices = @transform_31, window_bounds = array<i64: 3, 32, 32>}, {pipeline_mode = #tpu.pipeline_mode<synchronous>, transform_indices = @transform_32, window_bounds = array<i64: 3, 1, 32>}, {pipeline_mode = #tpu.pipeline_mode<synchronous>, transform_indices = @transform_33, window_bounds = array<i64: 3, 1, 32>}, {pipeline_mode = #tpu.pipeline_mode<synchronous>, transform_indices = @transform_34, window_bounds = array<i64: 1, 32>}, {pipeline_mode = #tpu.pipeline_mode<synchronous>, transform_indices = @transform_35, window_bounds = array<i64: 1, 32>}, {pipeline_mode = #tpu.pipeline_mode<synchronous>, transform_indices = @transform_36, window_bounds = array<i64: 32, 5>}, {pipeline_mode = #tpu.pipeline_mode<synchronous>, transform_indices = @transform_37, window_bounds = array<i64: 1, 5>}, {transform_indices = @transform_38, window_bounds = array<i64: 8, 128>}, {transform_indices = @transform_39, window_bounds = array<i64: 8, 128>}, {transform_indices = @transform_40, window_bounds = array<i64: 1, 8, 32>}]} {
    %c0 = arith.constant 0 : index
    %c0_0 = arith.constant 0 : index
    %c0_1 = arith.constant 0 : index
    %0 = vector.load %arg1[%c0, %c0_0, %c0_1] : memref<2x8x64xf32, #tpu.memory_space<vmem>>, vector<1x8x64xf32>
    %1 = vector.shape_cast %0 : vector<1x8x64xf32> to vector<8x64xf32>
    %c1 = arith.constant 1 : index
    %c0_2 = arith.constant 0 : index
    %c0_3 = arith.constant 0 : index
    %2 = vector.load %arg1[%c1, %c0_2, %c0_3] : memref<2x8x64xf32, #tpu.memory_space<vmem>>, vector<1x8x64xf32>
    %3 = vector.shape_cast %2 : vector<1x8x64xf32> to vector<8x64xf32>
    %cst = arith.constant 0.000000e+00 : f32
    %4 = vector.broadcast %cst : f32 to vector<8x64xf32>
    %cst_4 = arith.constant 0.000000e+00 : f32
    %5 = vector.broadcast %cst_4 : f32 to vector<8x64xf32>
    %c0_5 = arith.constant 0 : index
    %c0_6 = arith.constant 0 : index
    %c0_7 = arith.constant 0 : index
    %6 = vector.load %arg6[%c0_5, %c0_6, %c0_7] : memref<4x64x64xf32, #tpu.memory_space<vmem>>, vector<1x64x64xf32>
    %7 = vector.shape_cast %6 : vector<1x64x64xf32> to vector<64x64xf32>
    %cst_8 = arith.constant dense<0.000000e+00> : vector<8x64xf32>
    %8 = tpu.matmul %1, %7, %cst_8 {dimension_numbers = #tpu.dot_dimension_numbers<[1], [0], [0], [1], [0, 0, 1, 1], [], []>} : vector<8x64xf32>, vector<64x64xf32>, vector<8x64xf32> -> vector<8x64xf32>
    %c0_9 = arith.constant 0 : index
    %c0_10 = arith.constant 0 : index
    %c0_11 = arith.constant 0 : index
    %9 = vector.load %arg7[%c0_9, %c0_10, %c0_11] : memref<4x64x64xf32, #tpu.memory_space<vmem>>, vector<1x64x64xf32>
    %10 = vector.shape_cast %9 : vector<1x64x64xf32> to vector<64x64xf32>
    %cst_12 = arith.constant dense<0.000000e+00> : vector<8x64xf32>
    %11 = tpu.matmul %4, %10, %cst_12 {dimension_numbers = #tpu.dot_dimension_numbers<[1], [0], [0], [1], [0, 0, 1, 1], [], []>} : vector<8x64xf32>, vector<64x64xf32>, vector<8x64xf32> -> vector<8x64xf32>
    %12 = arith.addf %8, %11 : vector<8x64xf32>
    %c0_13 = arith.constant 0 : index
    %c0_14 = arith.constant 0 : index
    %c0_15 = arith.constant 0 : index
    %13 = vector.load %arg8[%c0_13, %c0_14, %c0_15] : memref<4x1x64xf32, #tpu.memory_space<vmem>>, vector<1x1x64xf32>
    %14 = vector.shape_cast %13 : vector<1x1x64xf32> to vector<1x64xf32>
    %15 = vector.broadcast %14 : vector<1x64xf32> to vector<8x64xf32>
    %16 = arith.addf %12, %15 : vector<8x64xf32>
    %c1_16 = arith.constant 1 : index
    %c0_17 = arith.constant 0 : index
    %c0_18 = arith.constant 0 : index
    %17 = vector.load %arg6[%c1_16, %c0_17, %c0_18] : memref<4x64x64xf32, #tpu.memory_space<vmem>>, vector<1x64x64xf32>
    %18 = vector.shape_cast %17 : vector<1x64x64xf32> to vector<64x64xf32>
    %cst_19 = arith.constant dense<0.000000e+00> : vector<8x64xf32>
    %19 = tpu.matmul %1, %18, %cst_19 {dimension_numbers = #tpu.dot_dimension_numbers<[1], [0], [0], [1], [0, 0, 1, 1], [], []>} : vector<8x64xf32>, vector<64x64xf32>, vector<8x64xf32> -> vector<8x64xf32>
    %c1_20 = arith.constant 1 : index
    %c0_21 = arith.constant 0 : index
    %c0_22 = arith.constant 0 : index
    %20 = vector.load %arg7[%c1_20, %c0_21, %c0_22] : memref<4x64x64xf32, #tpu.memory_space<vmem>>, vector<1x64x64xf32>
    %21 = vector.shape_cast %20 : vector<1x64x64xf32> to vector<64x64xf32>
    %cst_23 = arith.constant dense<0.000000e+00> : vector<8x64xf32>
    %22 = tpu.matmul %4, %21, %cst_23 {dimension_numbers = #tpu.dot_dimension_numbers<[1], [0], [0], [1], [0, 0, 1, 1], [], []>} : vector<8x64xf32>, vector<64x64xf32>, vector<8x64xf32> -> vector<8x64xf32>
    %23 = arith.addf %19, %22 : vector<8x64xf32>
    %c1_24 = arith.constant 1 : index
    %c0_25 = arith.constant 0 : index
    %c0_26 = arith.constant 0 : index
    %24 = vector.load %arg8[%c1_24, %c0_25, %c0_26] : memref<4x1x64xf32, #tpu.memory_space<vmem>>, vector<1x1x64xf32>
    %25 = vector.shape_cast %24 : vector<1x1x64xf32> to vector<1x64xf32>
    %26 = vector.broadcast %25 : vector<1x64xf32> to vector<8x64xf32>
    %27 = arith.addf %23, %26 : vector<8x64xf32>
    %c2 = arith.constant 2 : index
    %c0_27 = arith.constant 0 : index
    %c0_28 = arith.constant 0 : index
    %28 = vector.load %arg6[%c2, %c0_27, %c0_28] : memref<4x64x64xf32, #tpu.memory_space<vmem>>, vector<1x64x64xf32>
    %29 = vector.shape_cast %28 : vector<1x64x64xf32> to vector<64x64xf32>
    %cst_29 = arith.constant dense<0.000000e+00> : vector<8x64xf32>
    %30 = tpu.matmul %1, %29, %cst_29 {dimension_numbers = #tpu.dot_dimension_numbers<[1], [0], [0], [1], [0, 0, 1, 1], [], []>} : vector<8x64xf32>, vector<64x64xf32>, vector<8x64xf32> -> vector<8x64xf32>
    %c2_30 = arith.constant 2 : index
    %c0_31 = arith.constant 0 : index
    %c0_32 = arith.constant 0 : index
    %31 = vector.load %arg7[%c2_30, %c0_31, %c0_32] : memref<4x64x64xf32, #tpu.memory_space<vmem>>, vector<1x64x64xf32>
    %32 = vector.shape_cast %31 : vector<1x64x64xf32> to vector<64x64xf32>
    %cst_33 = arith.constant dense<0.000000e+00> : vector<8x64xf32>
    %33 = tpu.matmul %4, %32, %cst_33 {dimension_numbers = #tpu.dot_dimension_numbers<[1], [0], [0], [1], [0, 0, 1, 1], [], []>} : vector<8x64xf32>, vector<64x64xf32>, vector<8x64xf32> -> vector<8x64xf32>
    %34 = arith.addf %30, %33 : vector<8x64xf32>
    %c2_34 = arith.constant 2 : index
    %c0_35 = arith.constant 0 : index
    %c0_36 = arith.constant 0 : index
    %35 = vector.load %arg8[%c2_34, %c0_35, %c0_36] : memref<4x1x64xf32, #tpu.memory_space<vmem>>, vector<1x1x64xf32>
    %36 = vector.shape_cast %35 : vector<1x1x64xf32> to vector<1x64xf32>
    %37 = vector.broadcast %36 : vector<1x64xf32> to vector<8x64xf32>
    %38 = arith.addf %34, %37 : vector<8x64xf32>
    %c3 = arith.constant 3 : index
    %c0_37 = arith.constant 0 : index
    %c0_38 = arith.constant 0 : index
    %39 = vector.load %arg6[%c3, %c0_37, %c0_38] : memref<4x64x64xf32, #tpu.memory_space<vmem>>, vector<1x64x64xf32>
    %40 = vector.shape_cast %39 : vector<1x64x64xf32> to vector<64x64xf32>
    %cst_39 = arith.constant dense<0.000000e+00> : vector<8x64xf32>
    %41 = tpu.matmul %1, %40, %cst_39 {dimension_numbers = #tpu.dot_dimension_numbers<[1], [0], [0], [1], [0, 0, 1, 1], [], []>} : vector<8x64xf32>, vector<64x64xf32>, vector<8x64xf32> -> vector<8x64xf32>
    %c3_40 = arith.constant 3 : index
    %c0_41 = arith.constant 0 : index
    %c0_42 = arith.constant 0 : index
    %42 = vector.load %arg7[%c3_40, %c0_41, %c0_42] : memref<4x64x64xf32, #tpu.memory_space<vmem>>, vector<1x64x64xf32>
    %43 = vector.shape_cast %42 : vector<1x64x64xf32> to vector<64x64xf32>
    %cst_43 = arith.constant dense<0.000000e+00> : vector<8x64xf32>
    %44 = tpu.matmul %4, %43, %cst_43 {dimension_numbers = #tpu.dot_dimension_numbers<[1], [0], [0], [1], [0, 0, 1, 1], [], []>} : vector<8x64xf32>, vector<64x64xf32>, vector<8x64xf32> -> vector<8x64xf32>
    %45 = arith.addf %41, %44 : vector<8x64xf32>
    %c3_44 = arith.constant 3 : index
    %c0_45 = arith.constant 0 : index
    %c0_46 = arith.constant 0 : index
    %46 = vector.load %arg8[%c3_44, %c0_45, %c0_46] : memref<4x1x64xf32, #tpu.memory_space<vmem>>, vector<1x1x64xf32>
    %47 = vector.shape_cast %46 : vector<1x1x64xf32> to vector<1x64xf32>
    %48 = vector.broadcast %47 : vector<1x64xf32> to vector<8x64xf32>
    %49 = arith.addf %45, %48 : vector<8x64xf32>
    %50 = arith.negf %16 : vector<8x64xf32>
    %51 = math.exp %50 : vector<8x64xf32>
    %cst_47 = arith.constant 1.000000e+00 : f32
    %52 = vector.broadcast %cst_47 : f32 to vector<8x64xf32>
    %53 = arith.addf %52, %51 : vector<8x64xf32>
    %54 = arith.divf %52, %53 : vector<8x64xf32>
    %55 = arith.negf %27 : vector<8x64xf32>
    %56 = math.exp %55 : vector<8x64xf32>
    %cst_48 = arith.constant 1.000000e+00 : f32
    %57 = vector.broadcast %cst_48 : f32 to vector<8x64xf32>
    %58 = arith.addf %57, %56 : vector<8x64xf32>
    %59 = arith.divf %57, %58 : vector<8x64xf32>
    %60 = arith.negf %38 : vector<8x64xf32>
    %61 = math.exp %60 : vector<8x64xf32>
    %cst_49 = arith.constant 1.000000e+00 : f32
    %62 = vector.broadcast %cst_49 : f32 to vector<8x64xf32>
    %63 = arith.addf %62, %61 : vector<8x64xf32>
    %64 = arith.divf %62, %63 : vector<8x64xf32>
    %65 = math.tanh %49 : vector<8x64xf32>
    %66 = arith.mulf %59, %5 : vector<8x64xf32>
    %67 = arith.mulf %54, %65 : vector<8x64xf32>
    %68 = arith.addf %66, %67 : vector<8x64xf32>
    %69 = math.tanh %68 : vector<8x64xf32>
    %70 = arith.mulf %64, %69 : vector<8x64xf32>
    %c0_50 = arith.constant 0 : index
    %c0_51 = arith.constant 0 : index
    %c0_52 = arith.constant 0 : index
    %71 = vector.load %arg6[%c0_50, %c0_51, %c0_52] : memref<4x64x64xf32, #tpu.memory_space<vmem>>, vector<1x64x64xf32>
    %72 = vector.shape_cast %71 : vector<1x64x64xf32> to vector<64x64xf32>
    %cst_53 = arith.constant dense<0.000000e+00> : vector<8x64xf32>
    %73 = tpu.matmul %3, %72, %cst_53 {dimension_numbers = #tpu.dot_dimension_numbers<[1], [0], [0], [1], [0, 0, 1, 1], [], []>} : vector<8x64xf32>, vector<64x64xf32>, vector<8x64xf32> -> vector<8x64xf32>
    %c0_54 = arith.constant 0 : index
    %c0_55 = arith.constant 0 : index
    %c0_56 = arith.constant 0 : index
    %74 = vector.load %arg7[%c0_54, %c0_55, %c0_56] : memref<4x64x64xf32, #tpu.memory_space<vmem>>, vector<1x64x64xf32>
    %75 = vector.shape_cast %74 : vector<1x64x64xf32> to vector<64x64xf32>
    %cst_57 = arith.constant dense<0.000000e+00> : vector<8x64xf32>
    %76 = tpu.matmul %70, %75, %cst_57 {dimension_numbers = #tpu.dot_dimension_numbers<[1], [0], [0], [1], [0, 0, 1, 1], [], []>} : vector<8x64xf32>, vector<64x64xf32>, vector<8x64xf32> -> vector<8x64xf32>
    %77 = arith.addf %73, %76 : vector<8x64xf32>
    %c0_58 = arith.constant 0 : index
    %c0_59 = arith.constant 0 : index
    %c0_60 = arith.constant 0 : index
    %78 = vector.load %arg8[%c0_58, %c0_59, %c0_60] : memref<4x1x64xf32, #tpu.memory_space<vmem>>, vector<1x1x64xf32>
    %79 = vector.shape_cast %78 : vector<1x1x64xf32> to vector<1x64xf32>
    %80 = vector.broadcast %79 : vector<1x64xf32> to vector<8x64xf32>
    %81 = arith.addf %77, %80 : vector<8x64xf32>
    %c1_61 = arith.constant 1 : index
    %c0_62 = arith.constant 0 : index
    %c0_63 = arith.constant 0 : index
    %82 = vector.load %arg6[%c1_61, %c0_62, %c0_63] : memref<4x64x64xf32, #tpu.memory_space<vmem>>, vector<1x64x64xf32>
    %83 = vector.shape_cast %82 : vector<1x64x64xf32> to vector<64x64xf32>
    %cst_64 = arith.constant dense<0.000000e+00> : vector<8x64xf32>
    %84 = tpu.matmul %3, %83, %cst_64 {dimension_numbers = #tpu.dot_dimension_numbers<[1], [0], [0], [1], [0, 0, 1, 1], [], []>} : vector<8x64xf32>, vector<64x64xf32>, vector<8x64xf32> -> vector<8x64xf32>
    %c1_65 = arith.constant 1 : index
    %c0_66 = arith.constant 0 : index
    %c0_67 = arith.constant 0 : index
    %85 = vector.load %arg7[%c1_65, %c0_66, %c0_67] : memref<4x64x64xf32, #tpu.memory_space<vmem>>, vector<1x64x64xf32>
    %86 = vector.shape_cast %85 : vector<1x64x64xf32> to vector<64x64xf32>
    %cst_68 = arith.constant dense<0.000000e+00> : vector<8x64xf32>
    %87 = tpu.matmul %70, %86, %cst_68 {dimension_numbers = #tpu.dot_dimension_numbers<[1], [0], [0], [1], [0, 0, 1, 1], [], []>} : vector<8x64xf32>, vector<64x64xf32>, vector<8x64xf32> -> vector<8x64xf32>
    %88 = arith.addf %84, %87 : vector<8x64xf32>
    %c1_69 = arith.constant 1 : index
    %c0_70 = arith.constant 0 : index
    %c0_71 = arith.constant 0 : index
    %89 = vector.load %arg8[%c1_69, %c0_70, %c0_71] : memref<4x1x64xf32, #tpu.memory_space<vmem>>, vector<1x1x64xf32>
    %90 = vector.shape_cast %89 : vector<1x1x64xf32> to vector<1x64xf32>
    %91 = vector.broadcast %90 : vector<1x64xf32> to vector<8x64xf32>
    %92 = arith.addf %88, %91 : vector<8x64xf32>
    %c2_72 = arith.constant 2 : index
    %c0_73 = arith.constant 0 : index
    %c0_74 = arith.constant 0 : index
    %93 = vector.load %arg6[%c2_72, %c0_73, %c0_74] : memref<4x64x64xf32, #tpu.memory_space<vmem>>, vector<1x64x64xf32>
    %94 = vector.shape_cast %93 : vector<1x64x64xf32> to vector<64x64xf32>
    %cst_75 = arith.constant dense<0.000000e+00> : vector<8x64xf32>
    %95 = tpu.matmul %3, %94, %cst_75 {dimension_numbers = #tpu.dot_dimension_numbers<[1], [0], [0], [1], [0, 0, 1, 1], [], []>} : vector<8x64xf32>, vector<64x64xf32>, vector<8x64xf32> -> vector<8x64xf32>
    %c2_76 = arith.constant 2 : index
    %c0_77 = arith.constant 0 : index
    %c0_78 = arith.constant 0 : index
    %96 = vector.load %arg7[%c2_76, %c0_77, %c0_78] : memref<4x64x64xf32, #tpu.memory_space<vmem>>, vector<1x64x64xf32>
    %97 = vector.shape_cast %96 : vector<1x64x64xf32> to vector<64x64xf32>
    %cst_79 = arith.constant dense<0.000000e+00> : vector<8x64xf32>
    %98 = tpu.matmul %70, %97, %cst_79 {dimension_numbers = #tpu.dot_dimension_numbers<[1], [0], [0], [1], [0, 0, 1, 1], [], []>} : vector<8x64xf32>, vector<64x64xf32>, vector<8x64xf32> -> vector<8x64xf32>
    %99 = arith.addf %95, %98 : vector<8x64xf32>
    %c2_80 = arith.constant 2 : index
    %c0_81 = arith.constant 0 : index
    %c0_82 = arith.constant 0 : index
    %100 = vector.load %arg8[%c2_80, %c0_81, %c0_82] : memref<4x1x64xf32, #tpu.memory_space<vmem>>, vector<1x1x64xf32>
    %101 = vector.shape_cast %100 : vector<1x1x64xf32> to vector<1x64xf32>
    %102 = vector.broadcast %101 : vector<1x64xf32> to vector<8x64xf32>
    %103 = arith.addf %99, %102 : vector<8x64xf32>
    %c3_83 = arith.constant 3 : index
    %c0_84 = arith.constant 0 : index
    %c0_85 = arith.constant 0 : index
    %104 = vector.load %arg6[%c3_83, %c0_84, %c0_85] : memref<4x64x64xf32, #tpu.memory_space<vmem>>, vector<1x64x64xf32>
    %105 = vector.shape_cast %104 : vector<1x64x64xf32> to vector<64x64xf32>
    %cst_86 = arith.constant dense<0.000000e+00> : vector<8x64xf32>
    %106 = tpu.matmul %3, %105, %cst_86 {dimension_numbers = #tpu.dot_dimension_numbers<[1], [0], [0], [1], [0, 0, 1, 1], [], []>} : vector<8x64xf32>, vector<64x64xf32>, vector<8x64xf32> -> vector<8x64xf32>
    %c3_87 = arith.constant 3 : index
    %c0_88 = arith.constant 0 : index
    %c0_89 = arith.constant 0 : index
    %107 = vector.load %arg7[%c3_87, %c0_88, %c0_89] : memref<4x64x64xf32, #tpu.memory_space<vmem>>, vector<1x64x64xf32>
    %108 = vector.shape_cast %107 : vector<1x64x64xf32> to vector<64x64xf32>
    %cst_90 = arith.constant dense<0.000000e+00> : vector<8x64xf32>
    %109 = tpu.matmul %70, %108, %cst_90 {dimension_numbers = #tpu.dot_dimension_numbers<[1], [0], [0], [1], [0, 0, 1, 1], [], []>} : vector<8x64xf32>, vector<64x64xf32>, vector<8x64xf32> -> vector<8x64xf32>
    %110 = arith.addf %106, %109 : vector<8x64xf32>
    %c3_91 = arith.constant 3 : index
    %c0_92 = arith.constant 0 : index
    %c0_93 = arith.constant 0 : index
    %111 = vector.load %arg8[%c3_91, %c0_92, %c0_93] : memref<4x1x64xf32, #tpu.memory_space<vmem>>, vector<1x1x64xf32>
    %112 = vector.shape_cast %111 : vector<1x1x64xf32> to vector<1x64xf32>
    %113 = vector.broadcast %112 : vector<1x64xf32> to vector<8x64xf32>
    %114 = arith.addf %110, %113 : vector<8x64xf32>
    %115 = arith.negf %81 : vector<8x64xf32>
    %116 = math.exp %115 : vector<8x64xf32>
    %cst_94 = arith.constant 1.000000e+00 : f32
    %117 = vector.broadcast %cst_94 : f32 to vector<8x64xf32>
    %118 = arith.addf %117, %116 : vector<8x64xf32>
    %119 = arith.divf %117, %118 : vector<8x64xf32>
    %120 = arith.negf %92 : vector<8x64xf32>
    %121 = math.exp %120 : vector<8x64xf32>
    %cst_95 = arith.constant 1.000000e+00 : f32
    %122 = vector.broadcast %cst_95 : f32 to vector<8x64xf32>
    %123 = arith.addf %122, %121 : vector<8x64xf32>
    %124 = arith.divf %122, %123 : vector<8x64xf32>
    %125 = arith.negf %103 : vector<8x64xf32>
    %126 = math.exp %125 : vector<8x64xf32>
    %cst_96 = arith.constant 1.000000e+00 : f32
    %127 = vector.broadcast %cst_96 : f32 to vector<8x64xf32>
    %128 = arith.addf %127, %126 : vector<8x64xf32>
    %129 = arith.divf %127, %128 : vector<8x64xf32>
    %130 = math.tanh %114 : vector<8x64xf32>
    %131 = arith.mulf %124, %68 : vector<8x64xf32>
    %132 = arith.mulf %119, %130 : vector<8x64xf32>
    %133 = arith.addf %131, %132 : vector<8x64xf32>
    %134 = math.tanh %133 : vector<8x64xf32>
    %135 = arith.mulf %129, %134 : vector<8x64xf32>
    %136 = arith.addf %70, %135 : vector<8x64xf32>
    %cst_97 = arith.constant 5.000000e-01 : f32
    %137 = vector.broadcast %cst_97 : f32 to vector<8x64xf32>
    %138 = arith.mulf %136, %137 : vector<8x64xf32>
    %c0_98 = arith.constant 0 : index
    %c0_99 = arith.constant 0 : index
    %139 = vector.load %arg2[%c0_98, %c0_99] : memref<8x4xf32, #tpu.memory_space<vmem>>, vector<8x4xf32>
    %c0_100 = arith.constant 0 : index
    %c0_101 = arith.constant 0 : index
    %140 = vector.load %arg9[%c0_100, %c0_101] : memref<1x4xf32, #tpu.memory_space<vmem>>, vector<1x4xf32>
    %c0_102 = arith.constant 0 : index
    %c0_103 = arith.constant 0 : index
    %141 = vector.load %arg10[%c0_102, %c0_103] : memref<1x4xf32, #tpu.memory_space<vmem>>, vector<1x4xf32>
    %cst_104 = arith.constant dense<0.000000e+00> : vector<8xf32>
    %142 = vector.multi_reduction <add>, %139, %cst_104 [1] : vector<8x4xf32> to vector<8xf32>
    %143 = vector.shape_cast %142 : vector<8xf32> to vector<8x1xf32>
    %cst_105 = arith.constant 4.000000e+00 : f32
    %144 = vector.broadcast %cst_105 : f32 to vector<8x1xf32>
    %145 = arith.divf %143, %144 : vector<8x1xf32>
    %146 = vector.broadcast %145 : vector<8x1xf32> to vector<8x4xf32>
    %147 = arith.subf %139, %146 : vector<8x4xf32>
    %148 = arith.mulf %147, %147 : vector<8x4xf32>
    %cst_106 = arith.constant dense<0.000000e+00> : vector<8xf32>
    %149 = vector.multi_reduction <add>, %148, %cst_106 [1] : vector<8x4xf32> to vector<8xf32>
    %150 = vector.shape_cast %149 : vector<8xf32> to vector<8x1xf32>
    %cst_107 = arith.constant 4.000000e+00 : f32
    %151 = vector.broadcast %cst_107 : f32 to vector<8x1xf32>
    %152 = arith.divf %150, %151 : vector<8x1xf32>
    %153 = vector.broadcast %145 : vector<8x1xf32> to vector<8x4xf32>
    %154 = arith.subf %139, %153 : vector<8x4xf32>
    %cst_108 = arith.constant 9.99999974E-6 : f32
    %155 = vector.broadcast %cst_108 : f32 to vector<8x1xf32>
    %156 = arith.addf %152, %155 : vector<8x1xf32>
    %157 = math.rsqrt %156 : vector<8x1xf32>
    %158 = vector.broadcast %157 : vector<8x1xf32> to vector<8x4xf32>
    %159 = arith.mulf %154, %158 : vector<8x4xf32>
    %160 = vector.broadcast %140 : vector<1x4xf32> to vector<8x4xf32>
    %161 = arith.mulf %159, %160 : vector<8x4xf32>
    %162 = vector.broadcast %141 : vector<1x4xf32> to vector<8x4xf32>
    %163 = arith.addf %161, %162 : vector<8x4xf32>
    %c0_109 = arith.constant 0 : index
    %c0_110 = arith.constant 0 : index
    %164 = vector.load %arg11[%c0_109, %c0_110] : memref<4x32xf32, #tpu.memory_space<vmem>>, vector<4x32xf32>
    %cst_111 = arith.constant dense<0.000000e+00> : vector<8x32xf32>
    %165 = tpu.matmul %163, %164, %cst_111 {dimension_numbers = #tpu.dot_dimension_numbers<[1], [0], [0], [1], [0, 0, 1, 1], [], []>} : vector<8x4xf32>, vector<4x32xf32>, vector<8x32xf32> -> vector<8x32xf32>
    %c0_112 = arith.constant 0 : index
    %c0_113 = arith.constant 0 : index
    %166 = vector.load %arg12[%c0_112, %c0_113] : memref<1x32xf32, #tpu.memory_space<vmem>>, vector<1x32xf32>
    %167 = vector.broadcast %166 : vector<1x32xf32> to vector<8x32xf32>
    %168 = arith.addf %165, %167 : vector<8x32xf32>
    %cst_114 = arith.constant 0.000000e+00 : f32
    %169 = vector.broadcast %cst_114 : f32 to vector<8x32xf32>
    %170 = arith.maximumf %168, %169 : vector<8x32xf32>
    %c0_115 = arith.constant 0 : index
    %c0_116 = arith.constant 0 : index
    %171 = vector.load %arg13[%c0_115, %c0_116] : memref<1x32xf32, #tpu.memory_space<vmem>>, vector<1x32xf32>
    %c0_117 = arith.constant 0 : index
    %c0_118 = arith.constant 0 : index
    %172 = vector.load %arg14[%c0_117, %c0_118] : memref<1x32xf32, #tpu.memory_space<vmem>>, vector<1x32xf32>
    %cst_119 = arith.constant dense<0.000000e+00> : vector<8xf32>
    %173 = vector.multi_reduction <add>, %170, %cst_119 [1] : vector<8x32xf32> to vector<8xf32>
    %174 = vector.shape_cast %173 : vector<8xf32> to vector<8x1xf32>
    %cst_120 = arith.constant 3.200000e+01 : f32
    %175 = vector.broadcast %cst_120 : f32 to vector<8x1xf32>
    %176 = arith.divf %174, %175 : vector<8x1xf32>
    %177 = vector.broadcast %176 : vector<8x1xf32> to vector<8x32xf32>
    %178 = arith.subf %170, %177 : vector<8x32xf32>
    %179 = arith.mulf %178, %178 : vector<8x32xf32>
    %cst_121 = arith.constant dense<0.000000e+00> : vector<8xf32>
    %180 = vector.multi_reduction <add>, %179, %cst_121 [1] : vector<8x32xf32> to vector<8xf32>
    %181 = vector.shape_cast %180 : vector<8xf32> to vector<8x1xf32>
    %cst_122 = arith.constant 3.200000e+01 : f32
    %182 = vector.broadcast %cst_122 : f32 to vector<8x1xf32>
    %183 = arith.divf %181, %182 : vector<8x1xf32>
    %184 = vector.broadcast %176 : vector<8x1xf32> to vector<8x32xf32>
    %185 = arith.subf %170, %184 : vector<8x32xf32>
    %cst_123 = arith.constant 9.99999974E-6 : f32
    %186 = vector.broadcast %cst_123 : f32 to vector<8x1xf32>
    %187 = arith.addf %183, %186 : vector<8x1xf32>
    %188 = math.rsqrt %187 : vector<8x1xf32>
    %189 = vector.broadcast %188 : vector<8x1xf32> to vector<8x32xf32>
    %190 = arith.mulf %185, %189 : vector<8x32xf32>
    %191 = vector.broadcast %171 : vector<1x32xf32> to vector<8x32xf32>
    %192 = arith.mulf %190, %191 : vector<8x32xf32>
    %193 = vector.broadcast %172 : vector<1x32xf32> to vector<8x32xf32>
    %194 = arith.addf %192, %193 : vector<8x32xf32>
    %c0_124 = arith.constant 0 : index
    %c0_125 = arith.constant 0 : index
    %195 = vector.load %arg15[%c0_124, %c0_125] : memref<32x32xf32, #tpu.memory_space<vmem>>, vector<32x32xf32>
    %cst_126 = arith.constant dense<0.000000e+00> : vector<8x32xf32>
    %196 = tpu.matmul %194, %195, %cst_126 {dimension_numbers = #tpu.dot_dimension_numbers<[1], [0], [0], [1], [0, 0, 1, 1], [], []>} : vector<8x32xf32>, vector<32x32xf32>, vector<8x32xf32> -> vector<8x32xf32>
    %c0_127 = arith.constant 0 : index
    %c0_128 = arith.constant 0 : index
    %197 = vector.load %arg16[%c0_127, %c0_128] : memref<1x32xf32, #tpu.memory_space<vmem>>, vector<1x32xf32>
    %198 = vector.broadcast %197 : vector<1x32xf32> to vector<8x32xf32>
    %199 = arith.addf %196, %198 : vector<8x32xf32>
    %cst_129 = arith.constant 0.000000e+00 : f32
    %200 = vector.broadcast %cst_129 : f32 to vector<8x32xf32>
    %201 = arith.maximumf %199, %200 : vector<8x32xf32>
    %c0_130 = arith.constant 0 : index
    %c0_131 = arith.constant 0 : index
    %202 = vector.load %arg17[%c0_130, %c0_131] : memref<1x32xf32, #tpu.memory_space<vmem>>, vector<1x32xf32>
    %c0_132 = arith.constant 0 : index
    %c0_133 = arith.constant 0 : index
    %203 = vector.load %arg18[%c0_132, %c0_133] : memref<1x32xf32, #tpu.memory_space<vmem>>, vector<1x32xf32>
    %cst_134 = arith.constant dense<0.000000e+00> : vector<8xf32>
    %204 = vector.multi_reduction <add>, %201, %cst_134 [1] : vector<8x32xf32> to vector<8xf32>
    %205 = vector.shape_cast %204 : vector<8xf32> to vector<8x1xf32>
    %cst_135 = arith.constant 3.200000e+01 : f32
    %206 = vector.broadcast %cst_135 : f32 to vector<8x1xf32>
    %207 = arith.divf %205, %206 : vector<8x1xf32>
    %208 = vector.broadcast %207 : vector<8x1xf32> to vector<8x32xf32>
    %209 = arith.subf %201, %208 : vector<8x32xf32>
    %210 = arith.mulf %209, %209 : vector<8x32xf32>
    %cst_136 = arith.constant dense<0.000000e+00> : vector<8xf32>
    %211 = vector.multi_reduction <add>, %210, %cst_136 [1] : vector<8x32xf32> to vector<8xf32>
    %212 = vector.shape_cast %211 : vector<8xf32> to vector<8x1xf32>
    %cst_137 = arith.constant 3.200000e+01 : f32
    %213 = vector.broadcast %cst_137 : f32 to vector<8x1xf32>
    %214 = arith.divf %212, %213 : vector<8x1xf32>
    %215 = vector.broadcast %207 : vector<8x1xf32> to vector<8x32xf32>
    %216 = arith.subf %201, %215 : vector<8x32xf32>
    %cst_138 = arith.constant 9.99999974E-6 : f32
    %217 = vector.broadcast %cst_138 : f32 to vector<8x1xf32>
    %218 = arith.addf %214, %217 : vector<8x1xf32>
    %219 = math.rsqrt %218 : vector<8x1xf32>
    %220 = vector.broadcast %219 : vector<8x1xf32> to vector<8x32xf32>
    %221 = arith.mulf %216, %220 : vector<8x32xf32>
    %222 = vector.broadcast %202 : vector<1x32xf32> to vector<8x32xf32>
    %223 = arith.mulf %221, %222 : vector<8x32xf32>
    %224 = vector.broadcast %203 : vector<1x32xf32> to vector<8x32xf32>
    %225 = arith.addf %223, %224 : vector<8x32xf32>
    %c0_139 = arith.constant 0 : index
    %c0_140 = arith.constant 0 : index
    %226 = vector.load %arg3[%c0_139, %c0_140] : memref<8x8xf32, #tpu.memory_space<vmem>>, vector<8x8xf32>
    %c0_141 = arith.constant 0 : index
    %c0_142 = arith.constant 0 : index
    %227 = vector.load %arg19[%c0_141, %c0_142] : memref<1x8xf32, #tpu.memory_space<vmem>>, vector<1x8xf32>
    %c0_143 = arith.constant 0 : index
    %c0_144 = arith.constant 0 : index
    %228 = vector.load %arg20[%c0_143, %c0_144] : memref<1x8xf32, #tpu.memory_space<vmem>>, vector<1x8xf32>
    %cst_145 = arith.constant dense<0.000000e+00> : vector<8xf32>
    %229 = vector.multi_reduction <add>, %226, %cst_145 [1] : vector<8x8xf32> to vector<8xf32>
    %230 = vector.shape_cast %229 : vector<8xf32> to vector<8x1xf32>
    %cst_146 = arith.constant 8.000000e+00 : f32
    %231 = vector.broadcast %cst_146 : f32 to vector<8x1xf32>
    %232 = arith.divf %230, %231 : vector<8x1xf32>
    %233 = vector.broadcast %232 : vector<8x1xf32> to vector<8x8xf32>
    %234 = arith.subf %226, %233 : vector<8x8xf32>
    %235 = arith.mulf %234, %234 : vector<8x8xf32>
    %cst_147 = arith.constant dense<0.000000e+00> : vector<8xf32>
    %236 = vector.multi_reduction <add>, %235, %cst_147 [1] : vector<8x8xf32> to vector<8xf32>
    %237 = vector.shape_cast %236 : vector<8xf32> to vector<8x1xf32>
    %cst_148 = arith.constant 8.000000e+00 : f32
    %238 = vector.broadcast %cst_148 : f32 to vector<8x1xf32>
    %239 = arith.divf %237, %238 : vector<8x1xf32>
    %240 = vector.broadcast %232 : vector<8x1xf32> to vector<8x8xf32>
    %241 = arith.subf %226, %240 : vector<8x8xf32>
    %cst_149 = arith.constant 9.99999974E-6 : f32
    %242 = vector.broadcast %cst_149 : f32 to vector<8x1xf32>
    %243 = arith.addf %239, %242 : vector<8x1xf32>
    %244 = math.rsqrt %243 : vector<8x1xf32>
    %245 = vector.broadcast %244 : vector<8x1xf32> to vector<8x8xf32>
    %246 = arith.mulf %241, %245 : vector<8x8xf32>
    %247 = vector.broadcast %227 : vector<1x8xf32> to vector<8x8xf32>
    %248 = arith.mulf %246, %247 : vector<8x8xf32>
    %249 = vector.broadcast %228 : vector<1x8xf32> to vector<8x8xf32>
    %250 = arith.addf %248, %249 : vector<8x8xf32>
    %c0_150 = arith.constant 0 : index
    %c0_151 = arith.constant 0 : index
    %251 = vector.load %arg21[%c0_150, %c0_151] : memref<8x32xf32, #tpu.memory_space<vmem>>, vector<8x32xf32>
    %cst_152 = arith.constant dense<0.000000e+00> : vector<8x32xf32>
    %252 = tpu.matmul %250, %251, %cst_152 {dimension_numbers = #tpu.dot_dimension_numbers<[1], [0], [0], [1], [0, 0, 1, 1], [], []>} : vector<8x8xf32>, vector<8x32xf32>, vector<8x32xf32> -> vector<8x32xf32>
    %c0_153 = arith.constant 0 : index
    %c0_154 = arith.constant 0 : index
    %253 = vector.load %arg22[%c0_153, %c0_154] : memref<1x32xf32, #tpu.memory_space<vmem>>, vector<1x32xf32>
    %254 = vector.broadcast %253 : vector<1x32xf32> to vector<8x32xf32>
    %255 = arith.addf %252, %254 : vector<8x32xf32>
    %cst_155 = arith.constant 0.000000e+00 : f32
    %256 = vector.broadcast %cst_155 : f32 to vector<8x32xf32>
    %257 = arith.maximumf %255, %256 : vector<8x32xf32>
    %c0_156 = arith.constant 0 : index
    %c0_157 = arith.constant 0 : index
    %258 = vector.load %arg23[%c0_156, %c0_157] : memref<1x32xf32, #tpu.memory_space<vmem>>, vector<1x32xf32>
    %c0_158 = arith.constant 0 : index
    %c0_159 = arith.constant 0 : index
    %259 = vector.load %arg24[%c0_158, %c0_159] : memref<1x32xf32, #tpu.memory_space<vmem>>, vector<1x32xf32>
    %cst_160 = arith.constant dense<0.000000e+00> : vector<8xf32>
    %260 = vector.multi_reduction <add>, %257, %cst_160 [1] : vector<8x32xf32> to vector<8xf32>
    %261 = vector.shape_cast %260 : vector<8xf32> to vector<8x1xf32>
    %cst_161 = arith.constant 3.200000e+01 : f32
    %262 = vector.broadcast %cst_161 : f32 to vector<8x1xf32>
    %263 = arith.divf %261, %262 : vector<8x1xf32>
    %264 = vector.broadcast %263 : vector<8x1xf32> to vector<8x32xf32>
    %265 = arith.subf %257, %264 : vector<8x32xf32>
    %266 = arith.mulf %265, %265 : vector<8x32xf32>
    %cst_162 = arith.constant dense<0.000000e+00> : vector<8xf32>
    %267 = vector.multi_reduction <add>, %266, %cst_162 [1] : vector<8x32xf32> to vector<8xf32>
    %268 = vector.shape_cast %267 : vector<8xf32> to vector<8x1xf32>
    %cst_163 = arith.constant 3.200000e+01 : f32
    %269 = vector.broadcast %cst_163 : f32 to vector<8x1xf32>
    %270 = arith.divf %268, %269 : vector<8x1xf32>
    %271 = vector.broadcast %263 : vector<8x1xf32> to vector<8x32xf32>
    %272 = arith.subf %257, %271 : vector<8x32xf32>
    %cst_164 = arith.constant 9.99999974E-6 : f32
    %273 = vector.broadcast %cst_164 : f32 to vector<8x1xf32>
    %274 = arith.addf %270, %273 : vector<8x1xf32>
    %275 = math.rsqrt %274 : vector<8x1xf32>
    %276 = vector.broadcast %275 : vector<8x1xf32> to vector<8x32xf32>
    %277 = arith.mulf %272, %276 : vector<8x32xf32>
    %278 = vector.broadcast %258 : vector<1x32xf32> to vector<8x32xf32>
    %279 = arith.mulf %277, %278 : vector<8x32xf32>
    %280 = vector.broadcast %259 : vector<1x32xf32> to vector<8x32xf32>
    %281 = arith.addf %279, %280 : vector<8x32xf32>
    %c0_165 = arith.constant 0 : index
    %c0_166 = arith.constant 0 : index
    %282 = vector.load %arg25[%c0_165, %c0_166] : memref<32x32xf32, #tpu.memory_space<vmem>>, vector<32x32xf32>
    %cst_167 = arith.constant dense<0.000000e+00> : vector<8x32xf32>
    %283 = tpu.matmul %281, %282, %cst_167 {dimension_numbers = #tpu.dot_dimension_numbers<[1], [0], [0], [1], [0, 0, 1, 1], [], []>} : vector<8x32xf32>, vector<32x32xf32>, vector<8x32xf32> -> vector<8x32xf32>
    %c0_168 = arith.constant 0 : index
    %c0_169 = arith.constant 0 : index
    %284 = vector.load %arg26[%c0_168, %c0_169] : memref<1x32xf32, #tpu.memory_space<vmem>>, vector<1x32xf32>
    %285 = vector.broadcast %284 : vector<1x32xf32> to vector<8x32xf32>
    %286 = arith.addf %283, %285 : vector<8x32xf32>
    %cst_170 = arith.constant 0.000000e+00 : f32
    %287 = vector.broadcast %cst_170 : f32 to vector<8x32xf32>
    %288 = arith.maximumf %286, %287 : vector<8x32xf32>
    %c0_171 = arith.constant 0 : index
    %c0_172 = arith.constant 0 : index
    %289 = vector.load %arg27[%c0_171, %c0_172] : memref<1x32xf32, #tpu.memory_space<vmem>>, vector<1x32xf32>
    %c0_173 = arith.constant 0 : index
    %c0_174 = arith.constant 0 : index
    %290 = vector.load %arg28[%c0_173, %c0_174] : memref<1x32xf32, #tpu.memory_space<vmem>>, vector<1x32xf32>
    %cst_175 = arith.constant dense<0.000000e+00> : vector<8xf32>
    %291 = vector.multi_reduction <add>, %288, %cst_175 [1] : vector<8x32xf32> to vector<8xf32>
    %292 = vector.shape_cast %291 : vector<8xf32> to vector<8x1xf32>
    %cst_176 = arith.constant 3.200000e+01 : f32
    %293 = vector.broadcast %cst_176 : f32 to vector<8x1xf32>
    %294 = arith.divf %292, %293 : vector<8x1xf32>
    %295 = vector.broadcast %294 : vector<8x1xf32> to vector<8x32xf32>
    %296 = arith.subf %288, %295 : vector<8x32xf32>
    %297 = arith.mulf %296, %296 : vector<8x32xf32>
    %cst_177 = arith.constant dense<0.000000e+00> : vector<8xf32>
    %298 = vector.multi_reduction <add>, %297, %cst_177 [1] : vector<8x32xf32> to vector<8xf32>
    %299 = vector.shape_cast %298 : vector<8xf32> to vector<8x1xf32>
    %cst_178 = arith.constant 3.200000e+01 : f32
    %300 = vector.broadcast %cst_178 : f32 to vector<8x1xf32>
    %301 = arith.divf %299, %300 : vector<8x1xf32>
    %302 = vector.broadcast %294 : vector<8x1xf32> to vector<8x32xf32>
    %303 = arith.subf %288, %302 : vector<8x32xf32>
    %cst_179 = arith.constant 9.99999974E-6 : f32
    %304 = vector.broadcast %cst_179 : f32 to vector<8x1xf32>
    %305 = arith.addf %301, %304 : vector<8x1xf32>
    %306 = math.rsqrt %305 : vector<8x1xf32>
    %307 = vector.broadcast %306 : vector<8x1xf32> to vector<8x32xf32>
    %308 = arith.mulf %303, %307 : vector<8x32xf32>
    %309 = vector.broadcast %289 : vector<1x32xf32> to vector<8x32xf32>
    %310 = arith.mulf %308, %309 : vector<8x32xf32>
    %311 = vector.broadcast %290 : vector<1x32xf32> to vector<8x32xf32>
    %312 = arith.addf %310, %311 : vector<8x32xf32>
    %c0_180 = arith.constant 0 : index
    %c0_181 = arith.constant 0 : index
    %313 = vector.load %arg5[%c0_180, %c0_181] : memref<8x1xf32, #tpu.memory_space<vmem>>, vector<8x1xf32>
    %c0_182 = arith.constant 0 : index
    %c0_183 = arith.constant 0 : index
    %c0_184 = arith.constant 0 : index
    %314 = vector.load %arg4[%c0_182, %c0_183, %c0_184] : memref<1x8x32xf32, #tpu.memory_space<vmem>>, vector<1x8x32xf32>
    %315 = vector.shape_cast %314 : vector<1x8x32xf32> to vector<8x32xf32>
    %316 = vector.broadcast %313 : vector<8x1xf32> to vector<8x32xf32>
    %317 = arith.mulf %315, %316 : vector<8x32xf32>
    %c0_185 = arith.constant 0 : index
    %c0_186 = arith.constant 0 : index
    %c0_187 = arith.constant 0 : index
    %318 = vector.load %arg29[%c0_185, %c0_186, %c0_187] : memref<3x64x32xf32, #tpu.memory_space<vmem>>, vector<1x64x32xf32>
    %319 = vector.shape_cast %318 : vector<1x64x32xf32> to vector<64x32xf32>
    %cst_188 = arith.constant dense<0.000000e+00> : vector<8x32xf32>
    %320 = tpu.matmul %138, %319, %cst_188 {dimension_numbers = #tpu.dot_dimension_numbers<[1], [0], [0], [1], [0, 0, 1, 1], [], []>} : vector<8x64xf32>, vector<64x32xf32>, vector<8x32xf32> -> vector<8x32xf32>
    %c0_189 = arith.constant 0 : index
    %c0_190 = arith.constant 0 : index
    %c0_191 = arith.constant 0 : index
    %321 = vector.load %arg30[%c0_189, %c0_190, %c0_191] : memref<3x32x32xf32, #tpu.memory_space<vmem>>, vector<1x32x32xf32>
    %322 = vector.shape_cast %321 : vector<1x32x32xf32> to vector<32x32xf32>
    %cst_192 = arith.constant dense<0.000000e+00> : vector<8x32xf32>
    %323 = tpu.matmul %225, %322, %cst_192 {dimension_numbers = #tpu.dot_dimension_numbers<[1], [0], [0], [1], [0, 0, 1, 1], [], []>} : vector<8x32xf32>, vector<32x32xf32>, vector<8x32xf32> -> vector<8x32xf32>
    %324 = arith.addf %320, %323 : vector<8x32xf32>
    %c0_193 = arith.constant 0 : index
    %c0_194 = arith.constant 0 : index
    %c0_195 = arith.constant 0 : index
    %325 = vector.load %arg31[%c0_193, %c0_194, %c0_195] : memref<3x32x32xf32, #tpu.memory_space<vmem>>, vector<1x32x32xf32>
    %326 = vector.shape_cast %325 : vector<1x32x32xf32> to vector<32x32xf32>
    %cst_196 = arith.constant dense<0.000000e+00> : vector<8x32xf32>
    %327 = tpu.matmul %312, %326, %cst_196 {dimension_numbers = #tpu.dot_dimension_numbers<[1], [0], [0], [1], [0, 0, 1, 1], [], []>} : vector<8x32xf32>, vector<32x32xf32>, vector<8x32xf32> -> vector<8x32xf32>
    %328 = arith.addf %324, %327 : vector<8x32xf32>
    %c0_197 = arith.constant 0 : index
    %c0_198 = arith.constant 0 : index
    %c0_199 = arith.constant 0 : index
    %329 = vector.load %arg33[%c0_197, %c0_198, %c0_199] : memref<3x1x32xf32, #tpu.memory_space<vmem>>, vector<1x1x32xf32>
    %330 = vector.shape_cast %329 : vector<1x1x32xf32> to vector<1x32xf32>
    %331 = vector.broadcast %330 : vector<1x32xf32> to vector<8x32xf32>
    %332 = arith.addf %328, %331 : vector<8x32xf32>
    %c1_200 = arith.constant 1 : index
    %c0_201 = arith.constant 0 : index
    %c0_202 = arith.constant 0 : index
    %333 = vector.load %arg29[%c1_200, %c0_201, %c0_202] : memref<3x64x32xf32, #tpu.memory_space<vmem>>, vector<1x64x32xf32>
    %334 = vector.shape_cast %333 : vector<1x64x32xf32> to vector<64x32xf32>
    %cst_203 = arith.constant dense<0.000000e+00> : vector<8x32xf32>
    %335 = tpu.matmul %138, %334, %cst_203 {dimension_numbers = #tpu.dot_dimension_numbers<[1], [0], [0], [1], [0, 0, 1, 1], [], []>} : vector<8x64xf32>, vector<64x32xf32>, vector<8x32xf32> -> vector<8x32xf32>
    %c1_204 = arith.constant 1 : index
    %c0_205 = arith.constant 0 : index
    %c0_206 = arith.constant 0 : index
    %336 = vector.load %arg30[%c1_204, %c0_205, %c0_206] : memref<3x32x32xf32, #tpu.memory_space<vmem>>, vector<1x32x32xf32>
    %337 = vector.shape_cast %336 : vector<1x32x32xf32> to vector<32x32xf32>
    %cst_207 = arith.constant dense<0.000000e+00> : vector<8x32xf32>
    %338 = tpu.matmul %225, %337, %cst_207 {dimension_numbers = #tpu.dot_dimension_numbers<[1], [0], [0], [1], [0, 0, 1, 1], [], []>} : vector<8x32xf32>, vector<32x32xf32>, vector<8x32xf32> -> vector<8x32xf32>
    %339 = arith.addf %335, %338 : vector<8x32xf32>
    %c1_208 = arith.constant 1 : index
    %c0_209 = arith.constant 0 : index
    %c0_210 = arith.constant 0 : index
    %340 = vector.load %arg31[%c1_208, %c0_209, %c0_210] : memref<3x32x32xf32, #tpu.memory_space<vmem>>, vector<1x32x32xf32>
    %341 = vector.shape_cast %340 : vector<1x32x32xf32> to vector<32x32xf32>
    %cst_211 = arith.constant dense<0.000000e+00> : vector<8x32xf32>
    %342 = tpu.matmul %312, %341, %cst_211 {dimension_numbers = #tpu.dot_dimension_numbers<[1], [0], [0], [1], [0, 0, 1, 1], [], []>} : vector<8x32xf32>, vector<32x32xf32>, vector<8x32xf32> -> vector<8x32xf32>
    %343 = arith.addf %339, %342 : vector<8x32xf32>
    %c1_212 = arith.constant 1 : index
    %c0_213 = arith.constant 0 : index
    %c0_214 = arith.constant 0 : index
    %344 = vector.load %arg33[%c1_212, %c0_213, %c0_214] : memref<3x1x32xf32, #tpu.memory_space<vmem>>, vector<1x1x32xf32>
    %345 = vector.shape_cast %344 : vector<1x1x32xf32> to vector<1x32xf32>
    %346 = vector.broadcast %345 : vector<1x32xf32> to vector<8x32xf32>
    %347 = arith.addf %343, %346 : vector<8x32xf32>
    %c2_215 = arith.constant 2 : index
    %c0_216 = arith.constant 0 : index
    %c0_217 = arith.constant 0 : index
    %348 = vector.load %arg29[%c2_215, %c0_216, %c0_217] : memref<3x64x32xf32, #tpu.memory_space<vmem>>, vector<1x64x32xf32>
    %349 = vector.shape_cast %348 : vector<1x64x32xf32> to vector<64x32xf32>
    %cst_218 = arith.constant dense<0.000000e+00> : vector<8x32xf32>
    %350 = tpu.matmul %138, %349, %cst_218 {dimension_numbers = #tpu.dot_dimension_numbers<[1], [0], [0], [1], [0, 0, 1, 1], [], []>} : vector<8x64xf32>, vector<64x32xf32>, vector<8x32xf32> -> vector<8x32xf32>
    %c2_219 = arith.constant 2 : index
    %c0_220 = arith.constant 0 : index
    %c0_221 = arith.constant 0 : index
    %351 = vector.load %arg30[%c2_219, %c0_220, %c0_221] : memref<3x32x32xf32, #tpu.memory_space<vmem>>, vector<1x32x32xf32>
    %352 = vector.shape_cast %351 : vector<1x32x32xf32> to vector<32x32xf32>
    %cst_222 = arith.constant dense<0.000000e+00> : vector<8x32xf32>
    %353 = tpu.matmul %225, %352, %cst_222 {dimension_numbers = #tpu.dot_dimension_numbers<[1], [0], [0], [1], [0, 0, 1, 1], [], []>} : vector<8x32xf32>, vector<32x32xf32>, vector<8x32xf32> -> vector<8x32xf32>
    %354 = arith.addf %350, %353 : vector<8x32xf32>
    %c2_223 = arith.constant 2 : index
    %c0_224 = arith.constant 0 : index
    %c0_225 = arith.constant 0 : index
    %355 = vector.load %arg31[%c2_223, %c0_224, %c0_225] : memref<3x32x32xf32, #tpu.memory_space<vmem>>, vector<1x32x32xf32>
    %356 = vector.shape_cast %355 : vector<1x32x32xf32> to vector<32x32xf32>
    %cst_226 = arith.constant dense<0.000000e+00> : vector<8x32xf32>
    %357 = tpu.matmul %312, %356, %cst_226 {dimension_numbers = #tpu.dot_dimension_numbers<[1], [0], [0], [1], [0, 0, 1, 1], [], []>} : vector<8x32xf32>, vector<32x32xf32>, vector<8x32xf32> -> vector<8x32xf32>
    %358 = arith.addf %354, %357 : vector<8x32xf32>
    %c2_227 = arith.constant 2 : index
    %c0_228 = arith.constant 0 : index
    %c0_229 = arith.constant 0 : index
    %359 = vector.load %arg33[%c2_227, %c0_228, %c0_229] : memref<3x1x32xf32, #tpu.memory_space<vmem>>, vector<1x1x32xf32>
    %360 = vector.shape_cast %359 : vector<1x1x32xf32> to vector<1x32xf32>
    %361 = vector.broadcast %360 : vector<1x32xf32> to vector<8x32xf32>
    %362 = arith.addf %358, %361 : vector<8x32xf32>
    %c0_230 = arith.constant 0 : index
    %c0_231 = arith.constant 0 : index
    %c0_232 = arith.constant 0 : index
    %363 = vector.load %arg32[%c0_230, %c0_231, %c0_232] : memref<3x32x32xf32, #tpu.memory_space<vmem>>, vector<1x32x32xf32>
    %364 = vector.shape_cast %363 : vector<1x32x32xf32> to vector<32x32xf32>
    %cst_233 = arith.constant dense<0.000000e+00> : vector<8x32xf32>
    %365 = tpu.matmul %317, %364, %cst_233 {dimension_numbers = #tpu.dot_dimension_numbers<[1], [0], [0], [1], [0, 0, 1, 1], [], []>} : vector<8x32xf32>, vector<32x32xf32>, vector<8x32xf32> -> vector<8x32xf32>
    %c0_234 = arith.constant 0 : index
    %c0_235 = arith.constant 0 : index
    %c0_236 = arith.constant 0 : index
    %366 = vector.load %arg34[%c0_234, %c0_235, %c0_236] : memref<3x1x32xf32, #tpu.memory_space<vmem>>, vector<1x1x32xf32>
    %367 = vector.shape_cast %366 : vector<1x1x32xf32> to vector<1x32xf32>
    %368 = vector.broadcast %367 : vector<1x32xf32> to vector<8x32xf32>
    %369 = arith.addf %365, %368 : vector<8x32xf32>
    %c1_237 = arith.constant 1 : index
    %c0_238 = arith.constant 0 : index
    %c0_239 = arith.constant 0 : index
    %370 = vector.load %arg32[%c1_237, %c0_238, %c0_239] : memref<3x32x32xf32, #tpu.memory_space<vmem>>, vector<1x32x32xf32>
    %371 = vector.shape_cast %370 : vector<1x32x32xf32> to vector<32x32xf32>
    %cst_240 = arith.constant dense<0.000000e+00> : vector<8x32xf32>
    %372 = tpu.matmul %317, %371, %cst_240 {dimension_numbers = #tpu.dot_dimension_numbers<[1], [0], [0], [1], [0, 0, 1, 1], [], []>} : vector<8x32xf32>, vector<32x32xf32>, vector<8x32xf32> -> vector<8x32xf32>
    %c1_241 = arith.constant 1 : index
    %c0_242 = arith.constant 0 : index
    %c0_243 = arith.constant 0 : index
    %373 = vector.load %arg34[%c1_241, %c0_242, %c0_243] : memref<3x1x32xf32, #tpu.memory_space<vmem>>, vector<1x1x32xf32>
    %374 = vector.shape_cast %373 : vector<1x1x32xf32> to vector<1x32xf32>
    %375 = vector.broadcast %374 : vector<1x32xf32> to vector<8x32xf32>
    %376 = arith.addf %372, %375 : vector<8x32xf32>
    %c2_244 = arith.constant 2 : index
    %c0_245 = arith.constant 0 : index
    %c0_246 = arith.constant 0 : index
    %377 = vector.load %arg32[%c2_244, %c0_245, %c0_246] : memref<3x32x32xf32, #tpu.memory_space<vmem>>, vector<1x32x32xf32>
    %378 = vector.shape_cast %377 : vector<1x32x32xf32> to vector<32x32xf32>
    %cst_247 = arith.constant dense<0.000000e+00> : vector<8x32xf32>
    %379 = tpu.matmul %317, %378, %cst_247 {dimension_numbers = #tpu.dot_dimension_numbers<[1], [0], [0], [1], [0, 0, 1, 1], [], []>} : vector<8x32xf32>, vector<32x32xf32>, vector<8x32xf32> -> vector<8x32xf32>
    %c2_248 = arith.constant 2 : index
    %c0_249 = arith.constant 0 : index
    %c0_250 = arith.constant 0 : index
    %380 = vector.load %arg34[%c2_248, %c0_249, %c0_250] : memref<3x1x32xf32, #tpu.memory_space<vmem>>, vector<1x1x32xf32>
    %381 = vector.shape_cast %380 : vector<1x1x32xf32> to vector<1x32xf32>
    %382 = vector.broadcast %381 : vector<1x32xf32> to vector<8x32xf32>
    %383 = arith.addf %379, %382 : vector<8x32xf32>
    %384 = arith.addf %332, %369 : vector<8x32xf32>
    %385 = arith.negf %384 : vector<8x32xf32>
    %386 = math.exp %385 : vector<8x32xf32>
    %cst_251 = arith.constant 1.000000e+00 : f32
    %387 = vector.broadcast %cst_251 : f32 to vector<8x32xf32>
    %388 = arith.addf %387, %386 : vector<8x32xf32>
    %389 = arith.divf %387, %388 : vector<8x32xf32>
    %390 = arith.addf %347, %376 : vector<8x32xf32>
    %391 = arith.negf %390 : vector<8x32xf32>
    %392 = math.exp %391 : vector<8x32xf32>
    %cst_252 = arith.constant 1.000000e+00 : f32
    %393 = vector.broadcast %cst_252 : f32 to vector<8x32xf32>
    %394 = arith.addf %393, %392 : vector<8x32xf32>
    %395 = arith.divf %393, %394 : vector<8x32xf32>
    %396 = arith.mulf %389, %383 : vector<8x32xf32>
    %397 = arith.addf %362, %396 : vector<8x32xf32>
    %398 = math.tanh %397 : vector<8x32xf32>
    %cst_253 = arith.constant 1.000000e+00 : f32
    %399 = vector.broadcast %cst_253 : f32 to vector<8x32xf32>
    %400 = arith.subf %399, %395 : vector<8x32xf32>
    %401 = arith.mulf %400, %398 : vector<8x32xf32>
    %402 = arith.mulf %395, %317 : vector<8x32xf32>
    %403 = arith.addf %401, %402 : vector<8x32xf32>
    %c0_254 = arith.constant 0 : index
    %c0_255 = arith.constant 0 : index
    %c0_256 = arith.constant 0 : index
    %404 = vector.load %arg41[%c0_254, %c0_255, %c0_256] : memref<1x8x32xf32, #tpu.memory_space<vmem>>, vector<1x8x32xf32>
    %405 = vector.shape_cast %404 : vector<1x8x32xf32> to vector<8x32xf32>
    %406 = vector.shape_cast %403 : vector<8x32xf32> to vector<1x8x32xf32>
    tpu.vector_store %arg41[%c0_254, %c0_255, %c0_256], %406 {strides = array<i32>} : memref<1x8x32xf32, #tpu.memory_space<vmem>>, vector<1x8x32xf32>,
    %c0_257 = arith.constant 0 : index
    %c0_258 = arith.constant 0 : index
    %407 = vector.load %arg35[%c0_257, %c0_258] : memref<1x32xf32, #tpu.memory_space<vmem>>, vector<1x32xf32>
    %c0_259 = arith.constant 0 : index
    %c0_260 = arith.constant 0 : index
    %408 = vector.load %arg36[%c0_259, %c0_260] : memref<1x32xf32, #tpu.memory_space<vmem>>, vector<1x32xf32>
    %cst_261 = arith.constant dense<0.000000e+00> : vector<8xf32>
    %409 = vector.multi_reduction <add>, %403, %cst_261 [1] : vector<8x32xf32> to vector<8xf32>
    %410 = vector.shape_cast %409 : vector<8xf32> to vector<8x1xf32>
    %cst_262 = arith.constant 3.200000e+01 : f32
    %411 = vector.broadcast %cst_262 : f32 to vector<8x1xf32>
    %412 = arith.divf %410, %411 : vector<8x1xf32>
    %413 = vector.broadcast %412 : vector<8x1xf32> to vector<8x32xf32>
    %414 = arith.subf %403, %413 : vector<8x32xf32>
    %415 = arith.mulf %414, %414 : vector<8x32xf32>
    %cst_263 = arith.constant dense<0.000000e+00> : vector<8xf32>
    %416 = vector.multi_reduction <add>, %415, %cst_263 [1] : vector<8x32xf32> to vector<8xf32>
    %417 = vector.shape_cast %416 : vector<8xf32> to vector<8x1xf32>
    %cst_264 = arith.constant 3.200000e+01 : f32
    %418 = vector.broadcast %cst_264 : f32 to vector<8x1xf32>
    %419 = arith.divf %417, %418 : vector<8x1xf32>
    %420 = vector.broadcast %412 : vector<8x1xf32> to vector<8x32xf32>
    %421 = arith.subf %403, %420 : vector<8x32xf32>
    %cst_265 = arith.constant 9.99999974E-6 : f32
    %422 = vector.broadcast %cst_265 : f32 to vector<8x1xf32>
    %423 = arith.addf %419, %422 : vector<8x1xf32>
    %424 = math.rsqrt %423 : vector<8x1xf32>
    %425 = vector.broadcast %424 : vector<8x1xf32> to vector<8x32xf32>
    %426 = arith.mulf %421, %425 : vector<8x32xf32>
    %427 = vector.broadcast %407 : vector<1x32xf32> to vector<8x32xf32>
    %428 = arith.mulf %426, %427 : vector<8x32xf32>
    %429 = vector.broadcast %408 : vector<1x32xf32> to vector<8x32xf32>
    %430 = arith.addf %428, %429 : vector<8x32xf32>
    %c0_266 = arith.constant 0 : index
    %c0_267 = arith.constant 0 : index
    %431 = vector.load %arg37[%c0_266, %c0_267] : memref<32x5xf32, #tpu.memory_space<vmem>>, vector<32x5xf32>
    %cst_268 = arith.constant dense<0.000000e+00> : vector<8x5xf32>
    %432 = tpu.matmul %430, %431, %cst_268 {dimension_numbers = #tpu.dot_dimension_numbers<[1], [0], [0], [1], [0, 0, 1, 1], [], []>} : vector<8x32xf32>, vector<32x5xf32>, vector<8x5xf32> -> vector<8x5xf32>
    %c0_269 = arith.constant 0 : index
    %c0_270 = arith.constant 0 : index
    %433 = vector.load %arg38[%c0_269, %c0_270] : memref<1x5xf32, #tpu.memory_space<vmem>>, vector<1x5xf32>
    %434 = vector.broadcast %433 : vector<1x5xf32> to vector<8x5xf32>
    %435 = arith.addf %432, %434 : vector<8x5xf32>
    %cst_271 = arith.constant dense<0xFF800000> : vector<8xf32>
    %436 = vector.multi_reduction <maximumf>, %435, %cst_271 [1] : vector<8x5xf32> to vector<8xf32>
    %437 = vector.shape_cast %436 : vector<8xf32> to vector<8x1xf32>
    %438 = vector.broadcast %437 : vector<8x1xf32> to vector<8x5xf32>
    %439 = arith.subf %435, %438 : vector<8x5xf32>
    %440 = math.exp %439 : vector<8x5xf32>
    %cst_272 = arith.constant dense<0.000000e+00> : vector<8xf32>
    %441 = vector.multi_reduction <add>, %440, %cst_272 [1] : vector<8x5xf32> to vector<8xf32>
    %442 = vector.shape_cast %441 : vector<8xf32> to vector<8x1xf32>
    %443 = math.log %442 : vector<8x1xf32>
    %444 = arith.addf %443, %437 : vector<8x1xf32>
    %445 = tpu.iota {dimensions = array<i32: 1>} : vector<8x5xi32>
    %446 = vector.broadcast %437 : vector<8x1xf32> to vector<8x5xf32>
    %447 = arith.cmpf oeq, %435, %446 : vector<8x5xf32>
    %c1073741824_i32 = arith.constant 1073741824 : i32
    %448 = vector.broadcast %c1073741824_i32 : i32 to vector<8x5xi32>
    %449 = arith.select %447, %445, %448 : vector<8x5xi1>, vector<8x5xi32>
    %cst_273 = arith.constant dense<2147483647> : vector<8xi32>
    %450 = vector.multi_reduction <minsi>, %449, %cst_273 [1] : vector<8x5xi32> to vector<8xi32>
    %451 = vector.shape_cast %450 : vector<8xi32> to vector<8x1xi32>
    %452 = vector.shape_cast %451 : vector<8x1xi32> to vector<8x1xi32>
    %453 = vector.broadcast %452 : vector<8x1xi32> to vector<8x128xi32>
    %c0_274 = arith.constant 0 : index
    %c0_275 = arith.constant 0 : index
    %454 = vector.load %arg39[%c0_274, %c0_275] : memref<8x128xi32, #tpu.memory_space<vmem>>, vector<8x128xi32>
    tpu.vector_store %arg39[%c0_274, %c0_275], %453 {strides = array<i32>} : memref<8x128xi32, #tpu.memory_space<vmem>>, vector<8x128xi32>,
    %455 = arith.subf %437, %444 : vector<8x1xf32>
    %456 = vector.shape_cast %455 : vector<8x1xf32> to vector<8x1xf32>
    %457 = vector.broadcast %456 : vector<8x1xf32> to vector<8x128xf32>
    %c0_276 = arith.constant 0 : index
    %c0_277 = arith.constant 0 : index
    %458 = vector.load %arg40[%c0_276, %c0_277] : memref<8x128xf32, #tpu.memory_space<vmem>>, vector<8x128xf32>
    tpu.vector_store %arg40[%c0_276, %c0_277], %457 {strides = array<i32>} : memref<8x128xf32, #tpu.memory_space<vmem>>, vector<8x128xf32>,
    return
  }
  func.func @transform_0(%arg0: i32) -> (i32, i32, i32) {
    %c0_i32 = arith.constant 0 : i32
    %c0_i32_0 = arith.constant 0 : i32
    %c0_i32_1 = arith.constant 0 : i32
    return %c0_i32, %arg0, %c0_i32_0 : i32, i32, i32
  }
  func.func @transform_1(%arg0: i32) -> (i32, i32) {
    %c0_i32 = arith.constant 0 : i32
    %c0_i32_0 = arith.constant 0 : i32
    return %arg0, %c0_i32 : i32, i32
  }
  func.func @transform_2(%arg0: i32) -> (i32, i32) {
    %c0_i32 = arith.constant 0 : i32
    %c0_i32_0 = arith.constant 0 : i32
    return %arg0, %c0_i32 : i32, i32
  }
  func.func @transform_3(%arg0: i32) -> (i32, i32, i32) {
    %c0_i32 = arith.constant 0 : i32
    %c0_i32_0 = arith.constant 0 : i32
    %c0_i32_1 = arith.constant 0 : i32
    return %c0_i32, %arg0, %c0_i32_0 : i32, i32, i32
  }
  func.func @transform_4(%arg0: i32) -> (i32, i32) {
    %c0_i32 = arith.constant 0 : i32
    %c0_i32_0 = arith.constant 0 : i32
    return %arg0, %c0_i32 : i32, i32
  }
  func.func @transform_5(%arg0: i32) -> (i32, i32, i32) {
    %c0_i32 = arith.constant 0 : i32
    %c0_i32_0 = arith.constant 0 : i32
    %c0_i32_1 = arith.constant 0 : i32
    %c0_i32_2 = arith.constant 0 : i32
    return %c0_i32, %c0_i32_0, %c0_i32_1 : i32, i32, i32
  }
  func.func @transform_6(%arg0: i32) -> (i32, i32, i32) {
    %c0_i32 = arith.constant 0 : i32
    %c0_i32_0 = arith.constant 0 : i32
    %c0_i32_1 = arith.constant 0 : i32
    %c0_i32_2 = arith.constant 0 : i32
    return %c0_i32, %c0_i32_0, %c0_i32_1 : i32, i32, i32
  }
  func.func @transform_7(%arg0: i32) -> (i32, i32, i32) {
    %c0_i32 = arith.constant 0 : i32
    %c0_i32_0 = arith.constant 0 : i32
    %c0_i32_1 = arith.constant 0 : i32
    %c0_i32_2 = arith.constant 0 : i32
    return %c0_i32, %c0_i32_0, %c0_i32_1 : i32, i32, i32
  }
  func.func @transform_8(%arg0: i32) -> (i32, i32) {
    %c0_i32 = arith.constant 0 : i32
    %c0_i32_0 = arith.constant 0 : i32
    %c0_i32_1 = arith.constant 0 : i32
    return %c0_i32, %c0_i32_0 : i32, i32
  }
  func.func @transform_9(%arg0: i32) -> (i32, i32) {
    %c0_i32 = arith.constant 0 : i32
    %c0_i32_0 = arith.constant 0 : i32
    %c0_i32_1 = arith.constant 0 : i32
    return %c0_i32, %c0_i32_0 : i32, i32
  }
  func.func @transform_10(%arg0: i32) -> (i32, i32) {
    %c0_i32 = arith.constant 0 : i32
    %c0_i32_0 = arith.constant 0 : i32
    %c0_i32_1 = arith.constant 0 : i32
    return %c0_i32, %c0_i32_0 : i32, i32
  }
  func.func @transform_11(%arg0: i32) -> (i32, i32) {
    %c0_i32 = arith.constant 0 : i32
    %c0_i32_0 = arith.constant 0 : i32
    %c0_i32_1 = arith.constant 0 : i32
    return %c0_i32, %c0_i32_0 : i32, i32
  }
  func.func @transform_12(%arg0: i32) -> (i32, i32) {
    %c0_i32 = arith.constant 0 : i32
    %c0_i32_0 = arith.constant 0 : i32
    %c0_i32_1 = arith.constant 0 : i32
    return %c0_i32, %c0_i32_0 : i32, i32
  }
  func.func @transform_13(%arg0: i32) -> (i32, i32) {
    %c0_i32 = arith.constant 0 : i32
    %c0_i32_0 = arith.constant 0 : i32
    %c0_i32_1 = arith.constant 0 : i32
    return %c0_i32, %c0_i32_0 : i32, i32
  }
  func.func @transform_14(%arg0: i32) -> (i32, i32) {
    %c0_i32 = arith.constant 0 : i32
    %c0_i32_0 = arith.constant 0 : i32
    %c0_i32_1 = arith.constant 0 : i32
    return %c0_i32, %c0_i32_0 : i32, i32
  }
  func.func @transform_15(%arg0: i32) -> (i32, i32) {
    %c0_i32 = arith.constant 0 : i32
    %c0_i32_0 = arith.constant 0 : i32
    %c0_i32_1 = arith.constant 0 : i32
    return %c0_i32, %c0_i32_0 : i32, i32
  }
  func.func @transform_16(%arg0: i32) -> (i32, i32) {
    %c0_i32 = arith.constant 0 : i32
    %c0_i32_0 = arith.constant 0 : i32
    %c0_i32_1 = arith.constant 0 : i32
    return %c0_i32, %c0_i32_0 : i32, i32
  }
  func.func @transform_17(%arg0: i32) -> (i32, i32) {
    %c0_i32 = arith.constant 0 : i32
    %c0_i32_0 = arith.constant 0 : i32
    %c0_i32_1 = arith.constant 0 : i32
    return %c0_i32, %c0_i32_0 : i32, i32
  }
  func.func @transform_18(%arg0: i32) -> (i32, i32) {
    %c0_i32 = arith.constant 0 : i32
    %c0_i32_0 = arith.constant 0 : i32
    %c0_i32_1 = arith.constant 0 : i32
    return %c0_i32, %c0_i32_0 : i32, i32
  }
  func.func @transform_19(%arg0: i32) -> (i32, i32) {
    %c0_i32 = arith.constant 0 : i32
    %c0_i32_0 = arith.constant 0 : i32
    %c0_i32_1 = arith.constant 0 : i32
    return %c0_i32, %c0_i32_0 : i32, i32
  }
  func.func @transform_20(%arg0: i32) -> (i32, i32) {
    %c0_i32 = arith.constant 0 : i32
    %c0_i32_0 = arith.constant 0 : i32
    %c0_i32_1 = arith.constant 0 : i32
    return %c0_i32, %c0_i32_0 : i32, i32
  }
  func.func @transform_21(%arg0: i32) -> (i32, i32) {
    %c0_i32 = arith.constant 0 : i32
    %c0_i32_0 = arith.constant 0 : i32
    %c0_i32_1 = arith.constant 0 : i32
    return %c0_i32, %c0_i32_0 : i32, i32
  }
  func.func @transform_22(%arg0: i32) -> (i32, i32) {
    %c0_i32 = arith.constant 0 : i32
    %c0_i32_0 = arith.constant 0 : i32
    %c0_i32_1 = arith.constant 0 : i32
    return %c0_i32, %c0_i32_0 : i32, i32
  }
  func.func @transform_23(%arg0: i32) -> (i32, i32) {
    %c0_i32 = arith.constant 0 : i32
    %c0_i32_0 = arith.constant 0 : i32
    %c0_i32_1 = arith.constant 0 : i32
    return %c0_i32, %c0_i32_0 : i32, i32
  }
  func.func @transform_24(%arg0: i32) -> (i32, i32) {
    %c0_i32 = arith.constant 0 : i32
    %c0_i32_0 = arith.constant 0 : i32
    %c0_i32_1 = arith.constant 0 : i32
    return %c0_i32, %c0_i32_0 : i32, i32
  }
  func.func @transform_25(%arg0: i32) -> (i32, i32) {
    %c0_i32 = arith.constant 0 : i32
    %c0_i32_0 = arith.constant 0 : i32
    %c0_i32_1 = arith.constant 0 : i32
    return %c0_i32, %c0_i32_0 : i32, i32
  }
  func.func @transform_26(%arg0: i32) -> (i32, i32) {
    %c0_i32 = arith.constant 0 : i32
    %c0_i32_0 = arith.constant 0 : i32
    %c0_i32_1 = arith.constant 0 : i32
    return %c0_i32, %c0_i32_0 : i32, i32
  }
  func.func @transform_27(%arg0: i32) -> (i32, i32) {
    %c0_i32 = arith.constant 0 : i32
    %c0_i32_0 = arith.constant 0 : i32
    %c0_i32_1 = arith.constant 0 : i32
    return %c0_i32, %c0_i32_0 : i32, i32
  }
  func.func @transform_28(%arg0: i32) -> (i32, i32, i32) {
    %c0_i32 = arith.constant 0 : i32
    %c0_i32_0 = arith.constant 0 : i32
    %c0_i32_1 = arith.constant 0 : i32
    %c0_i32_2 = arith.constant 0 : i32
    return %c0_i32, %c0_i32_0, %c0_i32_1 : i32, i32, i32
  }
  func.func @transform_29(%arg0: i32) -> (i32, i32, i32) {
    %c0_i32 = arith.constant 0 : i32
    %c0_i32_0 = arith.constant 0 : i32
    %c0_i32_1 = arith.constant 0 : i32
    %c0_i32_2 = arith.constant 0 : i32
    return %c0_i32, %c0_i32_0, %c0_i32_1 : i32, i32, i32
  }
  func.func @transform_30(%arg0: i32) -> (i32, i32, i32) {
    %c0_i32 = arith.constant 0 : i32
    %c0_i32_0 = arith.constant 0 : i32
    %c0_i32_1 = arith.constant 0 : i32
    %c0_i32_2 = arith.constant 0 : i32
    return %c0_i32, %c0_i32_0, %c0_i32_1 : i32, i32, i32
  }
  func.func @transform_31(%arg0: i32) -> (i32, i32, i32) {
    %c0_i32 = arith.constant 0 : i32
    %c0_i32_0 = arith.constant 0 : i32
    %c0_i32_1 = arith.constant 0 : i32
    %c0_i32_2 = arith.constant 0 : i32
    return %c0_i32, %c0_i32_0, %c0_i32_1 : i32, i32, i32
  }
  func.func @transform_32(%arg0: i32) -> (i32, i32, i32) {
    %c0_i32 = arith.constant 0 : i32
    %c0_i32_0 = arith.constant 0 : i32
    %c0_i32_1 = arith.constant 0 : i32
    %c0_i32_2 = arith.constant 0 : i32
    return %c0_i32, %c0_i32_0, %c0_i32_1 : i32, i32, i32
  }
  func.func @transform_33(%arg0: i32) -> (i32, i32, i32) {
    %c0_i32 = arith.constant 0 : i32
    %c0_i32_0 = arith.constant 0 : i32
    %c0_i32_1 = arith.constant 0 : i32
    %c0_i32_2 = arith.constant 0 : i32
    return %c0_i32, %c0_i32_0, %c0_i32_1 : i32, i32, i32
  }
  func.func @transform_34(%arg0: i32) -> (i32, i32) {
    %c0_i32 = arith.constant 0 : i32
    %c0_i32_0 = arith.constant 0 : i32
    %c0_i32_1 = arith.constant 0 : i32
    return %c0_i32, %c0_i32_0 : i32, i32
  }
  func.func @transform_35(%arg0: i32) -> (i32, i32) {
    %c0_i32 = arith.constant 0 : i32
    %c0_i32_0 = arith.constant 0 : i32
    %c0_i32_1 = arith.constant 0 : i32
    return %c0_i32, %c0_i32_0 : i32, i32
  }
  func.func @transform_36(%arg0: i32) -> (i32, i32) {
    %c0_i32 = arith.constant 0 : i32
    %c0_i32_0 = arith.constant 0 : i32
    %c0_i32_1 = arith.constant 0 : i32
    return %c0_i32, %c0_i32_0 : i32, i32
  }
  func.func @transform_37(%arg0: i32) -> (i32, i32) {
    %c0_i32 = arith.constant 0 : i32
    %c0_i32_0 = arith.constant 0 : i32
    %c0_i32_1 = arith.constant 0 : i32
    return %c0_i32, %c0_i32_0 : i32, i32
  }
  func.func @transform_38(%arg0: i32) -> (i32, i32) {
    %c0_i32 = arith.constant 0 : i32
    %c0_i32_0 = arith.constant 0 : i32
    return %arg0, %c0_i32 : i32, i32
  }
  func.func @transform_39(%arg0: i32) -> (i32, i32) {
    %c0_i32 = arith.constant 0 : i32
    %c0_i32_0 = arith.constant 0 : i32
    return %arg0, %c0_i32 : i32, i32
  }
  func.func @transform_40(%arg0: i32) -> (i32, i32, i32) {
    %c0_i32 = arith.constant 0 : i32
    %c0_i32_0 = arith.constant 0 : i32
    %c0_i32_1 = arith.constant 0 : i32
    return %c0_i32, %arg0, %c0_i32_0 : i32, i32, i32
  }
}

</mosaic_0001>

<llo_original>
// kernel: tile.9
$region0: #{tile.9}
  %s0 = inlined_call_operand.vmem [shape: f32[4,2,4], index: 0, kind: input, shape index: {}]
  %s1 = inlined_call_operand.vmem [shape: f32[4,8], index: 1, kind: output, shape index: {}]
  $region1: #{tile.9} parent=0
    #allocation0 [shape = 'u8[4096]{0}', space=vmem, size = 0x1000, scoped, tag = 'scoped mem for output reshape']
    #allocation1 [shape = 'u8[16384]{0}', space=vmem, size = 0x4000, scoped, tag = 'scoped mem for input reshape']
    %s3 = sshll.u32 1, 2
    %s4 = ssub.s32 %s3, 1
    %s5 = smul.addr 2, 3
    %s6 = scalar_lea.vmem %s0, %s5
    %v7 = vld [vmem:[%s6] sm:%s4]
    %s8 = scalar_lea.vmem [#allocation1], 24
    %9 = vst [vmem:[%s8] sm:%s4] %v7
    %s10 = smul.addr 2, 2
    %s11 = scalar_lea.vmem %s0, %s10
    %v12 = vld [vmem:[%s11] sm:%s4]
    %s13 = scalar_lea.vmem [#allocation1], 16
    %14 = vst [vmem:[%s13] sm:%s4] %v12
    %s15 = scalar_lea.vmem %s0, 2
    %v16 = vld [vmem:[%s15] sm:%s4]
    %s17 = scalar_lea.vmem [#allocation1], 8
    %18 = vst [vmem:[%s17] sm:%s4] %v16
    %v19 = vld [vmem:[%s0] sm:%s4]
    %20 = vst [vmem:[#allocation1] sm:%s4] %v19
    %v21 = vld [vmem:[#allocation1] ss:$8 sm:$0xf]
    %vm22 = vcmask 31744
    %23 = vst.msk [vmem:[#allocation0] sm:$0xf] %vm22, %v21
    %s24 = scalar_lea.vmem [#allocation1], 1
    %v25 = vld [vmem:[%s24] ss:$8 sm:$0xf]
    %26 = vrot.lane.b32.xlu0 %v25, 4
    %v27 = vpop.permute.xlu0 %26
    %vm28 = vcmask 64544
    %29 = vst.msk [vmem:[#allocation0] sm:$0xf] %vm28, %v27
    %s31 = sshll.u32 1, 4
    %s32 = ssub.s32 %s31, 1
    %v34 = vld [vmem:[#allocation0] sm:%s32]
    %s35 = sshll.u32 1, 4
    %s36 = ssub.s32 %s35, 1
    %37 = vst [vmem:[%s1] sm:%s36] %v34

// kernel: r_actor_forward.1
$region0: #{r_actor_forward.1}
  #allocation0 [shape = 'u32[]', space=smem, size = 0x4, offset = 0x4, fixed_abs, tag = 'smem constant byte address 0x4 - core index']
  #allocation1 [shape = 'u32[144,128]{1,0:T(1,128)}', space=vmem, size = 0x12000, scoped, tag = 'internal scratch']
  %s0 = inlined_call_operand.smem [shape: u32[41], index: -1, kind: input, shape index: {}]
  %s1 = sld [smem:[%s0]]
  %s2 = scalar_lea.smem %s0, 1
  %s3 = sld [smem:[%s2]]
  %s4 = scalar_lea.smem %s0, 2
  %s5 = sld [smem:[%s4]]
  %s6 = scalar_lea.smem %s0, 3
  %s7 = sld [smem:[%s6]]
  %s8 = scalar_lea.smem %s0, 4
  %s9 = sld [smem:[%s8]]
  %s10 = scalar_lea.smem %s0, 5
  %s11 = sld [smem:[%s10]]
  %s12 = scalar_lea.smem %s0, 6
  %s13 = sld [smem:[%s12]]
  %s14 = scalar_lea.smem %s0, 7
  %s15 = sld [smem:[%s14]]
  %s16 = scalar_lea.smem %s0, 8
  %s17 = sld [smem:[%s16]]
  %s18 = scalar_lea.smem %s0, 9
  %s19 = sld [smem:[%s18]]
  %s20 = scalar_lea.smem %s0, 10
  %s21 = sld [smem:[%s20]]
  %s22 = scalar_lea.smem %s0, 11
  %s23 = sld [smem:[%s22]]
  %s24 = scalar_lea.smem %s0, 12
  %s25 = sld [smem:[%s24]]
  %s26 = scalar_lea.smem %s0, 13
  %s27 = sld [smem:[%s26]]
  %s28 = scalar_lea.smem %s0, 14
  %s29 = sld [smem:[%s28]]
  %s30 = scalar_lea.smem %s0, 15
  %s31 = sld [smem:[%s30]]
  %s32 = scalar_lea.smem %s0, 16
  %s33 = sld [smem:[%s32]]
  %s34 = scalar_lea.smem %s0, 17
  %s35 = sld [smem:[%s34]]
  %s36 = scalar_lea.smem %s0, 18
  %s37 = sld [smem:[%s36]]
  %s38 = scalar_lea.smem %s0, 19
  %s39 = sld [smem:[%s38]]
  %s40 = scalar_lea.smem %s0, 20
  %s41 = sld [smem:[%s40]]
  %s42 = scalar_lea.smem %s0, 21
  %s43 = sld [smem:[%s42]]
  %s44 = scalar_lea.smem %s0, 22
  %s45 = sld [smem:[%s44]]
  %s46 = scalar_lea.smem %s0, 23
  %s47 = sld [smem:[%s46]]
  %s48 = scalar_lea.smem %s0, 24
  %s49 = sld [smem:[%s48]]
  %s50 = scalar_lea.smem %s0, 25
  %s51 = sld [smem:[%s50]]
  %s52 = scalar_lea.smem %s0, 26
  %s53 = sld [smem:[%s52]]
  %s54 = scalar_lea.smem %s0, 27
  %s55 = sld [smem:[%s54]]
  %s56 = scalar_lea.smem %s0, 28
  %s57 = sld [smem:[%s56]]
  %s58 = scalar_lea.smem %s0, 29
  %s59 = sld [smem:[%s58]]
  %s60 = scalar_lea.smem %s0, 30
  %s61 = sld [smem:[%s60]]
  %s62 = scalar_lea.smem %s0, 31
  %s63 = sld [smem:[%s62]]
  %s64 = scalar_lea.smem %s0, 32
  %s65 = sld [smem:[%s64]]
  %s66 = scalar_lea.smem %s0, 33
  %s67 = sld [smem:[%s66]]
  %s68 = scalar_lea.smem %s0, 34
  %s69 = sld [smem:[%s68]]
  %s70 = scalar_lea.smem %s0, 35
  %s71 = sld [smem:[%s70]]
  %s72 = scalar_lea.smem %s0, 36
  %s73 = sld [smem:[%s72]]
  %s74 = scalar_lea.smem %s0, 37
  %s75 = sld [smem:[%s74]]
  %s76 = scalar_lea.smem %s0, 38
  %s77 = sld [smem:[%s76]]
  %s78 = scalar_lea.smem %s0, 39
  %s79 = sld [smem:[%s78]]
  %s80 = scalar_lea.smem %s0, 40
  %s81 = sld [smem:[%s80]]
  %82 = xla_tuple %s77, %s79, %s81
  %s83 = sld [smem:[#allocation0]]
  $region278: #{r_actor_forward.1} parent=0
    _
  %s85 = ssub.s32 1, %s83
  %s86 = scalar_select 0, %s85, %s83
  $region1: #{r_actor_forward.1} parent=0
    #allocation2 [shape = 'u8[2048]{0}', space=vmem, size = 0x800, scoped, tag = 'input window, operand 7, single buffered']
    #allocation3 [shape = 's32[1]{0}', space=sflag, size = 0x4, scoped, tag = 'scoped memory for r_actor_forward.1']
    #allocation4 [shape = 'u8[512]{0}', space=vmem, size = 0x400, scoped, tag = 'input window, operand 8, single buffered']
    #allocation5 [shape = 's32[1]{0}', space=sflag, size = 0x4, scoped, tag = 'scoped memory for r_actor_forward.1']
    #allocation6 [shape = 'u8[512]{0}', space=vmem, size = 0x400, scoped, tag = 'input window, operand 9, single buffered']
    #allocation7 [shape = 'u8[2048]{0}', space=vmem, size = 0x800, scoped, tag = 'input window, operand 10, single buffered']
    #allocation8 [shape = 's32[1]{0}', space=sflag, size = 0x4, scoped, tag = 'scoped memory for r_actor_forward.1']
    #allocation9 [shape = 'u8[512]{0}', space=vmem, size = 0x400, scoped, tag = 'input window, operand 11, single buffered']
    #allocation10 [shape = 'u8[512]{0}', space=vmem, size = 0x400, scoped, tag = 'input window, operand 12, single buffered']
    #allocation11 [shape = 's32[1]{0}', space=sflag, size = 0x4, scoped, tag = 'scoped memory for r_actor_forward.1']
    #allocation12 [shape = 'u8[512]{0}', space=vmem, size = 0x400, scoped, tag = 'input window, operand 13, single buffered']
    #allocation13 [shape = 'u8[16384]{0}', space=vmem, size = 0x4000, scoped, tag = 'input window, operand 14, single buffered']
    #allocation14 [shape = 's32[1]{0}', space=sflag, size = 0x4, scoped, tag = 'scoped memory for r_actor_forward.1']
    #allocation15 [shape = 'u8[512]{0}', space=vmem, size = 0x400, scoped, tag = 'input window, operand 15, single buffered']
    #allocation16 [shape = 'u8[512]{0}', space=vmem, size = 0x400, scoped, tag = 'input window, operand 16, single buffered']
    #allocation17 [shape = 's32[1]{0}', space=sflag, size = 0x4, scoped, tag = 'scoped memory for r_actor_forward.1']
    #allocation18 [shape = 'u8[512]{0}', space=vmem, size = 0x400, scoped, tag = 'input window, operand 17, single buffered']
    #allocation19 [shape = 'u8[512]{0}', space=vmem, size = 0x400, scoped, tag = 'input window, operand 18, single buffered']
    #allocation20 [shape = 's32[1]{0}', space=sflag, size = 0x4, scoped, tag = 'scoped memory for r_actor_forward.1']
    #allocation21 [shape = 'u8[512]{0}', space=vmem, size = 0x400, scoped, tag = 'input window, operand 19, single buffered']
    #allocation22 [shape = 'u8[4096]{0}', space=vmem, size = 0x1000, scoped, tag = 'input window, operand 20, single buffered']
    #allocation23 [shape = 's32[1]{0}', space=sflag, size = 0x4, scoped, tag = 'scoped memory for r_actor_forward.1']
    #allocation24 [shape = 'u8[512]{0}', space=vmem, size = 0x400, scoped, tag = 'input window, operand 21, single buffered']
    #allocation25 [shape = 'u8[512]{0}', space=vmem, size = 0x400, scoped, tag = 'input window, operand 22, single buffered']
    #allocation26 [shape = 's32[1]{0}', space=sflag, size = 0x4, scoped, tag = 'scoped memory for r_actor_forward.1']
    #allocation27 [shape = 'u8[512]{0}', space=vmem, size = 0x400, scoped, tag = 'input window, operand 23, single buffered']
    #allocation28 [shape = 'u8[512]{0}', space=vmem, size = 0x400, scoped, tag = 'input window, operand 25, single buffered']
    #allocation29 [shape = 's32[1]{0}', space=sflag, size = 0x4, scoped, tag = 'scoped memory for r_actor_forward.1']
    #allocation30 [shape = 'u8[512]{0}', space=vmem, size = 0x400, scoped, tag = 'input window, operand 26, single buffered']
    #allocation31 [shape = 'u8[512]{0}', space=vmem, size = 0x400, scoped, tag = 'input window, operand 27, single buffered']
    #allocation32 [shape = 's32[1]{0}', space=sflag, size = 0x4, scoped, tag = 'scoped memory for r_actor_forward.1']
    #allocation33 [shape = 'u8[49152]{0}', space=vmem, size = 0xc000, scoped, tag = 'input window, operand 29, single buffered']
    #allocation34 [shape = 'u8[49152]{0}', space=vmem, size = 0xc000, scoped, tag = 'input window, operand 30, single buffered']
    #allocation35 [shape = 's32[1]{0}', space=sflag, size = 0x4, scoped, tag = 'scoped memory for r_actor_forward.1']
    #allocation36 [shape = 'u8[49152]{0}', space=vmem, size = 0xc000, scoped, tag = 'input window, operand 31, single buffered']
    #allocation37 [shape = 'u8[1536]{0}', space=vmem, size = 0x800, scoped, tag = 'input window, operand 32, single buffered']
    #allocation38 [shape = 's32[1]{0}', space=sflag, size = 0x4, scoped, tag = 'scoped memory for r_actor_forward.1']
    #allocation39 [shape = 'u8[1536]{0}', space=vmem, size = 0x800, scoped, tag = 'input window, operand 33, single buffered']
    %87 = vsyncpa [#allocation3], 0
    %88 = vsyncpa [#allocation5], 0
    %89 = vsyncpa [#allocation8], 0
    %90 = vsyncpa [#allocation11], 0
    %91 = vsyncpa [#allocation14], 0
    %92 = vsyncpa [#allocation17], 0
    %93 = vsyncpa [#allocation20], 0
    %94 = vsyncpa [#allocation23], 0
    %95 = vsyncpa [#allocation26], 0
    %96 = vsyncpa [#allocation29], 0
    %97 = vsyncpa [#allocation32], 0
    %98 = vsyncpa [#allocation35], 0
    %99 = vsyncpa [#allocation38], 0
    // Predicated region
    $region2: #{r_actor_forward.1} parent=1 // pred_check
      _
    $region3: #{r_actor_forward.1} parent=1 // pred_check_branch
      %101 = sbr.rel (0) target = $region5
    $region4: #{r_actor_forward.1} parent=1 // pred_region
      _
    $region5: #{r_actor_forward.1} parent=1 // pred_fallthru
      _
    // Predicated region
    $region6: #{r_actor_forward.1} parent=1 // pred_check
      _
    $region7: #{r_actor_forward.1} parent=1 // pred_check_branch
      %103 = sbr.rel (0) target = $region9
    $region8: #{r_actor_forward.1} parent=1 // pred_region
      _
    $region9: #{r_actor_forward.1} parent=1 // pred_fallthru
      _
    // Predicated region
    $region10: #{r_actor_forward.1} parent=1 // pred_check
      _
    $region11: #{r_actor_forward.1} parent=1 // pred_check_branch
      %105 = sbr.rel (0) target = $region13
    $region12: #{r_actor_forward.1} parent=1 // pred_region
      _
    $region13: #{r_actor_forward.1} parent=1 // pred_fallthru
      _
    // Predicated region
    $region14: #{r_actor_forward.1} parent=1 // pred_check
      _
    $region15: #{r_actor_forward.1} parent=1 // pred_check_branch
      %107 = sbr.rel (0) target = $region17
    $region16: #{r_actor_forward.1} parent=1 // pred_region
      _
    $region17: #{r_actor_forward.1} parent=1 // pred_fallthru
      _
    // Predicated region
    $region18: #{r_actor_forward.1} parent=1 // pred_check
      _
    $region19: #{r_actor_forward.1} parent=1 // pred_check_branch
      %109 = sbr.rel (0) target = $region21
    $region20: #{r_actor_forward.1} parent=1 // pred_region
      _
    $region21: #{r_actor_forward.1} parent=1 // pred_fallthru
      _
    // Predicated region
    $region22: #{r_actor_forward.1} parent=1 // pred_check
      _
    $region23: #{r_actor_forward.1} parent=1 // pred_check_branch
      %111 = sbr.rel (0) target = $region25
    $region24: #{r_actor_forward.1} parent=1 // pred_region
      _
    $region25: #{r_actor_forward.1} parent=1 // pred_fallthru
      _
    // Predicated region
    $region26: #{r_actor_forward.1} parent=1 // pred_check
      _
    $region27: #{r_actor_forward.1} parent=1 // pred_check_branch
      %113 = sbr.rel (0) target = $region29
    $region28: #{r_actor_forward.1} parent=1 // pred_region
      _
    $region29: #{r_actor_forward.1} parent=1 // pred_fallthru
      _
    // Predicated region
    $region30: #{r_actor_forward.1} parent=1 // pred_check
      _
    $region31: #{r_actor_forward.1} parent=1 // pred_check_branch
      %115 = sbr.rel (0) target = $region33
    $region32: #{r_actor_forward.1} parent=1 // pred_region
      %s117 = ssub.s32 64, 64
      %118 = vsyncadd [#allocation3], %s117
      %s119 = sshll.u32 [#allocation2], 4
      %s120 = int_to_ptr.vmem [resolvable:$true] %s119
      %125 = dma.hbm_to_vmem [thread:$0]  %s15, 64, %s120, [#allocation3], 16, 16, 1
    $region33: #{r_actor_forward.1} parent=1 // pred_fallthru
      _
    // Predicated region
    $region34: #{r_actor_forward.1} parent=1 // pred_check
      _
    $region35: #{r_actor_forward.1} parent=1 // pred_check_branch
      %127 = sbr.rel (0) target = $region37
    $region36: #{r_actor_forward.1} parent=1 // pred_region
      %s129 = ssub.s32 16, 16
      %130 = vsyncadd [#allocation5], %s129
      %s132 = sshll.u32 [#allocation4], 4
      %s133 = int_to_ptr.vmem [resolvable:$true] %s132
      %135 = dma.hbm_to_vmem [thread:$0]  %s17, 16, %s133, [#allocation5]
    $region37: #{r_actor_forward.1} parent=1 // pred_fallthru
      _
    // Predicated region
    $region38: #{r_actor_forward.1} parent=1 // pred_check
      _
    $region39: #{r_actor_forward.1} parent=1 // pred_check_branch
      %137 = sbr.rel (0) target = $region41
    $region40: #{r_actor_forward.1} parent=1 // pred_region
      %s139 = ssub.s32 16, 16
      %140 = vsyncadd [#allocation5], %s139
      %s142 = sshll.u32 [#allocation6], 4
      %s143 = int_to_ptr.vmem [resolvable:$true] %s142
      %145 = dma.hbm_to_vmem [thread:$0]  %s19, 16, %s143, [#allocation5]
    $region41: #{r_actor_forward.1} parent=1 // pred_fallthru
      _
    // Predicated region
    $region42: #{r_actor_forward.1} parent=1 // pred_check
      _
    $region43: #{r_actor_forward.1} parent=1 // pred_check_branch
      %147 = sbr.rel (0) target = $region45
    $region44: #{r_actor_forward.1} parent=1 // pred_region
      %s149 = ssub.s32 64, 64
      %150 = vsyncadd [#allocation8], %s149
      %s152 = sshll.u32 [#allocation7], 4
      %s153 = int_to_ptr.vmem [resolvable:$true] %s152
      %155 = dma.hbm_to_vmem [thread:$0]  %s21, 64, %s153, [#allocation8]
    $region45: #{r_actor_forward.1} parent=1 // pred_fallthru
      _
    // Predicated region
    $region46: #{r_actor_forward.1} parent=1 // pred_check
      _
    $region47: #{r_actor_forward.1} parent=1 // pred_check_branch
      %157 = sbr.rel (0) target = $region49
    $region48: #{r_actor_forward.1} parent=1 // pred_region
      %s159 = ssub.s32 16, 16
      %160 = vsyncadd [#allocation8], %s159
      %s162 = sshll.u32 [#allocation9], 4
      %s163 = int_to_ptr.vmem [resolvable:$true] %s162
      %165 = dma.hbm_to_vmem [thread:$0]  %s23, 16, %s163, [#allocation8]
    $region49: #{r_actor_forward.1} parent=1 // pred_fallthru
      _
    // Predicated region
    $region50: #{r_actor_forward.1} parent=1 // pred_check
      _
    $region51: #{r_actor_forward.1} parent=1 // pred_check_branch
      %167 = sbr.rel (0) target = $region53
    $region52: #{r_actor_forward.1} parent=1 // pred_region
      %s169 = ssub.s32 16, 16
      %170 = vsyncadd [#allocation11], %s169
      %s172 = sshll.u32 [#allocation10], 4
      %s173 = int_to_ptr.vmem [resolvable:$true] %s172
      %175 = dma.hbm_to_vmem [thread:$0]  %s25, 16, %s173, [#allocation11]
    $region53: #{r_actor_forward.1} parent=1 // pred_fallthru
      _
    // Predicated region
    $region54: #{r_actor_forward.1} parent=1 // pred_check
      _
    $region55: #{r_actor_forward.1} parent=1 // pred_check_branch
      %177 = sbr.rel (0) target = $region57
    $region56: #{r_actor_forward.1} parent=1 // pred_region
      %s179 = ssub.s32 16, 16
      %180 = vsyncadd [#allocation11], %s179
      %s182 = sshll.u32 [#allocation12], 4
      %s183 = int_to_ptr.vmem [resolvable:$true] %s182
      %185 = dma.hbm_to_vmem [thread:$0]  %s27, 16, %s183, [#allocation11]
    $region57: #{r_actor_forward.1} parent=1 // pred_fallthru
      _
    // Predicated region
    $region58: #{r_actor_forward.1} parent=1 // pred_check
      _
    $region59: #{r_actor_forward.1} parent=1 // pred_check_branch
      %187 = sbr.rel (0) target = $region61
    $region60: #{r_actor_forward.1} parent=1 // pred_region
      %s189 = ssub.s32 512, 512
      %190 = vsyncadd [#allocation14], %s189
      %s191 = sshll.u32 [#allocation13], 4
      %s192 = int_to_ptr.vmem [resolvable:$true] %s191
      %197 = dma.hbm_to_vmem [thread:$0]  %s29, 512, %s192, [#allocation14], 128, 128, 8
    $region61: #{r_actor_forward.1} parent=1 // pred_fallthru
      _
    // Predicated region
    $region62: #{r_actor_forward.1} parent=1 // pred_check
      _
    $region63: #{r_actor_forward.1} parent=1 // pred_check_branch
      %199 = sbr.rel (0) target = $region65
    $region64: #{r_actor_forward.1} parent=1 // pred_region
      %s201 = ssub.s32 16, 16
      %202 = vsyncadd [#allocation14], %s201
      %s204 = sshll.u32 [#allocation15], 4
      %s205 = int_to_ptr.vmem [resolvable:$true] %s204
      %207 = dma.hbm_to_vmem [thread:$0]  %s31, 16, %s205, [#allocation14]
    $region65: #{r_actor_forward.1} parent=1 // pred_fallthru
      _
    // Predicated region
    $region66: #{r_actor_forward.1} parent=1 // pred_check
      _
    $region67: #{r_actor_forward.1} parent=1 // pred_check_branch
      %209 = sbr.rel (0) target = $region69
    $region68: #{r_actor_forward.1} parent=1 // pred_region
      %s211 = ssub.s32 16, 16
      %212 = vsyncadd [#allocation17], %s211
      %s214 = sshll.u32 [#allocation16], 4
      %s215 = int_to_ptr.vmem [resolvable:$true] %s214
      %217 = dma.hbm_to_vmem [thread:$0]  %s33, 16, %s215, [#allocation17]
    $region69: #{r_actor_forward.1} parent=1 // pred_fallthru
      _
    // Predicated region
    $region70: #{r_actor_forward.1} parent=1 // pred_check
      _
    $region71: #{r_actor_forward.1} parent=1 // pred_check_branch
      %219 = sbr.rel (0) target = $region73
    $region72: #{r_actor_forward.1} parent=1 // pred_region
      %s221 = ssub.s32 16, 16
      %222 = vsyncadd [#allocation17], %s221
      %s224 = sshll.u32 [#allocation18], 4
      %s225 = int_to_ptr.vmem [resolvable:$true] %s224
      %227 = dma.hbm_to_vmem [thread:$0]  %s35, 16, %s225, [#allocation17]
    $region73: #{r_actor_forward.1} parent=1 // pred_fallthru
      _
    // Predicated region
    $region74: #{r_actor_forward.1} parent=1 // pred_check
      _
    $region75: #{r_actor_forward.1} parent=1 // pred_check_branch
      %229 = sbr.rel (0) target = $region77
    $region76: #{r_actor_forward.1} parent=1 // pred_region
      %s231 = ssub.s32 16, 16
      %232 = vsyncadd [#allocation20], %s231
      %s234 = sshll.u32 [#allocation19], 4
      %s235 = int_to_ptr.vmem [resolvable:$true] %s234
      %237 = dma.hbm_to_vmem [thread:$0]  %s37, 16, %s235, [#allocation20]
    $region77: #{r_actor_forward.1} parent=1 // pred_fallthru
      _
    // Predicated region
    $region78: #{r_actor_forward.1} parent=1 // pred_check
      _
    $region79: #{r_actor_forward.1} parent=1 // pred_check_branch
      %239 = sbr.rel (0) target = $region81
    $region80: #{r_actor_forward.1} parent=1 // pred_region
      %s241 = ssub.s32 16, 16
      %242 = vsyncadd [#allocation20], %s241
      %s244 = sshll.u32 [#allocation21], 4
      %s245 = int_to_ptr.vmem [resolvable:$true] %s244
      %247 = dma.hbm_to_vmem [thread:$0]  %s39, 16, %s245, [#allocation20]
    $region81: #{r_actor_forward.1} parent=1 // pred_fallthru
      _
    // Predicated region
    $region82: #{r_actor_forward.1} parent=1 // pred_check
      _
    $region83: #{r_actor_forward.1} parent=1 // pred_check_branch
      %249 = sbr.rel (0) target = $region85
    $region84: #{r_actor_forward.1} parent=1 // pred_region
      %s251 = ssub.s32 128, 128
      %252 = vsyncadd [#allocation23], %s251
      %s254 = sshll.u32 [#allocation22], 4
      %s255 = int_to_ptr.vmem [resolvable:$true] %s254
      %257 = dma.hbm_to_vmem [thread:$0]  %s41, 128, %s255, [#allocation23]
    $region85: #{r_actor_forward.1} parent=1 // pred_fallthru
      _
    // Predicated region
    $region86: #{r_actor_forward.1} parent=1 // pred_check
      _
    $region87: #{r_actor_forward.1} parent=1 // pred_check_branch
      %259 = sbr.rel (0) target = $region89
    $region88: #{r_actor_forward.1} parent=1 // pred_region
      %s261 = ssub.s32 16, 16
      %262 = vsyncadd [#allocation23], %s261
      %s264 = sshll.u32 [#allocation24], 4
      %s265 = int_to_ptr.vmem [resolvable:$true] %s264
      %267 = dma.hbm_to_vmem [thread:$0]  %s43, 16, %s265, [#allocation23]
    $region89: #{r_actor_forward.1} parent=1 // pred_fallthru
      _
    // Predicated region
    $region90: #{r_actor_forward.1} parent=1 // pred_check
      _
    $region91: #{r_actor_forward.1} parent=1 // pred_check_branch
      %269 = sbr.rel (0) target = $region93
    $region92: #{r_actor_forward.1} parent=1 // pred_region
      %s271 = ssub.s32 16, 16
      %272 = vsyncadd [#allocation26], %s271
      %s274 = sshll.u32 [#allocation25], 4
      %s275 = int_to_ptr.vmem [resolvable:$true] %s274
      %277 = dma.hbm_to_vmem [thread:$0]  %s45, 16, %s275, [#allocation26]
    $region93: #{r_actor_forward.1} parent=1 // pred_fallthru
      _
    // Predicated region
    $region94: #{r_actor_forward.1} parent=1 // pred_check
      _
    $region95: #{r_actor_forward.1} parent=1 // pred_check_branch
      %279 = sbr.rel (0) target = $region97
    $region96: #{r_actor_forward.1} parent=1 // pred_region
      %s281 = ssub.s32 16, 16
      %282 = vsyncadd [#allocation26], %s281
      %s284 = sshll.u32 [#allocation27], 4
      %s285 = int_to_ptr.vmem [resolvable:$true] %s284
      %287 = dma.hbm_to_vmem [thread:$0]  %s47, 16, %s285, [#allocation26]
    $region97: #{r_actor_forward.1} parent=1 // pred_fallthru
      _
    // Predicated region
    $region98: #{r_actor_forward.1} parent=1 // pred_check
      _
    $region99: #{r_actor_forward.1} parent=1 // pred_check_branch
      %289 = sbr.rel (0) target = $region101
    $region100: #{r_actor_forward.1} parent=1 // pred_region
      _
    $region101: #{r_actor_forward.1} parent=1 // pred_fallthru
      _
    // Predicated region
    $region102: #{r_actor_forward.1} parent=1 // pred_check
      _
    $region103: #{r_actor_forward.1} parent=1 // pred_check_branch
      %291 = sbr.rel (0) target = $region105
    $region104: #{r_actor_forward.1} parent=1 // pred_region
      %s293 = ssub.s32 16, 16
      %294 = vsyncadd [#allocation29], %s293
      %s296 = sshll.u32 [#allocation28], 4
      %s297 = int_to_ptr.vmem [resolvable:$true] %s296
      %299 = dma.hbm_to_vmem [thread:$0]  %s51, 16, %s297, [#allocation29]
    $region105: #{r_actor_forward.1} parent=1 // pred_fallthru
      _
    // Predicated region
    $region106: #{r_actor_forward.1} parent=1 // pred_check
      _
    $region107: #{r_actor_forward.1} parent=1 // pred_check_branch
      %301 = sbr.rel (0) target = $region109
    $region108: #{r_actor_forward.1} parent=1 // pred_region
      %s303 = ssub.s32 16, 16
      %304 = vsyncadd [#allocation29], %s303
      %s306 = sshll.u32 [#allocation30], 4
      %s307 = int_to_ptr.vmem [resolvable:$true] %s306
      %309 = dma.hbm_to_vmem [thread:$0]  %s53, 16, %s307, [#allocation29]
    $region109: #{r_actor_forward.1} parent=1 // pred_fallthru
      _
    // Predicated region
    $region110: #{r_actor_forward.1} parent=1 // pred_check
      _
    $region111: #{r_actor_forward.1} parent=1 // pred_check_branch
      %311 = sbr.rel (0) target = $region113
    $region112: #{r_actor_forward.1} parent=1 // pred_region
      %s313 = ssub.s32 16, 16
      %314 = vsyncadd [#allocation32], %s313
      %s316 = sshll.u32 [#allocation31], 4
      %s317 = int_to_ptr.vmem [resolvable:$true] %s316
      %319 = dma.hbm_to_vmem [thread:$0]  %s55, 16, %s317, [#allocation32]
    $region113: #{r_actor_forward.1} parent=1 // pred_fallthru
      _
    // Predicated region
    $region114: #{r_actor_forward.1} parent=1 // pred_check
      _
    $region115: #{r_actor_forward.1} parent=1 // pred_check_branch
      %321 = sbr.rel (0) target = $region117
    $region116: #{r_actor_forward.1} parent=1 // pred_region
      _
    $region117: #{r_actor_forward.1} parent=1 // pred_fallthru
      _
    // Predicated region
    $region118: #{r_actor_forward.1} parent=1 // pred_check
      _
    $region119: #{r_actor_forward.1} parent=1 // pred_check_branch
      %323 = sbr.rel (0) target = $region121
    $region120: #{r_actor_forward.1} parent=1 // pred_region
      %s325 = ssub.s32 1536, 1536
      %326 = vsyncadd [#allocation32], %s325
      %s327 = sshll.u32 [#allocation33], 4
      %s328 = int_to_ptr.vmem [resolvable:$true] %s327
      %333 = dma.hbm_to_vmem [thread:$0]  %s59, 1536, %s328, [#allocation32], 128, 128, 8
    $region121: #{r_actor_forward.1} parent=1 // pred_fallthru
      _
    // Predicated region
    $region122: #{r_actor_forward.1} parent=1 // pred_check
      _
    $region123: #{r_actor_forward.1} parent=1 // pred_check_branch
      %335 = sbr.rel (0) target = $region125
    $region124: #{r_actor_forward.1} parent=1 // pred_region
      %s337 = ssub.s32 1536, 1536
      %338 = vsyncadd [#allocation35], %s337
      %s339 = sshll.u32 [#allocation34], 4
      %s340 = int_to_ptr.vmem [resolvable:$true] %s339
      %345 = dma.hbm_to_vmem [thread:$0]  %s61, 1536, %s340, [#allocation35], 128, 128, 8
    $region125: #{r_actor_forward.1} parent=1 // pred_fallthru
      _
    // Predicated region
    $region126: #{r_actor_forward.1} parent=1 // pred_check
      _
    $region127: #{r_actor_forward.1} parent=1 // pred_check_branch
      %347 = sbr.rel (0) target = $region129
    $region128: #{r_actor_forward.1} parent=1 // pred_region
      %s349 = ssub.s32 1536, 1536
      %350 = vsyncadd [#allocation35], %s349
      %s351 = sshll.u32 [#allocation36], 4
      %s352 = int_to_ptr.vmem [resolvable:$true] %s351
      %357 = dma.hbm_to_vmem [thread:$0]  %s63, 1536, %s352, [#allocation35], 128, 128, 8
    $region129: #{r_actor_forward.1} parent=1 // pred_fallthru
      _
    // Predicated region
    $region130: #{r_actor_forward.1} parent=1 // pred_check
      _
    $region131: #{r_actor_forward.1} parent=1 // pred_check_branch
      %359 = sbr.rel (0) target = $region133
    $region132: #{r_actor_forward.1} parent=1 // pred_region
      %s361 = ssub.s32 48, 48
      %362 = vsyncadd [#allocation38], %s361
      %s363 = sshll.u32 [#allocation37], 4
      %s364 = int_to_ptr.vmem [resolvable:$true] %s363
      %369 = dma.hbm_to_vmem [thread:$0]  %s65, 48, %s364, [#allocation38], 16, 16, 1
    $region133: #{r_actor_forward.1} parent=1 // pred_fallthru
      _
    // Predicated region
    $region134: #{r_actor_forward.1} parent=1 // pred_check
      _
    $region135: #{r_actor_forward.1} parent=1 // pred_check_branch
      %371 = sbr.rel (0) target = $region137
    $region136: #{r_actor_forward.1} parent=1 // pred_region
      %s373 = ssub.s32 48, 48
      %374 = vsyncadd [#allocation38], %s373
      %s375 = sshll.u32 [#allocation39], 4
      %s376 = int_to_ptr.vmem [resolvable:$true] %s375
      %381 = dma.hbm_to_vmem [thread:$0]  %s67, 48, %s376, [#allocation38], 16, 16, 1
    $region137: #{r_actor_forward.1} parent=1 // pred_fallthru
      _
    // Predicated region
    $region138: #{r_actor_forward.1} parent=1 // pred_check
      _
    $region139: #{r_actor_forward.1} parent=1 // pred_check_branch
      %383 = sbr.rel (0) target = $region141
    $region140: #{r_actor_forward.1} parent=1 // pred_region
      _
    $region141: #{r_actor_forward.1} parent=1 // pred_fallthru
      _
    // Predicated region
    $region142: #{r_actor_forward.1} parent=1 // pred_check
      _
    $region143: #{r_actor_forward.1} parent=1 // pred_check_branch
      %385 = sbr.rel (0) target = $region145
    $region144: #{r_actor_forward.1} parent=1 // pred_region
      _
    $region145: #{r_actor_forward.1} parent=1 // pred_fallthru
      _
    // Predicated region
    $region146: #{r_actor_forward.1} parent=1 // pred_check
      _
    $region147: #{r_actor_forward.1} parent=1 // pred_check_branch
      %387 = sbr.rel (0) target = $region149
    $region148: #{r_actor_forward.1} parent=1 // pred_region
      _
    $region149: #{r_actor_forward.1} parent=1 // pred_fallthru
      _
    // Predicated region
    $region150: #{r_actor_forward.1} parent=1 // pred_check
      _
    $region151: #{r_actor_forward.1} parent=1 // pred_check_branch
      %389 = sbr.rel (0) target = $region153
    $region152: #{r_actor_forward.1} parent=1 // pred_region
      _
    $region153: #{r_actor_forward.1} parent=1 // pred_fallthru
      _
    // Predicated region
    $region154: #{r_actor_forward.1} parent=1 // pred_check
      _
    $region155: #{r_actor_forward.1} parent=1 // pred_check_branch
      %391 = sbr.rel (0) target = $region157
    $region156: #{r_actor_forward.1} parent=1 // pred_region
      %392 = dma.done [#allocation3], 64
    $region157: #{r_actor_forward.1} parent=1 // pred_fallthru
      _
    // Predicated region
    $region158: #{r_actor_forward.1} parent=1 // pred_check
      _
    $region159: #{r_actor_forward.1} parent=1 // pred_check_branch
      %394 = sbr.rel (0) target = $region161
    $region160: #{r_actor_forward.1} parent=1 // pred_region
      %395 = dma.done [#allocation5], 16
    $region161: #{r_actor_forward.1} parent=1 // pred_fallthru
      _
    // Predicated region
    $region162: #{r_actor_forward.1} parent=1 // pred_check
      _
    $region163: #{r_actor_forward.1} parent=1 // pred_check_branch
      %397 = sbr.rel (0) target = $region165
    $region164: #{r_actor_forward.1} parent=1 // pred_region
      %398 = dma.done [#allocation5], 16
    $region165: #{r_actor_forward.1} parent=1 // pred_fallthru
      _
    // Predicated region
    $region166: #{r_actor_forward.1} parent=1 // pred_check
      _
    $region167: #{r_actor_forward.1} parent=1 // pred_check_branch
      %400 = sbr.rel (0) target = $region169
    $region168: #{r_actor_forward.1} parent=1 // pred_region
      %401 = dma.done [#allocation8], 64
    $region169: #{r_actor_forward.1} parent=1 // pred_fallthru
      _
    // Predicated region
    $region170: #{r_actor_forward.1} parent=1 // pred_check
      _
    $region171: #{r_actor_forward.1} parent=1 // pred_check_branch
      %403 = sbr.rel (0) target = $region173
    $region172: #{r_actor_forward.1} parent=1 // pred_region
      %404 = dma.done [#allocation8], 16
    $region173: #{r_actor_forward.1} parent=1 // pred_fallthru
      _
    // Predicated region
    $region174: #{r_actor_forward.1} parent=1 // pred_check
      _
    $region175: #{r_actor_forward.1} parent=1 // pred_check_branch
      %406 = sbr.rel (0) target = $region177
    $region176: #{r_actor_forward.1} parent=1 // pred_region
      %407 = dma.done [#allocation11], 16
    $region177: #{r_actor_forward.1} parent=1 // pred_fallthru
      _
    // Predicated region
    $region178: #{r_actor_forward.1} parent=1 // pred_check
      _
    $region179: #{r_actor_forward.1} parent=1 // pred_check_branch
      %409 = sbr.rel (0) target = $region181
    $region180: #{r_actor_forward.1} parent=1 // pred_region
      %410 = dma.done [#allocation11], 16
    $region181: #{r_actor_forward.1} parent=1 // pred_fallthru
      _
    // Predicated region
    $region182: #{r_actor_forward.1} parent=1 // pred_check
      _
    $region183: #{r_actor_forward.1} parent=1 // pred_check_branch
      %412 = sbr.rel (0) target = $region185
    $region184: #{r_actor_forward.1} parent=1 // pred_region
      %413 = dma.done [#allocation14], 512
    $region185: #{r_actor_forward.1} parent=1 // pred_fallthru
      _
    // Predicated region
    $region186: #{r_actor_forward.1} parent=1 // pred_check
      _
    $region187: #{r_actor_forward.1} parent=1 // pred_check_branch
      %415 = sbr.rel (0) target = $region189
    $region188: #{r_actor_forward.1} parent=1 // pred_region
      %416 = dma.done [#allocation14], 16
    $region189: #{r_actor_forward.1} parent=1 // pred_fallthru
      _
    // Predicated region
    $region190: #{r_actor_forward.1} parent=1 // pred_check
      _
    $region191: #{r_actor_forward.1} parent=1 // pred_check_branch
      %418 = sbr.rel (0) target = $region193
    $region192: #{r_actor_forward.1} parent=1 // pred_region
      %419 = dma.done [#allocation17], 16
    $region193: #{r_actor_forward.1} parent=1 // pred_fallthru
      _
    // Predicated region
    $region194: #{r_actor_forward.1} parent=1 // pred_check
      _
    $region195: #{r_actor_forward.1} parent=1 // pred_check_branch
      %421 = sbr.rel (0) target = $region197
    $region196: #{r_actor_forward.1} parent=1 // pred_region
      %422 = dma.done [#allocation17], 16
    $region197: #{r_actor_forward.1} parent=1 // pred_fallthru
      _
    // Predicated region
    $region198: #{r_actor_forward.1} parent=1 // pred_check
      _
    $region199: #{r_actor_forward.1} parent=1 // pred_check_branch
      %424 = sbr.rel (0) target = $region201
    $region200: #{r_actor_forward.1} parent=1 // pred_region
      %425 = dma.done [#allocation20], 16
    $region201: #{r_actor_forward.1} parent=1 // pred_fallthru
      _
    // Predicated region
    $region202: #{r_actor_forward.1} parent=1 // pred_check
      _
    $region203: #{r_actor_forward.1} parent=1 // pred_check_branch
      %427 = sbr.rel (0) target = $region205
    $region204: #{r_actor_forward.1} parent=1 // pred_region
      %428 = dma.done [#allocation20], 16
    $region205: #{r_actor_forward.1} parent=1 // pred_fallthru
      _
    // Predicated region
    $region206: #{r_actor_forward.1} parent=1 // pred_check
      _
    $region207: #{r_actor_forward.1} parent=1 // pred_check_branch
      %430 = sbr.rel (0) target = $region209
    $region208: #{r_actor_forward.1} parent=1 // pred_region
      %431 = dma.done [#allocation23], 128
    $region209: #{r_actor_forward.1} parent=1 // pred_fallthru
      _
    // Predicated region
    $region210: #{r_actor_forward.1} parent=1 // pred_check
      _
    $region211: #{r_actor_forward.1} parent=1 // pred_check_branch
      %433 = sbr.rel (0) target = $region213
    $region212: #{r_actor_forward.1} parent=1 // pred_region
      %434 = dma.done [#allocation23], 16
    $region213: #{r_actor_forward.1} parent=1 // pred_fallthru
      _
    // Predicated region
    $region214: #{r_actor_forward.1} parent=1 // pred_check
      _
    $region215: #{r_actor_forward.1} parent=1 // pred_check_branch
      %436 = sbr.rel (0) target = $region217
    $region216: #{r_actor_forward.1} parent=1 // pred_region
      %437 = dma.done [#allocation26], 16
    $region217: #{r_actor_forward.1} parent=1 // pred_fallthru
      _
    // Predicated region
    $region218: #{r_actor_forward.1} parent=1 // pred_check
      _
    $region219: #{r_actor_forward.1} parent=1 // pred_check_branch
      %439 = sbr.rel (0) target = $region221
    $region220: #{r_actor_forward.1} parent=1 // pred_region
      %440 = dma.done [#allocation26], 16
    $region221: #{r_actor_forward.1} parent=1 // pred_fallthru
      _
    // Predicated region
    $region222: #{r_actor_forward.1} parent=1 // pred_check
      _
    $region223: #{r_actor_forward.1} parent=1 // pred_check_branch
      %442 = sbr.rel (0) target = $region225
    $region224: #{r_actor_forward.1} parent=1 // pred_region
      %443 = dma.done [#allocation29], 16
    $region225: #{r_actor_forward.1} parent=1 // pred_fallthru
      _
    // Predicated region
    $region226: #{r_actor_forward.1} parent=1 // pred_check
      _
    $region227: #{r_actor_forward.1} parent=1 // pred_check_branch
      %445 = sbr.rel (0) target = $region229
    $region228: #{r_actor_forward.1} parent=1 // pred_region
      %446 = dma.done [#allocation29], 16
    $region229: #{r_actor_forward.1} parent=1 // pred_fallthru
      _
    // Predicated region
    $region230: #{r_actor_forward.1} parent=1 // pred_check
      _
    $region231: #{r_actor_forward.1} parent=1 // pred_check_branch
      %448 = sbr.rel (0) target = $region233
    $region232: #{r_actor_forward.1} parent=1 // pred_region
      %449 = dma.done [#allocation32], 16
    $region233: #{r_actor_forward.1} parent=1 // pred_fallthru
      _
    // Predicated region
    $region234: #{r_actor_forward.1} parent=1 // pred_check
      _
    $region235: #{r_actor_forward.1} parent=1 // pred_check_branch
      %451 = sbr.rel (0) target = $region237
    $region236: #{r_actor_forward.1} parent=1 // pred_region
      %452 = dma.done [#allocation32], 1536
    $region237: #{r_actor_forward.1} parent=1 // pred_fallthru
      _
    // Predicated region
    $region238: #{r_actor_forward.1} parent=1 // pred_check
      _
    $region239: #{r_actor_forward.1} parent=1 // pred_check_branch
      %454 = sbr.rel (0) target = $region241
    $region240: #{r_actor_forward.1} parent=1 // pred_region
      %455 = dma.done [#allocation35], 1536
    $region241: #{r_actor_forward.1} parent=1 // pred_fallthru
      _
    // Predicated region
    $region242: #{r_actor_forward.1} parent=1 // pred_check
      _
    $region243: #{r_actor_forward.1} parent=1 // pred_check_branch
      %457 = sbr.rel (0) target = $region245
    $region244: #{r_actor_forward.1} parent=1 // pred_region
      %458 = dma.done [#allocation35], 1536
    $region245: #{r_actor_forward.1} parent=1 // pred_fallthru
      _
    // Predicated region
    $region246: #{r_actor_forward.1} parent=1 // pred_check
      _
    $region247: #{r_actor_forward.1} parent=1 // pred_check_branch
      %460 = sbr.rel (0) target = $region249
    $region248: #{r_actor_forward.1} parent=1 // pred_region
      %461 = dma.done [#allocation38], 48
    $region249: #{r_actor_forward.1} parent=1 // pred_fallthru
      _
    // Predicated region
    $region250: #{r_actor_forward.1} parent=1 // pred_check
      _
    $region251: #{r_actor_forward.1} parent=1 // pred_check_branch
      %463 = sbr.rel (0) target = $region253
    $region252: #{r_actor_forward.1} parent=1 // pred_region
      %464 = dma.done [#allocation38], 48
    $region253: #{r_actor_forward.1} parent=1 // pred_fallthru
      _
    %v465 = vld [vmem:[%s1] sm:$0xff]
    %s466 = scalar_lea.vmem %s1, 8
    %v467 = vld [vmem:[%s466] sm:$0xff]
    %v468 = vld [vmem:[%s11] sm:$0xff]
    %v469 = vld [vmem:[%s11 + $0x8] sm:$0xff]
    %v470 = vld [vmem:[%s11 + $0x10] sm:$0xff]
    %v471 = vld [vmem:[%s11 + $0x18] sm:$0xff]
    %v472 = vld [vmem:[%s11 + $0x20] sm:$0xff]
    %v473 = vld [vmem:[%s11 + $0x28] sm:$0xff]
    %v474 = vld [vmem:[%s11 + $0x30] sm:$0xff]
    %v475 = vld [vmem:[%s11 + $0x38] sm:$0xff]
    %v476 = vld [vmem:[%s13] sm:$0xff]
    %v477 = vld [vmem:[%s13 + $0x8] sm:$0xff]
    %v478 = vld [vmem:[%s13 + $0x10] sm:$0xff]
    %v479 = vld [vmem:[%s13 + $0x18] sm:$0xff]
    %v480 = vld [vmem:[%s13 + $0x20] sm:$0xff]
    %v481 = vld [vmem:[%s13 + $0x28] sm:$0xff]
    %v482 = vld [vmem:[%s13 + $0x30] sm:$0xff]
    %v483 = vld [vmem:[%s13 + $0x38] sm:$0xff]
    %vm484 = vcmask 523264
    %v486 = vsel %vm484, 0.0, 0
    %488 = vmatprep.subr.mxu0 0.0
    %489 = vmatpush1.msra.mxu0 0.0
    %490 = vmatprep.subr.mxu0 0.0
    %491 = vmatpush1.msra.mxu0 0.0
    %492 = vmatprep.subr.mxu0 0.0
    %493 = vmatpush1.msra.mxu0 0.0
    %494 = vmatprep.subr.mxu0 0.0
    %495 = vmatpush1.msra.mxu0 0.0
    %496 = vmatprep.subr.mxu0 0.0
    %497 = vmatpush1.msra.mxu0 0.0
    %498 = vmatprep.subr.mxu0 0.0
    %499 = vmatpush1.msra.mxu0 0.0
    %500 = vmatprep.subr.mxu0 0.0
    %501 = vmatpush1.msra.mxu0 0.0
    %502 = vmatprep.subr.mxu0 0.0
    %503 = vmatpush1.msra.mxu0 0.0
    %504 = vmatprep.subr.mxu0 0.0
    %505 = vmatpush1.msra.mxu0 %v483
    %506 = vmatprep.subr.mxu0 0.0
    %507 = vmatpush1.msra.mxu0 %v482
    %508 = vmatprep.subr.mxu0 0.0
    %509 = vmatpush1.msra.mxu0 %v481
    %510 = vmatprep.subr.mxu0 0.0
    %511 = vmatpush1.msra.mxu0 %v480
    %512 = vmatprep.subr.mxu0 0.0
    %513 = vmatpush1.msra.mxu0 %v479
    %514 = vmatprep.subr.mxu0 0.0
    %515 = vmatpush1.msra.mxu0 %v478
    %516 = vmatprep.subr.mxu0 0.0
    %517 = vmatpush1.msra.mxu0 %v477
    %518 = vmatprep.subr.mxu0 0.0
    %519 = vmatpush1.msra.mxu0 %v476
    %520 = vmatprep.subr.mxu0 0.0
    %521 = vmatpush2.msra.mxu0 0.0
    %522 = vmatprep.subr.mxu0 0.0
    %523 = vmatpush2.msra.mxu0 0.0
    %524 = vmatprep.subr.mxu0 0.0
    %525 = vmatpush2.msra.mxu0 0.0
    %526 = vmatprep.subr.mxu0 0.0
    %527 = vmatpush2.msra.mxu0 0.0
    %528 = vmatprep.subr.mxu0 0.0
    %529 = vmatpush2.msra.mxu0 0.0
    %530 = vmatprep.subr.mxu0 0.0
    %531 = vmatpush2.msra.mxu0 0.0
    %532 = vmatprep.subr.mxu0 0.0
    %533 = vmatpush2.msra.mxu0 0.0
    %534 = vmatprep.subr.mxu0 0.0
    %535 = vmatpush2.msra.mxu0 0.0
    %536 = vmatprep.subr.mxu0 0.0
    %537 = vmatpush2.msra.mxu0 0.0
    %538 = vmatprep.subr.mxu0 0.0
    %539 = vmatpush2.msra.mxu0 0.0
    %540 = vmatprep.subr.mxu0 0.0
    %541 = vmatpush2.msra.mxu0 0.0
    %542 = vmatprep.subr.mxu0 0.0
    %543 = vmatpush2.msra.mxu0 0.0
    %544 = vmatprep.subr.mxu0 0.0
    %545 = vmatpush2.msra.mxu0 0.0
    %546 = vmatprep.subr.mxu0 0.0
    %547 = vmatpush2.msra.mxu0 0.0
    %548 = vmatprep.subr.mxu0 0.0
    %549 = vmatpush2.msra.mxu0 0.0
    %550 = vmatprep.subr.mxu0 0.0
    %551 = vmatpush2.msra.mxu0 0.0
    %552 = vmatprep.mubr.f32.mxu0 0.0
    %553 = vmatmul.mubr.f32.gmra.mxu0 %v486
    %v554 = vpop.f32.mrf.mxu0
    %v555 = vadd.f32 0.0, %v554
    %v556 = vpop.f32.mrf.mxu0
    %557 = vdwg.mxu0
    %v559 = vsel %vm484, %v465, 0
    %561 = vmatprep.subr.mxu0 0.0
    %562 = vmatpush1.msra.mxu0 0.0
    %563 = vmatprep.subr.mxu0 0.0
    %564 = vmatpush1.msra.mxu0 0.0
    %565 = vmatprep.subr.mxu0 0.0
    %566 = vmatpush1.msra.mxu0 0.0
    %567 = vmatprep.subr.mxu0 0.0
    %568 = vmatpush1.msra.mxu0 0.0
    %569 = vmatprep.subr.mxu0 0.0
    %570 = vmatpush1.msra.mxu0 0.0
    %571 = vmatprep.subr.mxu0 0.0
    %572 = vmatpush1.msra.mxu0 0.0
    %573 = vmatprep.subr.mxu0 0.0
    %574 = vmatpush1.msra.mxu0 0.0
    %575 = vmatprep.subr.mxu0 0.0
    %576 = vmatpush1.msra.mxu0 0.0
    %577 = vmatprep.subr.mxu0 0.0
    %578 = vmatpush1.msra.mxu0 %v475
    %579 = vmatprep.subr.mxu0 0.0
    %580 = vmatpush1.msra.mxu0 %v474
    %581 = vmatprep.subr.mxu0 0.0
    %582 = vmatpush1.msra.mxu0 %v473
    %583 = vmatprep.subr.mxu0 0.0
    %584 = vmatpush1.msra.mxu0 %v472
    %585 = vmatprep.subr.mxu0 0.0
    %586 = vmatpush1.msra.mxu0 %v471
    %587 = vmatprep.subr.mxu0 0.0
    %588 = vmatpush1.msra.mxu0 %v470
    %589 = vmatprep.subr.mxu0 0.0
    %590 = vmatpush1.msra.mxu0 %v469
    %591 = vmatprep.subr.mxu0 0.0
    %592 = vmatpush1.msra.mxu0 %v468
    %593 = vmatprep.subr.mxu0 0.0
    %594 = vmatpush2.msra.mxu0 0.0
    %595 = vmatprep.subr.mxu0 0.0
    %596 = vmatpush2.msra.mxu0 0.0
    %597 = vmatprep.subr.mxu0 0.0
    %598 = vmatpush2.msra.mxu0 0.0
    %599 = vmatprep.subr.mxu0 0.0
    %600 = vmatpush2.msra.mxu0 0.0
    %601 = vmatprep.subr.mxu0 0.0
    %602 = vmatpush2.msra.mxu0 0.0
    %603 = vmatprep.subr.mxu0 0.0
    %604 = vmatpush2.msra.mxu0 0.0
    %605 = vmatprep.subr.mxu0 0.0
    %606 = vmatpush2.msra.mxu0 0.0
    %607 = vmatprep.subr.mxu0 0.0
    %608 = vmatpush2.msra.mxu0 0.0
    %609 = vmatprep.subr.mxu0 0.0
    %610 = vmatpush2.msra.mxu0 0.0
    %611 = vmatprep.subr.mxu0 0.0
    %612 = vmatpush2.msra.mxu0 0.0
    %613 = vmatprep.subr.mxu0 0.0
    %614 = vmatpush2.msra.mxu0 0.0
    %615 = vmatprep.subr.mxu0 0.0
    %616 = vmatpush2.msra.mxu0 0.0
    %617 = vmatprep.subr.mxu0 0.0
    %618 = vmatpush2.msra.mxu0 0.0
    %619 = vmatprep.subr.mxu0 0.0
    %620 = vmatpush2.msra.mxu0 0.0
    %621 = vmatprep.subr.mxu0 0.0
    %622 = vmatpush2.msra.mxu0 0.0
    %623 = vmatprep.subr.mxu0 0.0
    %624 = vmatpush2.msra.mxu0 0.0
    %625 = vmatprep.mubr.f32.mxu0 0.0
    %626 = vmatmul.mubr.f32.gmra.mxu0 %v559
    %v627 = vpop.f32.mrf.mxu0
    %v628 = vadd.f32 %v555, %v627
    %v629 = vpop.f32.mrf.mxu0
    %630 = vdwg.mxu0
    %v631 = vld [vmem:[#allocation2] sm:$0x1]
    %v633 = vlaneseq
    %v634 = vshrl.u32 %v633, 7
    %v635 = vsub.s32 0, %v634
    %v636 = vrot.slane %v631, %v635
    %v638 = vadd.f32 %v628, %v636
    %s639 = scalar_lea.vmem %s11, 64
    %v640 = vld [vmem:[%s639] sm:$0xff]
    %v641 = vld [vmem:[%s639 + $0x8] sm:$0xff]
    %v642 = vld [vmem:[%s639 + $0x10] sm:$0xff]
    %v643 = vld [vmem:[%s639 + $0x18] sm:$0xff]
    %v644 = vld [vmem:[%s639 + $0x20] sm:$0xff]
    %v645 = vld [vmem:[%s639 + $0x28] sm:$0xff]
    %v646 = vld [vmem:[%s639 + $0x30] sm:$0xff]
    %v647 = vld [vmem:[%s639 + $0x38] sm:$0xff]
    %s648 = scalar_lea.vmem %s13, 64
    %v649 = vld [vmem:[%s648] sm:$0xff]
    %v650 = vld [vmem:[%s648 + $0x8] sm:$0xff]
    %v651 = vld [vmem:[%s648 + $0x10] sm:$0xff]
    %v652 = vld [vmem:[%s648 + $0x18] sm:$0xff]
    %v653 = vld [vmem:[%s648 + $0x20] sm:$0xff]
    %v654 = vld [vmem:[%s648 + $0x28] sm:$0xff]
    %v655 = vld [vmem:[%s648 + $0x30] sm:$0xff]
    %v656 = vld [vmem:[%s648 + $0x38] sm:$0xff]
    %657 = vmatprep.subr.mxu0 0.0
    %658 = vmatpush1.msra.mxu0 0.0
    %659 = vmatprep.subr.mxu0 0.0
    %660 = vmatpush1.msra.mxu0 0.0
    %661 = vmatprep.subr.mxu0 0.0
    %662 = vmatpush1.msra.mxu0 0.0
    %663 = vmatprep.subr.mxu0 0.0
    %664 = vmatpush1.msra.mxu0 0.0
    %665 = vmatprep.subr.mxu0 0.0
    %666 = vmatpush1.msra.mxu0 0.0
    %667 = vmatprep.subr.mxu0 0.0
    %668 = vmatpush1.msra.mxu0 0.0
    %669 = vmatprep.subr.mxu0 0.0
    %670 = vmatpush1.msra.mxu0 0.0
    %671 = vmatprep.subr.mxu0 0.0
    %672 = vmatpush1.msra.mxu0 0.0
    %673 = vmatprep.subr.mxu0 0.0
    %674 = vmatpush1.msra.mxu0 %v656
    %675 = vmatprep.subr.mxu0 0.0
    %676 = vmatpush1.msra.mxu0 %v655
    %677 = vmatprep.subr.mxu0 0.0
    %678 = vmatpush1.msra.mxu0 %v654
    %679 = vmatprep.subr.mxu0 0.0
    %680 = vmatpush1.msra.mxu0 %v653
    %681 = vmatprep.subr.mxu0 0.0
    %682 = vmatpush1.msra.mxu0 %v652
    %683 = vmatprep.subr.mxu0 0.0
    %684 = vmatpush1.msra.mxu0 %v651
    %685 = vmatprep.subr.mxu0 0.0
    %686 = vmatpush1.msra.mxu0 %v650
    %687 = vmatprep.subr.mxu0 0.0
    %688 = vmatpush1.msra.mxu0 %v649
    %689 = vmatprep.subr.mxu0 0.0
    %690 = vmatpush2.msra.mxu0 0.0
    %691 = vmatprep.subr.mxu0 0.0
    %692 = vmatpush2.msra.mxu0 0.0
    %693 = vmatprep.subr.mxu0 0.0
    %694 = vmatpush2.msra.mxu0 0.0
    %695 = vmatprep.subr.mxu0 0.0
    %696 = vmatpush2.msra.mxu0 0.0
    %697 = vmatprep.subr.mxu0 0.0
    %698 = vmatpush2.msra.mxu0 0.0
    %699 = vmatprep.subr.mxu0 0.0
    %700 = vmatpush2.msra.mxu0 0.0
    %701 = vmatprep.subr.mxu0 0.0
    %702 = vmatpush2.msra.mxu0 0.0
    %703 = vmatprep.subr.mxu0 0.0
    %704 = vmatpush2.msra.mxu0 0.0
    %705 = vmatprep.subr.mxu0 0.0
    %706 = vmatpush2.msra.mxu0 0.0
    %707 = vmatprep.subr.mxu0 0.0
    %708 = vmatpush2.msra.mxu0 0.0
    %709 = vmatprep.subr.mxu0 0.0
    %710 = vmatpush2.msra.mxu0 0.0
    %711 = vmatprep.subr.mxu0 0.0
    %712 = vmatpush2.msra.mxu0 0.0
    %713 = vmatprep.subr.mxu0 0.0
    %714 = vmatpush2.msra.mxu0 0.0
    %715 = vmatprep.subr.mxu0 0.0
    %716 = vmatpush2.msra.mxu0 0.0
    %717 = vmatprep.subr.mxu0 0.0
    %718 = vmatpush2.msra.mxu0 0.0
    %719 = vmatprep.subr.mxu0 0.0
    %720 = vmatpush2.msra.mxu0 0.0
    %721 = vmatprep.mubr.f32.mxu0 0.0
    %722 = vmatmul.mubr.f32.gmra.mxu0 %v486
    %v723 = vpop.f32.mrf.mxu0
    %v724 = vadd.f32 0.0, %v723
    %v725 = vpop.f32.mrf.mxu0
    %726 = vdwg.mxu0
    %727 = vmatprep.subr.mxu0 0.0
    %728 = vmatpush1.msra.mxu0 0.0
    %729 = vmatprep.subr.mxu0 0.0
    %730 = vmatpush1.msra.mxu0 0.0
    %731 = vmatprep.subr.mxu0 0.0
    %732 = vmatpush1.msra.mxu0 0.0
    %733 = vmatprep.subr.mxu0 0.0
    %734 = vmatpush1.msra.mxu0 0.0
    %735 = vmatprep.subr.mxu0 0.0
    %736 = vmatpush1.msra.mxu0 0.0
    %737 = vmatprep.subr.mxu0 0.0
    %738 = vmatpush1.msra.mxu0 0.0
    %739 = vmatprep.subr.mxu0 0.0
    %740 = vmatpush1.msra.mxu0 0.0
    %741 = vmatprep.subr.mxu0 0.0
    %742 = vmatpush1.msra.mxu0 0.0
    %743 = vmatprep.subr.mxu0 0.0
    %744 = vmatpush1.msra.mxu0 %v647
    %745 = vmatprep.subr.mxu0 0.0
    %746 = vmatpush1.msra.mxu0 %v646
    %747 = vmatprep.subr.mxu0 0.0
    %748 = vmatpush1.msra.mxu0 %v645
    %749 = vmatprep.subr.mxu0 0.0
    %750 = vmatpush1.msra.mxu0 %v644
    %751 = vmatprep.subr.mxu0 0.0
    %752 = vmatpush1.msra.mxu0 %v643
    %753 = vmatprep.subr.mxu0 0.0
    %754 = vmatpush1.msra.mxu0 %v642
    %755 = vmatprep.subr.mxu0 0.0
    %756 = vmatpush1.msra.mxu0 %v641
    %757 = vmatprep.subr.mxu0 0.0
    %758 = vmatpush1.msra.mxu0 %v640
    %759 = vmatprep.subr.mxu0 0.0
    %760 = vmatpush2.msra.mxu0 0.0
    %761 = vmatprep.subr.mxu0 0.0
    %762 = vmatpush2.msra.mxu0 0.0
    %763 = vmatprep.subr.mxu0 0.0
    %764 = vmatpush2.msra.mxu0 0.0
    %765 = vmatprep.subr.mxu0 0.0
    %766 = vmatpush2.msra.mxu0 0.0
    %767 = vmatprep.subr.mxu0 0.0
    %768 = vmatpush2.msra.mxu0 0.0
    %769 = vmatprep.subr.mxu0 0.0
    %770 = vmatpush2.msra.mxu0 0.0
    %771 = vmatprep.subr.mxu0 0.0
    %772 = vmatpush2.msra.mxu0 0.0
    %773 = vmatprep.subr.mxu0 0.0
    %774 = vmatpush2.msra.mxu0 0.0
    %775 = vmatprep.subr.mxu0 0.0
    %776 = vmatpush2.msra.mxu0 0.0
    %777 = vmatprep.subr.mxu0 0.0
    %778 = vmatpush2.msra.mxu0 0.0
    %779 = vmatprep.subr.mxu0 0.0
    %780 = vmatpush2.msra.mxu0 0.0
    %781 = vmatprep.subr.mxu0 0.0
    %782 = vmatpush2.msra.mxu0 0.0
    %783 = vmatprep.subr.mxu0 0.0
    %784 = vmatpush2.msra.mxu0 0.0
    %785 = vmatprep.subr.mxu0 0.0
    %786 = vmatpush2.msra.mxu0 0.0
    %787 = vmatprep.subr.mxu0 0.0
    %788 = vmatpush2.msra.mxu0 0.0
    %789 = vmatprep.subr.mxu0 0.0
    %790 = vmatpush2.msra.mxu0 0.0
    %791 = vmatprep.mubr.f32.mxu0 0.0
    %792 = vmatmul.mubr.f32.gmra.mxu0 %v559
    %v793 = vpop.f32.mrf.mxu0
    %v794 = vadd.f32 %v724, %v793
    %v795 = vpop.f32.mrf.mxu0
    %796 = vdwg.mxu0
    %s797 = scalar_lea.vmem [#allocation2], 1
    %v798 = vld [vmem:[%s797] sm:$0x1]
    %v800 = vlaneseq
    %v801 = vshrl.u32 %v800, 7
    %v802 = vsub.s32 0, %v801
    %v803 = vrot.slane %v798, %v802
    %v805 = vadd.f32 %v794, %v803
    %s806 = scalar_lea.vmem %s11, 128
    %v807 = vld [vmem:[%s806] sm:$0xff]
    %v808 = vld [vmem:[%s806 + $0x8] sm:$0xff]
    %v809 = vld [vmem:[%s806 + $0x10] sm:$0xff]
    %v810 = vld [vmem:[%s806 + $0x18] sm:$0xff]
    %v811 = vld [vmem:[%s806 + $0x20] sm:$0xff]
    %v812 = vld [vmem:[%s806 + $0x28] sm:$0xff]
    %v813 = vld [vmem:[%s806 + $0x30] sm:$0xff]
    %v814 = vld [vmem:[%s806 + $0x38] sm:$0xff]
    %s815 = scalar_lea.vmem %s13, 128
    %v816 = vld [vmem:[%s815] sm:$0xff]
    %v817 = vld [vmem:[%s815 + $0x8] sm:$0xff]
    %v818 = vld [vmem:[%s815 + $0x10] sm:$0xff]
    %v819 = vld [vmem:[%s815 + $0x18] sm:$0xff]
    %v820 = vld [vmem:[%s815 + $0x20] sm:$0xff]
    %v821 = vld [vmem:[%s815 + $0x28] sm:$0xff]
    %v822 = vld [vmem:[%s815 + $0x30] sm:$0xff]
    %v823 = vld [vmem:[%s815 + $0x38] sm:$0xff]
    %824 = vmatprep.subr.mxu0 0.0
    %825 = vmatpush1.msra.mxu0 0.0
    %826 = vmatprep.subr.mxu0 0.0
    %827 = vmatpush1.msra.mxu0 0.0
    %828 = vmatprep.subr.mxu0 0.0
    %829 = vmatpush1.msra.mxu0 0.0
    %830 = vmatprep.subr.mxu0 0.0
    %831 = vmatpush1.msra.mxu0 0.0
    %832 = vmatprep.subr.mxu0 0.0
    %833 = vmatpush1.msra.mxu0 0.0
    %834 = vmatprep.subr.mxu0 0.0
    %835 = vmatpush1.msra.mxu0 0.0
    %836 = vmatprep.subr.mxu0 0.0
    %837 = vmatpush1.msra.mxu0 0.0
    %838 = vmatprep.subr.mxu0 0.0
    %839 = vmatpush1.msra.mxu0 0.0
    %840 = vmatprep.subr.mxu0 0.0
    %841 = vmatpush1.msra.mxu0 %v823
    %842 = vmatprep.subr.mxu0 0.0
    %843 = vmatpush1.msra.mxu0 %v822
    %844 = vmatprep.subr.mxu0 0.0
    %845 = vmatpush1.msra.mxu0 %v821
    %846 = vmatprep.subr.mxu0 0.0
    %847 = vmatpush1.msra.mxu0 %v820
    %848 = vmatprep.subr.mxu0 0.0
    %849 = vmatpush1.msra.mxu0 %v819
    %850 = vmatprep.subr.mxu0 0.0
    %851 = vmatpush1.msra.mxu0 %v818
    %852 = vmatprep.subr.mxu0 0.0
    %853 = vmatpush1.msra.mxu0 %v817
    %854 = vmatprep.subr.mxu0 0.0
    %855 = vmatpush1.msra.mxu0 %v816
    %856 = vmatprep.subr.mxu0 0.0
    %857 = vmatpush2.msra.mxu0 0.0
    %858 = vmatprep.subr.mxu0 0.0
    %859 = vmatpush2.msra.mxu0 0.0
    %860 = vmatprep.subr.mxu0 0.0
    %861 = vmatpush2.msra.mxu0 0.0
    %862 = vmatprep.subr.mxu0 0.0
    %863 = vmatpush2.msra.mxu0 0.0
    %864 = vmatprep.subr.mxu0 0.0
    %865 = vmatpush2.msra.mxu0 0.0
    %866 = vmatprep.subr.mxu0 0.0
    %867 = vmatpush2.msra.mxu0 0.0
    %868 = vmatprep.subr.mxu0 0.0
    %869 = vmatpush2.msra.mxu0 0.0
    %870 = vmatprep.subr.mxu0 0.0
    %871 = vmatpush2.msra.mxu0 0.0
    %872 = vmatprep.subr.mxu0 0.0
    %873 = vmatpush2.msra.mxu0 0.0
    %874 = vmatprep.subr.mxu0 0.0
    %875 = vmatpush2.msra.mxu0 0.0
    %876 = vmatprep.subr.mxu0 0.0
    %877 = vmatpush2.msra.mxu0 0.0
    %878 = vmatprep.subr.mxu0 0.0
    %879 = vmatpush2.msra.mxu0 0.0
    %880 = vmatprep.subr.mxu0 0.0
    %881 = vmatpush2.msra.mxu0 0.0
    %882 = vmatprep.subr.mxu0 0.0
    %883 = vmatpush2.msra.mxu0 0.0
    %884 = vmatprep.subr.mxu0 0.0
    %885 = vmatpush2.msra.mxu0 0.0
    %886 = vmatprep.subr.mxu0 0.0
    %887 = vmatpush2.msra.mxu0 0.0
    %888 = vmatprep.mubr.f32.mxu0 0.0
    %889 = vmatmul.mubr.f32.gmra.mxu0 %v486
    %v890 = vpop.f32.mrf.mxu0
    %v891 = vadd.f32 0.0, %v890
    %v892 = vpop.f32.mrf.mxu0
    %893 = vdwg.mxu0
    %894 = vmatprep.subr.mxu0 0.0
    %895 = vmatpush1.msra.mxu0 0.0
    %896 = vmatprep.subr.mxu0 0.0
    %897 = vmatpush1.msra.mxu0 0.0
    %898 = vmatprep.subr.mxu0 0.0
    %899 = vmatpush1.msra.mxu0 0.0
    %900 = vmatprep.subr.mxu0 0.0
    %901 = vmatpush1.msra.mxu0 0.0
    %902 = vmatprep.subr.mxu0 0.0
    %903 = vmatpush1.msra.mxu0 0.0
    %904 = vmatprep.subr.mxu0 0.0
    %905 = vmatpush1.msra.mxu0 0.0
    %906 = vmatprep.subr.mxu0 0.0
    %907 = vmatpush1.msra.mxu0 0.0
    %908 = vmatprep.subr.mxu0 0.0
    %909 = vmatpush1.msra.mxu0 0.0
    %910 = vmatprep.subr.mxu0 0.0
    %911 = vmatpush1.msra.mxu0 %v814
    %912 = vmatprep.subr.mxu0 0.0
    %913 = vmatpush1.msra.mxu0 %v813
    %914 = vmatprep.subr.mxu0 0.0
    %915 = vmatpush1.msra.mxu0 %v812
    %916 = vmatprep.subr.mxu0 0.0
    %917 = vmatpush1.msra.mxu0 %v811
    %918 = vmatprep.subr.mxu0 0.0
    %919 = vmatpush1.msra.mxu0 %v810
    %920 = vmatprep.subr.mxu0 0.0
    %921 = vmatpush1.msra.mxu0 %v809
    %922 = vmatprep.subr.mxu0 0.0
    %923 = vmatpush1.msra.mxu0 %v808
    %924 = vmatprep.subr.mxu0 0.0
    %925 = vmatpush1.msra.mxu0 %v807
    %926 = vmatprep.subr.mxu0 0.0
    %927 = vmatpush2.msra.mxu0 0.0
    %928 = vmatprep.subr.mxu0 0.0
    %929 = vmatpush2.msra.mxu0 0.0
    %930 = vmatprep.subr.mxu0 0.0
    %931 = vmatpush2.msra.mxu0 0.0
    %932 = vmatprep.subr.mxu0 0.0
    %933 = vmatpush2.msra.mxu0 0.0
    %934 = vmatprep.subr.mxu0 0.0
    %935 = vmatpush2.msra.mxu0 0.0
    %936 = vmatprep.subr.mxu0 0.0
    %937 = vmatpush2.msra.mxu0 0.0
    %938 = vmatprep.subr.mxu0 0.0
    %939 = vmatpush2.msra.mxu0 0.0
    %940 = vmatprep.subr.mxu0 0.0
    %941 = vmatpush2.msra.mxu0 0.0
    %942 = vmatprep.subr.mxu0 0.0
    %943 = vmatpush2.msra.mxu0 0.0
    %944 = vmatprep.subr.mxu0 0.0
    %945 = vmatpush2.msra.mxu0 0.0
    %946 = vmatprep.subr.mxu0 0.0
    %947 = vmatpush2.msra.mxu0 0.0
    %948 = vmatprep.subr.mxu0 0.0
    %949 = vmatpush2.msra.mxu0 0.0
    %950 = vmatprep.subr.mxu0 0.0
    %951 = vmatpush2.msra.mxu0 0.0
    %952 = vmatprep.subr.mxu0 0.0
    %953 = vmatpush2.msra.mxu0 0.0
    %954 = vmatprep.subr.mxu0 0.0
    %955 = vmatpush2.msra.mxu0 0.0
    %956 = vmatprep.subr.mxu0 0.0
    %957 = vmatpush2.msra.mxu0 0.0
    %958 = vmatprep.mubr.f32.mxu0 0.0
    %959 = vmatmul.mubr.f32.gmra.mxu0 %v559
    %v960 = vpop.f32.mrf.mxu0
    %v961 = vadd.f32 %v891, %v960
    %v962 = vpop.f32.mrf.mxu0
    %963 = vdwg.mxu0
    %s964 = scalar_lea.vmem [#allocation2], 2
    %v965 = vld [vmem:[%s964] sm:$0x1]
    %v967 = vlaneseq
    %v968 = vshrl.u32 %v967, 7
    %v969 = vsub.s32 0, %v968
    %v970 = vrot.slane %v965, %v969
    %v972 = vadd.f32 %v961, %v970
    %s973 = scalar_lea.vmem %s11, 192
    %v974 = vld [vmem:[%s973] sm:$0xff]
    %v975 = vld [vmem:[%s973 + $0x8] sm:$0xff]
    %v976 = vld [vmem:[%s973 + $0x10] sm:$0xff]
    %v977 = vld [vmem:[%s973 + $0x18] sm:$0xff]
    %v978 = vld [vmem:[%s973 + $0x20] sm:$0xff]
    %v979 = vld [vmem:[%s973 + $0x28] sm:$0xff]
    %v980 = vld [vmem:[%s973 + $0x30] sm:$0xff]
    %v981 = vld [vmem:[%s973 + $0x38] sm:$0xff]
    %s982 = scalar_lea.vmem %s13, 192
    %v983 = vld [vmem:[%s982] sm:$0xff]
    %v984 = vld [vmem:[%s982 + $0x8] sm:$0xff]
    %v985 = vld [vmem:[%s982 + $0x10] sm:$0xff]
    %v986 = vld [vmem:[%s982 + $0x18] sm:$0xff]
    %v987 = vld [vmem:[%s982 + $0x20] sm:$0xff]
    %v988 = vld [vmem:[%s982 + $0x28] sm:$0xff]
    %v989 = vld [vmem:[%s982 + $0x30] sm:$0xff]
    %v990 = vld [vmem:[%s982 + $0x38] sm:$0xff]
    %991 = vmatprep.subr.mxu0 0.0
    %992 = vmatpush1.msra.mxu0 0.0
    %993 = vmatprep.subr.mxu0 0.0
    %994 = vmatpush1.msra.mxu0 0.0
    %995 = vmatprep.subr.mxu0 0.0
    %996 = vmatpush1.msra.mxu0 0.0
    %997 = vmatprep.subr.mxu0 0.0
    %998 = vmatpush1.msra.mxu0 0.0
    %999 = vmatprep.subr.mxu0 0.0
    %1000 = vmatpush1.msra.mxu0 0.0
    %1001 = vmatprep.subr.mxu0 0.0
    %1002 = vmatpush1.msra.mxu0 0.0
    %1003 = vmatprep.subr.mxu0 0.0
    %1004 = vmatpush1.msra.mxu0 0.0
    %1005 = vmatprep.subr.mxu0 0.0
    %1006 = vmatpush1.msra.mxu0 0.0
    %1007 = vmatprep.subr.mxu0 0.0
    %1008 = vmatpush1.msra.mxu0 %v990
    %1009 = vmatprep.subr.mxu0 0.0
    %1010 = vmatpush1.msra.mxu0 %v989
    %1011 = vmatprep.subr.mxu0 0.0
    %1012 = vmatpush1.msra.mxu0 %v988
    %1013 = vmatprep.subr.mxu0 0.0
    %1014 = vmatpush1.msra.mxu0 %v987
    %1015 = vmatprep.subr.mxu0 0.0
    %1016 = vmatpush1.msra.mxu0 %v986
    %1017 = vmatprep.subr.mxu0 0.0
    %1018 = vmatpush1.msra.mxu0 %v985
    %1019 = vmatprep.subr.mxu0 0.0
    %1020 = vmatpush1.msra.mxu0 %v984
    %1021 = vmatprep.subr.mxu0 0.0
    %1022 = vmatpush1.msra.mxu0 %v983
    %1023 = vmatprep.subr.mxu0 0.0
    %1024 = vmatpush2.msra.mxu0 0.0
    %1025 = vmatprep.subr.mxu0 0.0
    %1026 = vmatpush2.msra.mxu0 0.0
    %1027 = vmatprep.subr.mxu0 0.0
    %1028 = vmatpush2.msra.mxu0 0.0
    %1029 = vmatprep.subr.mxu0 0.0
    %1030 = vmatpush2.msra.mxu0 0.0
    %1031 = vmatprep.subr.mxu0 0.0
    %1032 = vmatpush2.msra.mxu0 0.0
    %1033 = vmatprep.subr.mxu0 0.0
    %1034 = vmatpush2.msra.mxu0 0.0
    %1035 = vmatprep.subr.mxu0 0.0
    %1036 = vmatpush2.msra.mxu0 0.0
    %1037 = vmatprep.subr.mxu0 0.0
    %1038 = vmatpush2.msra.mxu0 0.0
    %1039 = vmatprep.subr.mxu0 0.0
    %1040 = vmatpush2.msra.mxu0 0.0
    %1041 = vmatprep.subr.mxu0 0.0
    %1042 = vmatpush2.msra.mxu0 0.0
    %1043 = vmatprep.subr.mxu0 0.0
    %1044 = vmatpush2.msra.mxu0 0.0
    %1045 = vmatprep.subr.mxu0 0.0
    %1046 = vmatpush2.msra.mxu0 0.0
    %1047 = vmatprep.subr.mxu0 0.0
    %1048 = vmatpush2.msra.mxu0 0.0
    %1049 = vmatprep.subr.mxu0 0.0
    %1050 = vmatpush2.msra.mxu0 0.0
    %1051 = vmatprep.subr.mxu0 0.0
    %1052 = vmatpush2.msra.mxu0 0.0
    %1053 = vmatprep.subr.mxu0 0.0
    %1054 = vmatpush2.msra.mxu0 0.0
    %1055 = vmatprep.mubr.f32.mxu0 0.0
    %1056 = vmatmul.mubr.f32.gmra.mxu0 %v486
    %v1057 = vpop.f32.mrf.mxu0
    %v1058 = vadd.f32 0.0, %v1057
    %v1059 = vpop.f32.mrf.mxu0
    %1060 = vdwg.mxu0
    %1061 = vmatprep.subr.mxu0 0.0
    %1062 = vmatpush1.msra.mxu0 0.0
    %1063 = vmatprep.subr.mxu0 0.0
    %1064 = vmatpush1.msra.mxu0 0.0
    %1065 = vmatprep.subr.mxu0 0.0
    %1066 = vmatpush1.msra.mxu0 0.0
    %1067 = vmatprep.subr.mxu0 0.0
    %1068 = vmatpush1.msra.mxu0 0.0
    %1069 = vmatprep.subr.mxu0 0.0
    %1070 = vmatpush1.msra.mxu0 0.0
    %1071 = vmatprep.subr.mxu0 0.0
    %1072 = vmatpush1.msra.mxu0 0.0
    %1073 = vmatprep.subr.mxu0 0.0
    %1074 = vmatpush1.msra.mxu0 0.0
    %1075 = vmatprep.subr.mxu0 0.0
    %1076 = vmatpush1.msra.mxu0 0.0
    %1077 = vmatprep.subr.mxu0 0.0
    %1078 = vmatpush1.msra.mxu0 %v981
    %1079 = vmatprep.subr.mxu0 0.0
    %1080 = vmatpush1.msra.mxu0 %v980
    %1081 = vmatprep.subr.mxu0 0.0
    %1082 = vmatpush1.msra.mxu0 %v979
    %1083 = vmatprep.subr.mxu0 0.0
    %1084 = vmatpush1.msra.mxu0 %v978
    %1085 = vmatprep.subr.mxu0 0.0
    %1086 = vmatpush1.msra.mxu0 %v977
    %1087 = vmatprep.subr.mxu0 0.0
    %1088 = vmatpush1.msra.mxu0 %v976
    %1089 = vmatprep.subr.mxu0 0.0
    %1090 = vmatpush1.msra.mxu0 %v975
    %1091 = vmatprep.subr.mxu0 0.0
    %1092 = vmatpush1.msra.mxu0 %v974
    %1093 = vmatprep.subr.mxu0 0.0
    %1094 = vmatpush2.msra.mxu0 0.0
    %1095 = vmatprep.subr.mxu0 0.0
    %1096 = vmatpush2.msra.mxu0 0.0
    %1097 = vmatprep.subr.mxu0 0.0
    %1098 = vmatpush2.msra.mxu0 0.0
    %1099 = vmatprep.subr.mxu0 0.0
    %1100 = vmatpush2.msra.mxu0 0.0
    %1101 = vmatprep.subr.mxu0 0.0
    %1102 = vmatpush2.msra.mxu0 0.0
    %1103 = vmatprep.subr.mxu0 0.0
    %1104 = vmatpush2.msra.mxu0 0.0
    %1105 = vmatprep.subr.mxu0 0.0
    %1106 = vmatpush2.msra.mxu0 0.0
    %1107 = vmatprep.subr.mxu0 0.0
    %1108 = vmatpush2.msra.mxu0 0.0
    %1109 = vmatprep.subr.mxu0 0.0
    %1110 = vmatpush2.msra.mxu0 0.0
    %1111 = vmatprep.subr.mxu0 0.0
    %1112 = vmatpush2.msra.mxu0 0.0
    %1113 = vmatprep.subr.mxu0 0.0
    %1114 = vmatpush2.msra.mxu0 0.0
    %1115 = vmatprep.subr.mxu0 0.0
    %1116 = vmatpush2.msra.mxu0 0.0
    %1117 = vmatprep.subr.mxu0 0.0
    %1118 = vmatpush2.msra.mxu0 0.0
    %1119 = vmatprep.subr.mxu0 0.0
    %1120 = vmatpush2.msra.mxu0 0.0
    %1121 = vmatprep.subr.mxu0 0.0
    %1122 = vmatpush2.msra.mxu0 0.0
    %1123 = vmatprep.subr.mxu0 0.0
    %1124 = vmatpush2.msra.mxu0 0.0
    %1125 = vmatprep.mubr.f32.mxu0 0.0
    %1126 = vmatmul.mubr.f32.gmra.mxu0 %v559
    %v1127 = vpop.f32.mrf.mxu0
    %v1128 = vadd.f32 %v1058, %v1127
    %v1129 = vpop.f32.mrf.mxu0
    %1130 = vdwg.mxu0
    %s1131 = scalar_lea.vmem [#allocation2], 3
    %v1132 = vld [vmem:[%s1131] sm:$0x1]
    %v1134 = vlaneseq
    %v1135 = vshrl.u32 %v1134, 7
    %v1136 = vsub.s32 0, %v1135
    %v1137 = vrot.slane %v1132, %v1136
    %v1139 = vadd.f32 %v1128, %v1137
    %v1140 = vxor.u32 %v638, 2147483648
    %v1141 = vmul.f32 %v1140, 1.442695
    %v1142 = vpow.pop %v1141
    %v1143 = vadd.f32 %v1142, 1.0
    %v1144 = vrcp.pop %v1143
    %v1145 = vmul.f32 1.0, %v1144
    %v1146 = vxor.u32 %v805, 2147483648
    %v1147 = vmul.f32 %v1146, 1.442695
    %v1148 = vpow.pop %v1147
    %v1149 = vadd.f32 %v1148, 1.0
    %v1150 = vrcp.pop %v1149
    %v1151 = vmul.f32 1.0, %v1150
    %v1152 = vxor.u32 %v972, 2147483648
    %v1153 = vmul.f32 %v1152, 1.442695
    %v1154 = vpow.pop %v1153
    %v1155 = vadd.f32 %v1154, 1.0
    %v1156 = vrcp.pop %v1155
    %v1157 = vmul.f32 1.0, %v1156
    %v1158 = vtanh.pop %v1139
    %v1159 = vmul.f32 %v1151, 0.0
    %v1160 = vmul.f32 %v1145, %v1158
    %v1161 = vadd.f32 %v1159, %v1160
    %v1162 = vtanh.pop %v1161
    %v1163 = vmul.f32 %v1157, %v1162
    %v1165 = vsel %vm484, %v1163, 0
    %1167 = vmatprep.subr.mxu0 0.0
    %1168 = vmatpush1.msra.mxu0 0.0
    %1169 = vmatprep.subr.mxu0 0.0
    %1170 = vmatpush1.msra.mxu0 0.0
    %1171 = vmatprep.subr.mxu0 0.0
    %1172 = vmatpush1.msra.mxu0 0.0
    %1173 = vmatprep.subr.mxu0 0.0
    %1174 = vmatpush1.msra.mxu0 0.0
    %1175 = vmatprep.subr.mxu0 0.0
    %1176 = vmatpush1.msra.mxu0 0.0
    %1177 = vmatprep.subr.mxu0 0.0
    %1178 = vmatpush1.msra.mxu0 0.0
    %1179 = vmatprep.subr.mxu0 0.0
    %1180 = vmatpush1.msra.mxu0 0.0
    %1181 = vmatprep.subr.mxu0 0.0
    %1182 = vmatpush1.msra.mxu0 0.0
    %1183 = vmatprep.subr.mxu0 0.0
    %1184 = vmatpush1.msra.mxu0 %v483
    %1185 = vmatprep.subr.mxu0 0.0
    %1186 = vmatpush1.msra.mxu0 %v482
    %1187 = vmatprep.subr.mxu0 0.0
    %1188 = vmatpush1.msra.mxu0 %v481
    %1189 = vmatprep.subr.mxu0 0.0
    %1190 = vmatpush1.msra.mxu0 %v480
    %1191 = vmatprep.subr.mxu0 0.0
    %1192 = vmatpush1.msra.mxu0 %v479
    %1193 = vmatprep.subr.mxu0 0.0
    %1194 = vmatpush1.msra.mxu0 %v478
    %1195 = vmatprep.subr.mxu0 0.0
    %1196 = vmatpush1.msra.mxu0 %v477
    %1197 = vmatprep.subr.mxu0 0.0
    %1198 = vmatpush1.msra.mxu0 %v476
    %1199 = vmatprep.subr.mxu0 0.0
    %1200 = vmatpush2.msra.mxu0 0.0
    %1201 = vmatprep.subr.mxu0 0.0
    %1202 = vmatpush2.msra.mxu0 0.0
    %1203 = vmatprep.subr.mxu0 0.0
    %1204 = vmatpush2.msra.mxu0 0.0
    %1205 = vmatprep.subr.mxu0 0.0
    %1206 = vmatpush2.msra.mxu0 0.0
    %1207 = vmatprep.subr.mxu0 0.0
    %1208 = vmatpush2.msra.mxu0 0.0
    %1209 = vmatprep.subr.mxu0 0.0
    %1210 = vmatpush2.msra.mxu0 0.0
    %1211 = vmatprep.subr.mxu0 0.0
    %1212 = vmatpush2.msra.mxu0 0.0
    %1213 = vmatprep.subr.mxu0 0.0
    %1214 = vmatpush2.msra.mxu0 0.0
    %1215 = vmatprep.subr.mxu0 0.0
    %1216 = vmatpush2.msra.mxu0 0.0
    %1217 = vmatprep.subr.mxu0 0.0
    %1218 = vmatpush2.msra.mxu0 0.0
    %1219 = vmatprep.subr.mxu0 0.0
    %1220 = vmatpush2.msra.mxu0 0.0
    %1221 = vmatprep.subr.mxu0 0.0
    %1222 = vmatpush2.msra.mxu0 0.0
    %1223 = vmatprep.subr.mxu0 0.0
    %1224 = vmatpush2.msra.mxu0 0.0
    %1225 = vmatprep.subr.mxu0 0.0
    %1226 = vmatpush2.msra.mxu0 0.0
    %1227 = vmatprep.subr.mxu0 0.0
    %1228 = vmatpush2.msra.mxu0 0.0
    %1229 = vmatprep.subr.mxu0 0.0
    %1230 = vmatpush2.msra.mxu0 0.0
    %1231 = vmatprep.mubr.f32.mxu0 0.0
    %1232 = vmatmul.mubr.f32.gmra.mxu0 %v1165
    %v1233 = vpop.f32.mrf.mxu0
    %v1234 = vadd.f32 0.0, %v1233
    %v1235 = vpop.f32.mrf.mxu0
    %1236 = vdwg.mxu0
    %v1238 = vsel %vm484, %v467, 0
    %1240 = vmatprep.subr.mxu0 0.0
    %1241 = vmatpush1.msra.mxu0 0.0
    %1242 = vmatprep.subr.mxu0 0.0
    %1243 = vmatpush1.msra.mxu0 0.0
    %1244 = vmatprep.subr.mxu0 0.0
    %1245 = vmatpush1.msra.mxu0 0.0
    %1246 = vmatprep.subr.mxu0 0.0
    %1247 = vmatpush1.msra.mxu0 0.0
    %1248 = vmatprep.subr.mxu0 0.0
    %1249 = vmatpush1.msra.mxu0 0.0
    %1250 = vmatprep.subr.mxu0 0.0
    %1251 = vmatpush1.msra.mxu0 0.0
    %1252 = vmatprep.subr.mxu0 0.0
    %1253 = vmatpush1.msra.mxu0 0.0
    %1254 = vmatprep.subr.mxu0 0.0
    %1255 = vmatpush1.msra.mxu0 0.0
    %1256 = vmatprep.subr.mxu0 0.0
    %1257 = vmatpush1.msra.mxu0 %v475
    %1258 = vmatprep.subr.mxu0 0.0
    %1259 = vmatpush1.msra.mxu0 %v474
    %1260 = vmatprep.subr.mxu0 0.0
    %1261 = vmatpush1.msra.mxu0 %v473
    %1262 = vmatprep.subr.mxu0 0.0
    %1263 = vmatpush1.msra.mxu0 %v472
    %1264 = vmatprep.subr.mxu0 0.0
    %1265 = vmatpush1.msra.mxu0 %v471
    %1266 = vmatprep.subr.mxu0 0.0
    %1267 = vmatpush1.msra.mxu0 %v470
    %1268 = vmatprep.subr.mxu0 0.0
    %1269 = vmatpush1.msra.mxu0 %v469
    %1270 = vmatprep.subr.mxu0 0.0
    %1271 = vmatpush1.msra.mxu0 %v468
    %1272 = vmatprep.subr.mxu0 0.0
    %1273 = vmatpush2.msra.mxu0 0.0
    %1274 = vmatprep.subr.mxu0 0.0
    %1275 = vmatpush2.msra.mxu0 0.0
    %1276 = vmatprep.subr.mxu0 0.0
    %1277 = vmatpush2.msra.mxu0 0.0
    %1278 = vmatprep.subr.mxu0 0.0
    %1279 = vmatpush2.msra.mxu0 0.0
    %1280 = vmatprep.subr.mxu0 0.0
    %1281 = vmatpush2.msra.mxu0 0.0
    %1282 = vmatprep.subr.mxu0 0.0
    %1283 = vmatpush2.msra.mxu0 0.0
    %1284 = vmatprep.subr.mxu0 0.0
    %1285 = vmatpush2.msra.mxu0 0.0
    %1286 = vmatprep.subr.mxu0 0.0
    %1287 = vmatpush2.msra.mxu0 0.0
    %1288 = vmatprep.subr.mxu0 0.0
    %1289 = vmatpush2.msra.mxu0 0.0
    %1290 = vmatprep.subr.mxu0 0.0
    %1291 = vmatpush2.msra.mxu0 0.0
    %1292 = vmatprep.subr.mxu0 0.0
    %1293 = vmatpush2.msra.mxu0 0.0
    %1294 = vmatprep.subr.mxu0 0.0
    %1295 = vmatpush2.msra.mxu0 0.0
    %1296 = vmatprep.subr.mxu0 0.0
    %1297 = vmatpush2.msra.mxu0 0.0
    %1298 = vmatprep.subr.mxu0 0.0
    %1299 = vmatpush2.msra.mxu0 0.0
    %1300 = vmatprep.subr.mxu0 0.0
    %1301 = vmatpush2.msra.mxu0 0.0
    %1302 = vmatprep.subr.mxu0 0.0
    %1303 = vmatpush2.msra.mxu0 0.0
    %1304 = vmatprep.mubr.f32.mxu0 0.0
    %1305 = vmatmul.mubr.f32.gmra.mxu0 %v1238
    %v1306 = vpop.f32.mrf.mxu0
    %v1307 = vadd.f32 %v1234, %v1306
    %v1308 = vpop.f32.mrf.mxu0
    %1309 = vdwg.mxu0
    %v1310 = vadd.f32 %v1307, %v636
    %1311 = vmatprep.subr.mxu0 0.0
    %1312 = vmatpush1.msra.mxu0 0.0
    %1313 = vmatprep.subr.mxu0 0.0
    %1314 = vmatpush1.msra.mxu0 0.0
    %1315 = vmatprep.subr.mxu0 0.0
    %1316 = vmatpush1.msra.mxu0 0.0
    %1317 = vmatprep.subr.mxu0 0.0
    %1318 = vmatpush1.msra.mxu0 0.0
    %1319 = vmatprep.subr.mxu0 0.0
    %1320 = vmatpush1.msra.mxu0 0.0
    %1321 = vmatprep.subr.mxu0 0.0
    %1322 = vmatpush1.msra.mxu0 0.0
    %1323 = vmatprep.subr.mxu0 0.0
    %1324 = vmatpush1.msra.mxu0 0.0
    %1325 = vmatprep.subr.mxu0 0.0
    %1326 = vmatpush1.msra.mxu0 0.0
    %1327 = vmatprep.subr.mxu0 0.0
    %1328 = vmatpush1.msra.mxu0 %v656
    %1329 = vmatprep.subr.mxu0 0.0
    %1330 = vmatpush1.msra.mxu0 %v655
    %1331 = vmatprep.subr.mxu0 0.0
    %1332 = vmatpush1.msra.mxu0 %v654
    %1333 = vmatprep.subr.mxu0 0.0
    %1334 = vmatpush1.msra.mxu0 %v653
    %1335 = vmatprep.subr.mxu0 0.0
    %1336 = vmatpush1.msra.mxu0 %v652
    %1337 = vmatprep.subr.mxu0 0.0
    %1338 = vmatpush1.msra.mxu0 %v651
    %1339 = vmatprep.subr.mxu0 0.0
    %1340 = vmatpush1.msra.mxu0 %v650
    %1341 = vmatprep.subr.mxu0 0.0
    %1342 = vmatpush1.msra.mxu0 %v649
    %1343 = vmatprep.subr.mxu0 0.0
    %1344 = vmatpush2.msra.mxu0 0.0
    %1345 = vmatprep.subr.mxu0 0.0
    %1346 = vmatpush2.msra.mxu0 0.0
    %1347 = vmatprep.subr.mxu0 0.0
    %1348 = vmatpush2.msra.mxu0 0.0
    %1349 = vmatprep.subr.mxu0 0.0
    %1350 = vmatpush2.msra.mxu0 0.0
    %1351 = vmatprep.subr.mxu0 0.0
    %1352 = vmatpush2.msra.mxu0 0.0
    %1353 = vmatprep.subr.mxu0 0.0
    %1354 = vmatpush2.msra.mxu0 0.0
    %1355 = vmatprep.subr.mxu0 0.0
    %1356 = vmatpush2.msra.mxu0 0.0
    %1357 = vmatprep.subr.mxu0 0.0
    %1358 = vmatpush2.msra.mxu0 0.0
    %1359 = vmatprep.subr.mxu0 0.0
    %1360 = vmatpush2.msra.mxu0 0.0
    %1361 = vmatprep.subr.mxu0 0.0
    %1362 = vmatpush2.msra.mxu0 0.0
    %1363 = vmatprep.subr.mxu0 0.0
    %1364 = vmatpush2.msra.mxu0 0.0
    %1365 = vmatprep.subr.mxu0 0.0
    %1366 = vmatpush2.msra.mxu0 0.0
    %1367 = vmatprep.subr.mxu0 0.0
    %1368 = vmatpush2.msra.mxu0 0.0
    %1369 = vmatprep.subr.mxu0 0.0
    %1370 = vmatpush2.msra.mxu0 0.0
    %1371 = vmatprep.subr.mxu0 0.0
    %1372 = vmatpush2.msra.mxu0 0.0
    %1373 = vmatprep.subr.mxu0 0.0
    %1374 = vmatpush2.msra.mxu0 0.0
    %1375 = vmatprep.mubr.f32.mxu0 0.0
    %1376 = vmatmul.mubr.f32.gmra.mxu0 %v1165
    %v1377 = vpop.f32.mrf.mxu0
    %v1378 = vadd.f32 0.0, %v1377
    %v1379 = vpop.f32.mrf.mxu0
    %1380 = vdwg.mxu0
    %1381 = vmatprep.subr.mxu0 0.0
    %1382 = vmatpush1.msra.mxu0 0.0
    %1383 = vmatprep.subr.mxu0 0.0
    %1384 = vmatpush1.msra.mxu0 0.0
    %1385 = vmatprep.subr.mxu0 0.0
    %1386 = vmatpush1.msra.mxu0 0.0
    %1387 = vmatprep.subr.mxu0 0.0
    %1388 = vmatpush1.msra.mxu0 0.0
    %1389 = vmatprep.subr.mxu0 0.0
    %1390 = vmatpush1.msra.mxu0 0.0
    %1391 = vmatprep.subr.mxu0 0.0
    %1392 = vmatpush1.msra.mxu0 0.0
    %1393 = vmatprep.subr.mxu0 0.0
    %1394 = vmatpush1.msra.mxu0 0.0
    %1395 = vmatprep.subr.mxu0 0.0
    %1396 = vmatpush1.msra.mxu0 0.0
    %1397 = vmatprep.subr.mxu0 0.0
    %1398 = vmatpush1.msra.mxu0 %v647
    %1399 = vmatprep.subr.mxu0 0.0
    %1400 = vmatpush1.msra.mxu0 %v646
    %1401 = vmatprep.subr.mxu0 0.0
    %1402 = vmatpush1.msra.mxu0 %v645
    %1403 = vmatprep.subr.mxu0 0.0
    %1404 = vmatpush1.msra.mxu0 %v644
    %1405 = vmatprep.subr.mxu0 0.0
    %1406 = vmatpush1.msra.mxu0 %v643
    %1407 = vmatprep.subr.mxu0 0.0
    %1408 = vmatpush1.msra.mxu0 %v642
    %1409 = vmatprep.subr.mxu0 0.0
    %1410 = vmatpush1.msra.mxu0 %v641
    %1411 = vmatprep.subr.mxu0 0.0
    %1412 = vmatpush1.msra.mxu0 %v640
    %1413 = vmatprep.subr.mxu0 0.0
    %1414 = vmatpush2.msra.mxu0 0.0
    %1415 = vmatprep.subr.mxu0 0.0
    %1416 = vmatpush2.msra.mxu0 0.0
    %1417 = vmatprep.subr.mxu0 0.0
    %1418 = vmatpush2.msra.mxu0 0.0
    %1419 = vmatprep.subr.mxu0 0.0
    %1420 = vmatpush2.msra.mxu0 0.0
    %1421 = vmatprep.subr.mxu0 0.0
    %1422 = vmatpush2.msra.mxu0 0.0
    %1423 = vmatprep.subr.mxu0 0.0
    %1424 = vmatpush2.msra.mxu0 0.0
    %1425 = vmatprep.subr.mxu0 0.0
    %1426 = vmatpush2.msra.mxu0 0.0
    %1427 = vmatprep.subr.mxu0 0.0
    %1428 = vmatpush2.msra.mxu0 0.0
    %1429 = vmatprep.subr.mxu0 0.0
    %1430 = vmatpush2.msra.mxu0 0.0
    %1431 = vmatprep.subr.mxu0 0.0
    %1432 = vmatpush2.msra.mxu0 0.0
    %1433 = vmatprep.subr.mxu0 0.0
    %1434 = vmatpush2.msra.mxu0 0.0
    %1435 = vmatprep.subr.mxu0 0.0
    %1436 = vmatpush2.msra.mxu0 0.0
    %1437 = vmatprep.subr.mxu0 0.0
    %1438 = vmatpush2.msra.mxu0 0.0
    %1439 = vmatprep.subr.mxu0 0.0
    %1440 = vmatpush2.msra.mxu0 0.0
    %1441 = vmatprep.subr.mxu0 0.0
    %1442 = vmatpush2.msra.mxu0 0.0
    %1443 = vmatprep.subr.mxu0 0.0
    %1444 = vmatpush2.msra.mxu0 0.0
    %1445 = vmatprep.mubr.f32.mxu0 0.0
    %1446 = vmatmul.mubr.f32.gmra.mxu0 %v1238
    %v1447 = vpop.f32.mrf.mxu0
    %v1448 = vadd.f32 %v1378, %v1447
    %v1449 = vpop.f32.mrf.mxu0
    %1450 = vdwg.mxu0
    %v1451 = vadd.f32 %v1448, %v803
    %1452 = vmatprep.subr.mxu0 0.0
    %1453 = vmatpush1.msra.mxu0 0.0
    %1454 = vmatprep.subr.mxu0 0.0
    %1455 = vmatpush1.msra.mxu0 0.0
    %1456 = vmatprep.subr.mxu0 0.0
    %1457 = vmatpush1.msra.mxu0 0.0
    %1458 = vmatprep.subr.mxu0 0.0
    %1459 = vmatpush1.msra.mxu0 0.0
    %1460 = vmatprep.subr.mxu0 0.0
    %1461 = vmatpush1.msra.mxu0 0.0
    %1462 = vmatprep.subr.mxu0 0.0
    %1463 = vmatpush1.msra.mxu0 0.0
    %1464 = vmatprep.subr.mxu0 0.0
    %1465 = vmatpush1.msra.mxu0 0.0
    %1466 = vmatprep.subr.mxu0 0.0
    %1467 = vmatpush1.msra.mxu0 0.0
    %1468 = vmatprep.subr.mxu0 0.0
    %1469 = vmatpush1.msra.mxu0 %v823
    %1470 = vmatprep.subr.mxu0 0.0
    %1471 = vmatpush1.msra.mxu0 %v822
    %1472 = vmatprep.subr.mxu0 0.0
    %1473 = vmatpush1.msra.mxu0 %v821
    %1474 = vmatprep.subr.mxu0 0.0
    %1475 = vmatpush1.msra.mxu0 %v820
    %1476 = vmatprep.subr.mxu0 0.0
    %1477 = vmatpush1.msra.mxu0 %v819
    %1478 = vmatprep.subr.mxu0 0.0
    %1479 = vmatpush1.msra.mxu0 %v818
    %1480 = vmatprep.subr.mxu0 0.0
    %1481 = vmatpush1.msra.mxu0 %v817
    %1482 = vmatprep.subr.mxu0 0.0
    %1483 = vmatpush1.msra.mxu0 %v816
    %1484 = vmatprep.subr.mxu0 0.0
    %1485 = vmatpush2.msra.mxu0 0.0
    %1486 = vmatprep.subr.mxu0 0.0
    %1487 = vmatpush2.msra.mxu0 0.0
    %1488 = vmatprep.subr.mxu0 0.0
    %1489 = vmatpush2.msra.mxu0 0.0
    %1490 = vmatprep.subr.mxu0 0.0
    %1491 = vmatpush2.msra.mxu0 0.0
    %1492 = vmatprep.subr.mxu0 0.0
    %1493 = vmatpush2.msra.mxu0 0.0
    %1494 = vmatprep.subr.mxu0 0.0
    %1495 = vmatpush2.msra.mxu0 0.0
    %1496 = vmatprep.subr.mxu0 0.0
    %1497 = vmatpush2.msra.mxu0 0.0
    %1498 = vmatprep.subr.mxu0 0.0
    %1499 = vmatpush2.msra.mxu0 0.0
    %1500 = vmatprep.subr.mxu0 0.0
    %1501 = vmatpush2.msra.mxu0 0.0
    %1502 = vmatprep.subr.mxu0 0.0
    %1503 = vmatpush2.msra.mxu0 0.0
    %1504 = vmatprep.subr.mxu0 0.0
    %1505 = vmatpush2.msra.mxu0 0.0
    %1506 = vmatprep.subr.mxu0 0.0
    %1507 = vmatpush2.msra.mxu0 0.0
    %1508 = vmatprep.subr.mxu0 0.0
    %1509 = vmatpush2.msra.mxu0 0.0
    %1510 = vmatprep.subr.mxu0 0.0
    %1511 = vmatpush2.msra.mxu0 0.0
    %1512 = vmatprep.subr.mxu0 0.0
    %1513 = vmatpush2.msra.mxu0 0.0
    %1514 = vmatprep.subr.mxu0 0.0
    %1515 = vmatpush2.msra.mxu0 0.0
    %1516 = vmatprep.mubr.f32.mxu0 0.0
    %1517 = vmatmul.mubr.f32.gmra.mxu0 %v1165
    %v1518 = vpop.f32.mrf.mxu0
    %v1519 = vadd.f32 0.0, %v1518
    %v1520 = vpop.f32.mrf.mxu0
    %1521 = vdwg.mxu0
    %1522 = vmatprep.subr.mxu0 0.0
    %1523 = vmatpush1.msra.mxu0 0.0
    %1524 = vmatprep.subr.mxu0 0.0
    %1525 = vmatpush1.msra.mxu0 0.0
    %1526 = vmatprep.subr.mxu0 0.0
    %1527 = vmatpush1.msra.mxu0 0.0
    %1528 = vmatprep.subr.mxu0 0.0
    %1529 = vmatpush1.msra.mxu0 0.0
    %1530 = vmatprep.subr.mxu0 0.0
    %1531 = vmatpush1.msra.mxu0 0.0
    %1532 = vmatprep.subr.mxu0 0.0
    %1533 = vmatpush1.msra.mxu0 0.0
    %1534 = vmatprep.subr.mxu0 0.0
    %1535 = vmatpush1.msra.mxu0 0.0
    %1536 = vmatprep.subr.mxu0 0.0
    %1537 = vmatpush1.msra.mxu0 0.0
    %1538 = vmatprep.subr.mxu0 0.0
    %1539 = vmatpush1.msra.mxu0 %v814
    %1540 = vmatprep.subr.mxu0 0.0
    %1541 = vmatpush1.msra.mxu0 %v813
    %1542 = vmatprep.subr.mxu0 0.0
    %1543 = vmatpush1.msra.mxu0 %v812
    %1544 = vmatprep.subr.mxu0 0.0
    %1545 = vmatpush1.msra.mxu0 %v811
    %1546 = vmatprep.subr.mxu0 0.0
    %1547 = vmatpush1.msra.mxu0 %v810
    %1548 = vmatprep.subr.mxu0 0.0
    %1549 = vmatpush1.msra.mxu0 %v809
    %1550 = vmatprep.subr.mxu0 0.0
    %1551 = vmatpush1.msra.mxu0 %v808
    %1552 = vmatprep.subr.mxu0 0.0
    %1553 = vmatpush1.msra.mxu0 %v807
    %1554 = vmatprep.subr.mxu0 0.0
    %1555 = vmatpush2.msra.mxu0 0.0
    %1556 = vmatprep.subr.mxu0 0.0
    %1557 = vmatpush2.msra.mxu0 0.0
    %1558 = vmatprep.subr.mxu0 0.0
    %1559 = vmatpush2.msra.mxu0 0.0
    %1560 = vmatprep.subr.mxu0 0.0
    %1561 = vmatpush2.msra.mxu0 0.0
    %1562 = vmatprep.subr.mxu0 0.0
    %1563 = vmatpush2.msra.mxu0 0.0
    %1564 = vmatprep.subr.mxu0 0.0
    %1565 = vmatpush2.msra.mxu0 0.0
    %1566 = vmatprep.subr.mxu0 0.0
    %1567 = vmatpush2.msra.mxu0 0.0
    %1568 = vmatprep.subr.mxu0 0.0
    %1569 = vmatpush2.msra.mxu0 0.0
    %1570 = vmatprep.subr.mxu0 0.0
    %1571 = vmatpush2.msra.mxu0 0.0
    %1572 = vmatprep.subr.mxu0 0.0
    %1573 = vmatpush2.msra.mxu0 0.0
    %1574 = vmatprep.subr.mxu0 0.0
    %1575 = vmatpush2.msra.mxu0 0.0
    %1576 = vmatprep.subr.mxu0 0.0
    %1577 = vmatpush2.msra.mxu0 0.0
    %1578 = vmatprep.subr.mxu0 0.0
    %1579 = vmatpush2.msra.mxu0 0.0
    %1580 = vmatprep.subr.mxu0 0.0
    %1581 = vmatpush2.msra.mxu0 0.0
    %1582 = vmatprep.subr.mxu0 0.0
    %1583 = vmatpush2.msra.mxu0 0.0
    %1584 = vmatprep.subr.mxu0 0.0
    %1585 = vmatpush2.msra.mxu0 0.0
    %1586 = vmatprep.mubr.f32.mxu0 0.0
    %1587 = vmatmul.mubr.f32.gmra.mxu0 %v1238
    %v1588 = vpop.f32.mrf.mxu0
    %v1589 = vadd.f32 %v1519, %v1588
    %v1590 = vpop.f32.mrf.mxu0
    %1591 = vdwg.mxu0
    %v1592 = vadd.f32 %v1589, %v970
    %1593 = vmatprep.subr.mxu0 0.0
    %1594 = vmatpush1.msra.mxu0 0.0
    %1595 = vmatprep.subr.mxu0 0.0
    %1596 = vmatpush1.msra.mxu0 0.0
    %1597 = vmatprep.subr.mxu0 0.0
    %1598 = vmatpush1.msra.mxu0 0.0
    %1599 = vmatprep.subr.mxu0 0.0
    %1600 = vmatpush1.msra.mxu0 0.0
    %1601 = vmatprep.subr.mxu0 0.0
    %1602 = vmatpush1.msra.mxu0 0.0
    %1603 = vmatprep.subr.mxu0 0.0
    %1604 = vmatpush1.msra.mxu0 0.0
    %1605 = vmatprep.subr.mxu0 0.0
    %1606 = vmatpush1.msra.mxu0 0.0
    %1607 = vmatprep.subr.mxu0 0.0
    %1608 = vmatpush1.msra.mxu0 0.0
    %1609 = vmatprep.subr.mxu0 0.0
    %1610 = vmatpush1.msra.mxu0 %v990
    %1611 = vmatprep.subr.mxu0 0.0
    %1612 = vmatpush1.msra.mxu0 %v989
    %1613 = vmatprep.subr.mxu0 0.0
    %1614 = vmatpush1.msra.mxu0 %v988
    %1615 = vmatprep.subr.mxu0 0.0
    %1616 = vmatpush1.msra.mxu0 %v987
    %1617 = vmatprep.subr.mxu0 0.0
    %1618 = vmatpush1.msra.mxu0 %v986
    %1619 = vmatprep.subr.mxu0 0.0
    %1620 = vmatpush1.msra.mxu0 %v985
    %1621 = vmatprep.subr.mxu0 0.0
    %1622 = vmatpush1.msra.mxu0 %v984
    %1623 = vmatprep.subr.mxu0 0.0
    %1624 = vmatpush1.msra.mxu0 %v983
    %1625 = vmatprep.subr.mxu0 0.0
    %1626 = vmatpush2.msra.mxu0 0.0
    %1627 = vmatprep.subr.mxu0 0.0
    %1628 = vmatpush2.msra.mxu0 0.0
    %1629 = vmatprep.subr.mxu0 0.0
    %1630 = vmatpush2.msra.mxu0 0.0
    %1631 = vmatprep.subr.mxu0 0.0
    %1632 = vmatpush2.msra.mxu0 0.0
    %1633 = vmatprep.subr.mxu0 0.0
    %1634 = vmatpush2.msra.mxu0 0.0
    %1635 = vmatprep.subr.mxu0 0.0
    %1636 = vmatpush2.msra.mxu0 0.0
    %1637 = vmatprep.subr.mxu0 0.0
    %1638 = vmatpush2.msra.mxu0 0.0
    %1639 = vmatprep.subr.mxu0 0.0
    %1640 = vmatpush2.msra.mxu0 0.0
    %1641 = vmatprep.subr.mxu0 0.0
    %1642 = vmatpush2.msra.mxu0 0.0
    %1643 = vmatprep.subr.mxu0 0.0
    %1644 = vmatpush2.msra.mxu0 0.0
    %1645 = vmatprep.subr.mxu0 0.0
    %1646 = vmatpush2.msra.mxu0 0.0
    %1647 = vmatprep.subr.mxu0 0.0
    %1648 = vmatpush2.msra.mxu0 0.0
    %1649 = vmatprep.subr.mxu0 0.0
    %1650 = vmatpush2.msra.mxu0 0.0
    %1651 = vmatprep.subr.mxu0 0.0
    %1652 = vmatpush2.msra.mxu0 0.0
    %1653 = vmatprep.subr.mxu0 0.0
    %1654 = vmatpush2.msra.mxu0 0.0
    %1655 = vmatprep.subr.mxu0 0.0
    %1656 = vmatpush2.msra.mxu0 0.0
    %1657 = vmatprep.mubr.f32.mxu0 0.0
    %1658 = vmatmul.mubr.f32.gmra.mxu0 %v1165
    %v1659 = vpop.f32.mrf.mxu0
    %v1660 = vadd.f32 0.0, %v1659
    %v1661 = vpop.f32.mrf.mxu0
    %1662 = vdwg.mxu0
    %1663 = vmatprep.subr.mxu0 0.0
    %1664 = vmatpush1.msra.mxu0 0.0
    %1665 = vmatprep.subr.mxu0 0.0
    %1666 = vmatpush1.msra.mxu0 0.0
    %1667 = vmatprep.subr.mxu0 0.0
    %1668 = vmatpush1.msra.mxu0 0.0
    %1669 = vmatprep.subr.mxu0 0.0
    %1670 = vmatpush1.msra.mxu0 0.0
    %1671 = vmatprep.subr.mxu0 0.0
    %1672 = vmatpush1.msra.mxu0 0.0
    %1673 = vmatprep.subr.mxu0 0.0
    %1674 = vmatpush1.msra.mxu0 0.0
    %1675 = vmatprep.subr.mxu0 0.0
    %1676 = vmatpush1.msra.mxu0 0.0
    %1677 = vmatprep.subr.mxu0 0.0
    %1678 = vmatpush1.msra.mxu0 0.0
    %1679 = vmatprep.subr.mxu0 0.0
    %1680 = vmatpush1.msra.mxu0 %v981
    %1681 = vmatprep.subr.mxu0 0.0
    %1682 = vmatpush1.msra.mxu0 %v980
    %1683 = vmatprep.subr.mxu0 0.0
    %1684 = vmatpush1.msra.mxu0 %v979
    %1685 = vmatprep.subr.mxu0 0.0
    %1686 = vmatpush1.msra.mxu0 %v978
    %1687 = vmatprep.subr.mxu0 0.0
    %1688 = vmatpush1.msra.mxu0 %v977
    %1689 = vmatprep.subr.mxu0 0.0
    %1690 = vmatpush1.msra.mxu0 %v976
    %1691 = vmatprep.subr.mxu0 0.0
    %1692 = vmatpush1.msra.mxu0 %v975
    %1693 = vmatprep.subr.mxu0 0.0
    %1694 = vmatpush1.msra.mxu0 %v974
    %1695 = vmatprep.subr.mxu0 0.0
    %1696 = vmatpush2.msra.mxu0 0.0
    %1697 = vmatprep.subr.mxu0 0.0
    %1698 = vmatpush2.msra.mxu0 0.0
    %1699 = vmatprep.subr.mxu0 0.0
    %1700 = vmatpush2.msra.mxu0 0.0
    %1701 = vmatprep.subr.mxu0 0.0
    %1702 = vmatpush2.msra.mxu0 0.0
    %1703 = vmatprep.subr.mxu0 0.0
    %1704 = vmatpush2.msra.mxu0 0.0
    %1705 = vmatprep.subr.mxu0 0.0
    %1706 = vmatpush2.msra.mxu0 0.0
    %1707 = vmatprep.subr.mxu0 0.0
    %1708 = vmatpush2.msra.mxu0 0.0
    %1709 = vmatprep.subr.mxu0 0.0
    %1710 = vmatpush2.msra.mxu0 0.0
    %1711 = vmatprep.subr.mxu0 0.0
    %1712 = vmatpush2.msra.mxu0 0.0
    %1713 = vmatprep.subr.mxu0 0.0
    %1714 = vmatpush2.msra.mxu0 0.0
    %1715 = vmatprep.subr.mxu0 0.0
    %1716 = vmatpush2.msra.mxu0 0.0
    %1717 = vmatprep.subr.mxu0 0.0
    %1718 = vmatpush2.msra.mxu0 0.0
    %1719 = vmatprep.subr.mxu0 0.0
    %1720 = vmatpush2.msra.mxu0 0.0
    %1721 = vmatprep.subr.mxu0 0.0
    %1722 = vmatpush2.msra.mxu0 0.0
    %1723 = vmatprep.subr.mxu0 0.0
    %1724 = vmatpush2.msra.mxu0 0.0
    %1725 = vmatprep.subr.mxu0 0.0
    %1726 = vmatpush2.msra.mxu0 0.0
    %1727 = vmatprep.mubr.f32.mxu0 0.0
    %1728 = vmatmul.mubr.f32.gmra.mxu0 %v1238
    %v1729 = vpop.f32.mrf.mxu0
    %v1730 = vadd.f32 %v1660, %v1729
    %v1731 = vpop.f32.mrf.mxu0
    %1732 = vdwg.mxu0
    %v1733 = vadd.f32 %v1730, %v1137
    %v1734 = vxor.u32 %v1310, 2147483648
    %v1735 = vmul.f32 %v1734, 1.442695
    %v1736 = vpow.pop %v1735
    %v1737 = vadd.f32 %v1736, 1.0
    %v1738 = vrcp.pop %v1737
    %v1739 = vmul.f32 1.0, %v1738
    %v1740 = vxor.u32 %v1451, 2147483648
    %v1741 = vmul.f32 %v1740, 1.442695
    %v1742 = vpow.pop %v1741
    %v1743 = vadd.f32 %v1742, 1.0
    %v1744 = vrcp.pop %v1743
    %v1745 = vmul.f32 1.0, %v1744
    %v1746 = vxor.u32 %v1592, 2147483648
    %v1747 = vmul.f32 %v1746, 1.442695
    %v1748 = vpow.pop %v1747
    %v1749 = vadd.f32 %v1748, 1.0
    %v1750 = vrcp.pop %v1749
    %v1751 = vmul.f32 1.0, %v1750
    %v1752 = vtanh.pop %v1733
    %v1753 = vmul.f32 %v1745, %v1161
    %v1754 = vmul.f32 %v1739, %v1752
    %v1755 = vadd.f32 %v1753, %v1754
    %v1756 = vtanh.pop %v1755
    %v1757 = vmul.f32 %v1751, %v1756
    %v1758 = vadd.f32 %v1163, %v1757
    %v1759 = vmul.f32 %v1758, 0.5
    %v1760 = vld [vmem:[%s3] sm:$0xff]
    %v1761 = vld [vmem:[#allocation4] sm:$0x1]
    %v1762 = vld [vmem:[#allocation6] sm:$0x1]
    %vm1763 = vcmask 31744
    %v1764 = vsel %vm1763, %v1760, 0.0
    %1765 = vadd.xlane.f32.xlu0 %v1764
    %v1766 = vpop.xlane.xlu0 %1765
    %v1767 = vrcp.pop 4.0
    %v1768 = vmul.f32 %v1766, %v1767
    %v1769 = vsub.f32 %v1760, %v1768
    %v1770 = vmul.f32 %v1769, %v1769
    %v1771 = vsel %vm1763, %v1770, 0.0
    %1772 = vadd.xlane.f32.xlu0 %v1771
    %v1773 = vpop.xlane.xlu0 %1772
    %v1774 = vmul.f32 %v1773, %v1767
    %v1775 = vadd.f32 %v1774, 1e-05
    %v1776 = vrsqrt.pop %v1775
    %v1777 = vmul.f32 %v1769, %v1776
    %v1779 = vlaneseq
    %v1780 = vshrl.u32 %v1779, 7
    %v1781 = vsub.s32 0, %v1780
    %v1782 = vrot.slane %v1761, %v1781
    %v1784 = vmul.f32 %v1777, %v1782
    %v1786 = vlaneseq
    %v1787 = vshrl.u32 %v1786, 7
    %v1788 = vsub.s32 0, %v1787
    %v1789 = vrot.slane %v1762, %v1788
    %v1791 = vadd.f32 %v1784, %v1789
    %v1792 = vld [vmem:[#allocation7] sm:$0xf]
    %v1793 = vld [vmem:[#allocation9] sm:$0x1]
    %v1795 = vlaneseq
    %v1796 = vshrl.u32 %v1795, 7
    %v1797 = vsub.s32 0, %v1796
    %v1798 = vrot.slane %v1793, %v1797
    %v1801 = vsel %vm1763, %v1791, 0
    %vm1803 = vcmask 1043456
    %v1805 = vsel %vm1803, %v1792, 0
    %1807 = vmatprep.subr.mxu0 0.0
    %1808 = vmatpush1.msra.mxu0 0.0
    %1809 = vmatprep.subr.mxu0 0.0
    %1810 = vmatpush1.msra.mxu0 0.0
    %1811 = vmatprep.subr.mxu0 0.0
    %1812 = vmatpush1.msra.mxu0 0.0
    %1813 = vmatprep.subr.mxu0 0.0
    %1814 = vmatpush1.msra.mxu0 0.0
    %1815 = vmatprep.subr.mxu0 0.0
    %1816 = vmatpush1.msra.mxu0 0.0
    %1817 = vmatprep.subr.mxu0 0.0
    %1818 = vmatpush1.msra.mxu0 0.0
    %1819 = vmatprep.subr.mxu0 0.0
    %1820 = vmatpush1.msra.mxu0 0.0
    %1821 = vmatprep.subr.mxu0 0.0
    %1822 = vmatpush1.msra.mxu0 0.0
    %1823 = vmatprep.subr.mxu0 0.0
    %1824 = vmatpush1.msra.mxu0 0.0
    %1825 = vmatprep.subr.mxu0 0.0
    %1826 = vmatpush1.msra.mxu0 0.0
    %1827 = vmatprep.subr.mxu0 0.0
    %1828 = vmatpush1.msra.mxu0 0.0
    %1829 = vmatprep.subr.mxu0 0.0
    %1830 = vmatpush1.msra.mxu0 0.0
    %1831 = vmatprep.subr.mxu0 0.0
    %1832 = vmatpush1.msra.mxu0 0.0
    %1833 = vmatprep.subr.mxu0 0.0
    %1834 = vmatpush1.msra.mxu0 0.0
    %1835 = vmatprep.subr.mxu0 0.0
    %1836 = vmatpush1.msra.mxu0 0.0
    %1837 = vmatprep.subr.mxu0 0.0
    %1838 = vmatpush1.msra.mxu0 %v1805
    %1839 = vmatprep.subr.mxu0 0.0
    %1840 = vmatpush2.msra.mxu0 0.0
    %1841 = vmatprep.subr.mxu0 0.0
    %1842 = vmatpush2.msra.mxu0 0.0
    %1843 = vmatprep.subr.mxu0 0.0
    %1844 = vmatpush2.msra.mxu0 0.0
    %1845 = vmatprep.subr.mxu0 0.0
    %1846 = vmatpush2.msra.mxu0 0.0
    %1847 = vmatprep.subr.mxu0 0.0
    %1848 = vmatpush2.msra.mxu0 0.0
    %1849 = vmatprep.subr.mxu0 0.0
    %1850 = vmatpush2.msra.mxu0 0.0
    %1851 = vmatprep.subr.mxu0 0.0
    %1852 = vmatpush2.msra.mxu0 0.0
    %1853 = vmatprep.subr.mxu0 0.0
    %1854 = vmatpush2.msra.mxu0 0.0
    %1855 = vmatprep.subr.mxu0 0.0
    %1856 = vmatpush2.msra.mxu0 0.0
    %1857 = vmatprep.subr.mxu0 0.0
    %1858 = vmatpush2.msra.mxu0 0.0
    %1859 = vmatprep.subr.mxu0 0.0
    %1860 = vmatpush2.msra.mxu0 0.0
    %1861 = vmatprep.subr.mxu0 0.0
    %1862 = vmatpush2.msra.mxu0 0.0
    %1863 = vmatprep.subr.mxu0 0.0
    %1864 = vmatpush2.msra.mxu0 0.0
    %1865 = vmatprep.subr.mxu0 0.0
    %1866 = vmatpush2.msra.mxu0 0.0
    %1867 = vmatprep.subr.mxu0 0.0
    %1868 = vmatpush2.msra.mxu0 0.0
    %1869 = vmatprep.subr.mxu0 0.0
    %1870 = vmatpush2.msra.mxu0 0.0
    %1871 = vmatprep.mubr.f32.mxu0 0.0
    %1872 = vmatmul.mubr.f32.gmra.mxu0 %v1801
    %v1873 = vpop.f32.mrf.mxu0
    %v1874 = vadd.f32 %v1798, %v1873
    %v1875 = vpop.f32.mrf.mxu0
    %1876 = vdwg.mxu0
    %v1877 = vmax.f32 %v1874, 0.0
    %v1878 = vld [vmem:[#allocation10] sm:$0x1]
    %v1879 = vld [vmem:[#allocation12] sm:$0x1]
    %vm1880 = vcmask 261120
    %v1881 = vsel %vm1880, %v1877, 0.0
    %1882 = vadd.xlane.f32.xlu0 %v1881
    %v1883 = vpop.xlane.xlu0 %1882
    %v1884 = vrcp.pop 32.0
    %v1885 = vmul.f32 %v1883, %v1884
    %v1886 = vsub.f32 %v1877, %v1885
    %v1887 = vmul.f32 %v1886, %v1886
    %v1888 = vsel %vm1880, %v1887, 0.0
    %1889 = vadd.xlane.f32.xlu0 %v1888
    %v1890 = vpop.xlane.xlu0 %1889
    %v1891 = vmul.f32 %v1890, %v1884
    %v1892 = vadd.f32 %v1891, 1e-05
    %v1893 = vrsqrt.pop %v1892
    %v1894 = vmul.f32 %v1886, %v1893
    %v1896 = vlaneseq
    %v1897 = vshrl.u32 %v1896, 7
    %v1898 = vsub.s32 0, %v1897
    %v1899 = vrot.slane %v1878, %v1898
    %v1901 = vmul.f32 %v1894, %v1899
    %v1903 = vlaneseq
    %v1904 = vshrl.u32 %v1903, 7
    %v1905 = vsub.s32 0, %v1904
    %v1906 = vrot.slane %v1879, %v1905
    %v1908 = vadd.f32 %v1901, %v1906
    %v1909 = vld [vmem:[#allocation13] sm:$0xff]
    %v1910 = vld [vmem:[#allocation13 + $0x8] sm:$0xff]
    %v1911 = vld [vmem:[#allocation13 + $0x10] sm:$0xff]
    %v1912 = vld [vmem:[#allocation13 + $0x18] sm:$0xff]
    %v1913 = vld [vmem:[#allocation15] sm:$0x1]
    %v1915 = vlaneseq
    %v1916 = vshrl.u32 %v1915, 7
    %v1917 = vsub.s32 0, %v1916
    %v1918 = vrot.slane %v1913, %v1917
    %v1921 = vsel %vm1880, %v1908, 0
    %1923 = vmatprep.subr.mxu0 0.0
    %1924 = vmatpush1.msra.mxu0 0.0
    %1925 = vmatprep.subr.mxu0 0.0
    %1926 = vmatpush1.msra.mxu0 0.0
    %1927 = vmatprep.subr.mxu0 0.0
    %1928 = vmatpush1.msra.mxu0 0.0
    %1929 = vmatprep.subr.mxu0 0.0
    %1930 = vmatpush1.msra.mxu0 0.0
    %1931 = vmatprep.subr.mxu0 0.0
    %1932 = vmatpush1.msra.mxu0 0.0
    %1933 = vmatprep.subr.mxu0 0.0
    %1934 = vmatpush1.msra.mxu0 0.0
    %1935 = vmatprep.subr.mxu0 0.0
    %1936 = vmatpush1.msra.mxu0 0.0
    %1937 = vmatprep.subr.mxu0 0.0
    %1938 = vmatpush1.msra.mxu0 0.0
    %1939 = vmatprep.subr.mxu0 0.0
    %1940 = vmatpush1.msra.mxu0 0.0
    %1941 = vmatprep.subr.mxu0 0.0
    %1942 = vmatpush1.msra.mxu0 0.0
    %1943 = vmatprep.subr.mxu0 0.0
    %1944 = vmatpush1.msra.mxu0 0.0
    %1945 = vmatprep.subr.mxu0 0.0
    %1946 = vmatpush1.msra.mxu0 0.0
    %1947 = vmatprep.subr.mxu0 0.0
    %1948 = vmatpush1.msra.mxu0 %v1912
    %1949 = vmatprep.subr.mxu0 0.0
    %1950 = vmatpush1.msra.mxu0 %v1911
    %1951 = vmatprep.subr.mxu0 0.0
    %1952 = vmatpush1.msra.mxu0 %v1910
    %1953 = vmatprep.subr.mxu0 0.0
    %1954 = vmatpush1.msra.mxu0 %v1909
    %1955 = vmatprep.subr.mxu0 0.0
    %1956 = vmatpush2.msra.mxu0 0.0
    %1957 = vmatprep.subr.mxu0 0.0
    %1958 = vmatpush2.msra.mxu0 0.0
    %1959 = vmatprep.subr.mxu0 0.0
    %1960 = vmatpush2.msra.mxu0 0.0
    %1961 = vmatprep.subr.mxu0 0.0
    %1962 = vmatpush2.msra.mxu0 0.0
    %1963 = vmatprep.subr.mxu0 0.0
    %1964 = vmatpush2.msra.mxu0 0.0
    %1965 = vmatprep.subr.mxu0 0.0
    %1966 = vmatpush2.msra.mxu0 0.0
    %1967 = vmatprep.subr.mxu0 0.0
    %1968 = vmatpush2.msra.mxu0 0.0
    %1969 = vmatprep.subr.mxu0 0.0
    %1970 = vmatpush2.msra.mxu0 0.0
    %1971 = vmatprep.subr.mxu0 0.0
    %1972 = vmatpush2.msra.mxu0 0.0
    %1973 = vmatprep.subr.mxu0 0.0
    %1974 = vmatpush2.msra.mxu0 0.0
    %1975 = vmatprep.subr.mxu0 0.0
    %1976 = vmatpush2.msra.mxu0 0.0
    %1977 = vmatprep.subr.mxu0 0.0
    %1978 = vmatpush2.msra.mxu0 0.0
    %1979 = vmatprep.subr.mxu0 0.0
    %1980 = vmatpush2.msra.mxu0 0.0
    %1981 = vmatprep.subr.mxu0 0.0
    %1982 = vmatpush2.msra.mxu0 0.0
    %1983 = vmatprep.subr.mxu0 0.0
    %1984 = vmatpush2.msra.mxu0 0.0
    %1985 = vmatprep.subr.mxu0 0.0
    %1986 = vmatpush2.msra.mxu0 0.0
    %1987 = vmatprep.mubr.f32.mxu0 0.0
    %1988 = vmatmul.mubr.f32.gmra.mxu0 %v1921
    %v1989 = vpop.f32.mrf.mxu0
    %v1990 = vadd.f32 %v1918, %v1989
    %v1991 = vpop.f32.mrf.mxu0
    %1992 = vdwg.mxu0
    %v1993 = vmax.f32 %v1990, 0.0
    %v1994 = vld [vmem:[#allocation16] sm:$0x1]
    %v1995 = vld [vmem:[#allocation18] sm:$0x1]
    %v1996 = vsel %vm1880, %v1993, 0.0
    %1997 = vadd.xlane.f32.xlu0 %v1996
    %v1998 = vpop.xlane.xlu0 %1997
    %v1999 = vmul.f32 %v1998, %v1884
    %v2000 = vsub.f32 %v1993, %v1999
    %v2001 = vmul.f32 %v2000, %v2000
    %v2002 = vsel %vm1880, %v2001, 0.0
    %2003 = vadd.xlane.f32.xlu0 %v2002
    %v2004 = vpop.xlane.xlu0 %2003
    %v2005 = vmul.f32 %v2004, %v1884
    %v2006 = vadd.f32 %v2005, 1e-05
    %v2007 = vrsqrt.pop %v2006
    %v2008 = vmul.f32 %v2000, %v2007
    %v2010 = vlaneseq
    %v2011 = vshrl.u32 %v2010, 7
    %v2012 = vsub.s32 0, %v2011
    %v2013 = vrot.slane %v1994, %v2012
    %v2015 = vmul.f32 %v2008, %v2013
    %v2017 = vlaneseq
    %v2018 = vshrl.u32 %v2017, 7
    %v2019 = vsub.s32 0, %v2018
    %v2020 = vrot.slane %v1995, %v2019
    %v2022 = vadd.f32 %v2015, %v2020
    %v2023 = vld [vmem:[%s5] sm:$0xff]
    %v2024 = vld [vmem:[#allocation19] sm:$0x1]
    %v2025 = vld [vmem:[#allocation21] sm:$0x1]
    %vm2026 = vcmask 64512
    %v2027 = vsel %vm2026, %v2023, 0.0
    %2028 = vadd.xlane.f32.xlu0 %v2027
    %v2029 = vpop.xlane.xlu0 %2028
    %v2030 = vrcp.pop 8.0
    %v2031 = vmul.f32 %v2029, %v2030
    %v2032 = vsub.f32 %v2023, %v2031
    %v2033 = vmul.f32 %v2032, %v2032
    %v2034 = vsel %vm2026, %v2033, 0.0
    %2035 = vadd.xlane.f32.xlu0 %v2034
    %v2036 = vpop.xlane.xlu0 %2035
    %v2037 = vmul.f32 %v2036, %v2030
    %v2038 = vadd.f32 %v2037, 1e-05
    %v2039 = vrsqrt.pop %v2038
    %v2040 = vmul.f32 %v2032, %v2039
    %v2042 = vlaneseq
    %v2043 = vshrl.u32 %v2042, 7
    %v2044 = vsub.s32 0, %v2043
    %v2045 = vrot.slane %v2024, %v2044
    %v2047 = vmul.f32 %v2040, %v2045
    %v2049 = vlaneseq
    %v2050 = vshrl.u32 %v2049, 7
    %v2051 = vsub.s32 0, %v2050
    %v2052 = vrot.slane %v2025, %v2051
    %v2054 = vadd.f32 %v2047, %v2052
    %v2055 = vld [vmem:[#allocation22] sm:$0xff]
    %v2056 = vld [vmem:[#allocation24] sm:$0x1]
    %v2058 = vlaneseq
    %v2059 = vshrl.u32 %v2058, 7
    %v2060 = vsub.s32 0, %v2059
    %v2061 = vrot.slane %v2056, %v2060
    %v2064 = vsel %vm2026, %v2054, 0
    %2066 = vmatprep.subr.mxu0 0.0
    %2067 = vmatpush1.msra.mxu0 0.0
    %2068 = vmatprep.subr.mxu0 0.0
    %2069 = vmatpush1.msra.mxu0 0.0
    %2070 = vmatprep.subr.mxu0 0.0
    %2071 = vmatpush1.msra.mxu0 0.0
    %2072 = vmatprep.subr.mxu0 0.0
    %2073 = vmatpush1.msra.mxu0 0.0
    %2074 = vmatprep.subr.mxu0 0.0
    %2075 = vmatpush1.msra.mxu0 0.0
    %2076 = vmatprep.subr.mxu0 0.0
    %2077 = vmatpush1.msra.mxu0 0.0
    %2078 = vmatprep.subr.mxu0 0.0
    %2079 = vmatpush1.msra.mxu0 0.0
    %2080 = vmatprep.subr.mxu0 0.0
    %2081 = vmatpush1.msra.mxu0 0.0
    %2082 = vmatprep.subr.mxu0 0.0
    %2083 = vmatpush1.msra.mxu0 0.0
    %2084 = vmatprep.subr.mxu0 0.0
    %2085 = vmatpush1.msra.mxu0 0.0
    %2086 = vmatprep.subr.mxu0 0.0
    %2087 = vmatpush1.msra.mxu0 0.0
    %2088 = vmatprep.subr.mxu0 0.0
    %2089 = vmatpush1.msra.mxu0 0.0
    %2090 = vmatprep.subr.mxu0 0.0
    %2091 = vmatpush1.msra.mxu0 0.0
    %2092 = vmatprep.subr.mxu0 0.0
    %2093 = vmatpush1.msra.mxu0 0.0
    %2094 = vmatprep.subr.mxu0 0.0
    %2095 = vmatpush1.msra.mxu0 0.0
    %2096 = vmatprep.subr.mxu0 0.0
    %2097 = vmatpush1.msra.mxu0 %v2055
    %2098 = vmatprep.subr.mxu0 0.0
    %2099 = vmatpush2.msra.mxu0 0.0
    %2100 = vmatprep.subr.mxu0 0.0
    %2101 = vmatpush2.msra.mxu0 0.0
    %2102 = vmatprep.subr.mxu0 0.0
    %2103 = vmatpush2.msra.mxu0 0.0
    %2104 = vmatprep.subr.mxu0 0.0
    %2105 = vmatpush2.msra.mxu0 0.0
    %2106 = vmatprep.subr.mxu0 0.0
    %2107 = vmatpush2.msra.mxu0 0.0
    %2108 = vmatprep.subr.mxu0 0.0
    %2109 = vmatpush2.msra.mxu0 0.0
    %2110 = vmatprep.subr.mxu0 0.0
    %2111 = vmatpush2.msra.mxu0 0.0
    %2112 = vmatprep.subr.mxu0 0.0
    %2113 = vmatpush2.msra.mxu0 0.0
    %2114 = vmatprep.subr.mxu0 0.0
    %2115 = vmatpush2.msra.mxu0 0.0
    %2116 = vmatprep.subr.mxu0 0.0
    %2117 = vmatpush2.msra.mxu0 0.0
    %2118 = vmatprep.subr.mxu0 0.0
    %2119 = vmatpush2.msra.mxu0 0.0
    %2120 = vmatprep.subr.mxu0 0.0
    %2121 = vmatpush2.msra.mxu0 0.0
    %2122 = vmatprep.subr.mxu0 0.0
    %2123 = vmatpush2.msra.mxu0 0.0
    %2124 = vmatprep.subr.mxu0 0.0
    %2125 = vmatpush2.msra.mxu0 0.0
    %2126 = vmatprep.subr.mxu0 0.0
    %2127 = vmatpush2.msra.mxu0 0.0
    %2128 = vmatprep.subr.mxu0 0.0
    %2129 = vmatpush2.msra.mxu0 0.0
    %2130 = vmatprep.mubr.f32.mxu0 0.0
    %2131 = vmatmul.mubr.f32.gmra.mxu0 %v2064
    %v2132 = vpop.f32.mrf.mxu0
    %v2133 = vadd.f32 %v2061, %v2132
    %v2134 = vpop.f32.mrf.mxu0
    %2135 = vdwg.mxu0
    %v2136 = vmax.f32 %v2133, 0.0
    %v2137 = vld [vmem:[#allocation25] sm:$0x1]
    %v2138 = vld [vmem:[#allocation27] sm:$0x1]
    %v2139 = vsel %vm1880, %v2136, 0.0
    %2140 = vadd.xlane.f32.xlu0 %v2139
    %v2141 = vpop.xlane.xlu0 %2140
    %v2142 = vmul.f32 %v2141, %v1884
    %v2143 = vsub.f32 %v2136, %v2142
    %v2144 = vmul.f32 %v2143, %v2143
    %v2145 = vsel %vm1880, %v2144, 0.0
    %2146 = vadd.xlane.f32.xlu0 %v2145
    %v2147 = vpop.xlane.xlu0 %2146
    %v2148 = vmul.f32 %v2147, %v1884
    %v2149 = vadd.f32 %v2148, 1e-05
    %v2150 = vrsqrt.pop %v2149
    %v2151 = vmul.f32 %v2143, %v2150
    %v2153 = vlaneseq
    %v2154 = vshrl.u32 %v2153, 7
    %v2155 = vsub.s32 0, %v2154
    %v2156 = vrot.slane %v2137, %v2155
    %v2158 = vmul.f32 %v2151, %v2156
    %v2160 = vlaneseq
    %v2161 = vshrl.u32 %v2160, 7
    %v2162 = vsub.s32 0, %v2161
    %v2163 = vrot.slane %v2138, %v2162
    %v2165 = vadd.f32 %v2158, %v2163
    %v2166 = vld [vmem:[%s49] sm:$0xff]
    %v2167 = vld [vmem:[%s49 + $0x8] sm:$0xff]
    %v2168 = vld [vmem:[%s49 + $0x10] sm:$0xff]
    %v2169 = vld [vmem:[%s49 + $0x18] sm:$0xff]
    %v2170 = vld [vmem:[#allocation28] sm:$0x1]
    %v2172 = vlaneseq
    %v2173 = vshrl.u32 %v2172, 7
    %v2174 = vsub.s32 0, %v2173
    %v2175 = vrot.slane %v2170, %v2174
    %v2178 = vsel %vm1880, %v2165, 0
    %2180 = vmatprep.subr.mxu0 0.0
    %2181 = vmatpush1.msra.mxu0 0.0
    %2182 = vmatprep.subr.mxu0 0.0
    %2183 = vmatpush1.msra.mxu0 0.0
    %2184 = vmatprep.subr.mxu0 0.0
    %2185 = vmatpush1.msra.mxu0 0.0
    %2186 = vmatprep.subr.mxu0 0.0
    %2187 = vmatpush1.msra.mxu0 0.0
    %2188 = vmatprep.subr.mxu0 0.0
    %2189 = vmatpush1.msra.mxu0 0.0
    %2190 = vmatprep.subr.mxu0 0.0
    %2191 = vmatpush1.msra.mxu0 0.0
    %2192 = vmatprep.subr.mxu0 0.0
    %2193 = vmatpush1.msra.mxu0 0.0
    %2194 = vmatprep.subr.mxu0 0.0
    %2195 = vmatpush1.msra.mxu0 0.0
    %2196 = vmatprep.subr.mxu0 0.0
    %2197 = vmatpush1.msra.mxu0 0.0
    %2198 = vmatprep.subr.mxu0 0.0
    %2199 = vmatpush1.msra.mxu0 0.0
    %2200 = vmatprep.subr.mxu0 0.0
    %2201 = vmatpush1.msra.mxu0 0.0
    %2202 = vmatprep.subr.mxu0 0.0
    %2203 = vmatpush1.msra.mxu0 0.0
    %2204 = vmatprep.subr.mxu0 0.0
    %2205 = vmatpush1.msra.mxu0 %v2169
    %2206 = vmatprep.subr.mxu0 0.0
    %2207 = vmatpush1.msra.mxu0 %v2168
    %2208 = vmatprep.subr.mxu0 0.0
    %2209 = vmatpush1.msra.mxu0 %v2167
    %2210 = vmatprep.subr.mxu0 0.0
    %2211 = vmatpush1.msra.mxu0 %v2166
    %2212 = vmatprep.subr.mxu0 0.0
    %2213 = vmatpush2.msra.mxu0 0.0
    %2214 = vmatprep.subr.mxu0 0.0
    %2215 = vmatpush2.msra.mxu0 0.0
    %2216 = vmatprep.subr.mxu0 0.0
    %2217 = vmatpush2.msra.mxu0 0.0
    %2218 = vmatprep.subr.mxu0 0.0
    %2219 = vmatpush2.msra.mxu0 0.0
    %2220 = vmatprep.subr.mxu0 0.0
    %2221 = vmatpush2.msra.mxu0 0.0
    %2222 = vmatprep.subr.mxu0 0.0
    %2223 = vmatpush2.msra.mxu0 0.0
    %2224 = vmatprep.subr.mxu0 0.0
    %2225 = vmatpush2.msra.mxu0 0.0
    %2226 = vmatprep.subr.mxu0 0.0
    %2227 = vmatpush2.msra.mxu0 0.0
    %2228 = vmatprep.subr.mxu0 0.0
    %2229 = vmatpush2.msra.mxu0 0.0
    %2230 = vmatprep.subr.mxu0 0.0
    %2231 = vmatpush2.msra.mxu0 0.0
    %2232 = vmatprep.subr.mxu0 0.0
    %2233 = vmatpush2.msra.mxu0 0.0
    %2234 = vmatprep.subr.mxu0 0.0
    %2235 = vmatpush2.msra.mxu0 0.0
    %2236 = vmatprep.subr.mxu0 0.0
    %2237 = vmatpush2.msra.mxu0 0.0
    %2238 = vmatprep.subr.mxu0 0.0
    %2239 = vmatpush2.msra.mxu0 0.0
    %2240 = vmatprep.subr.mxu0 0.0
    %2241 = vmatpush2.msra.mxu0 0.0
    %2242 = vmatprep.subr.mxu0 0.0
    %2243 = vmatpush2.msra.mxu0 0.0
    %2244 = vmatprep.mubr.f32.mxu0 0.0
    %2245 = vmatmul.mubr.f32.gmra.mxu0 %v2178
    %v2246 = vpop.f32.mrf.mxu0
    %v2247 = vadd.f32 %v2175, %v2246
    %v2248 = vpop.f32.mrf.mxu0
    %2249 = vdwg.mxu0
    %v2250 = vmax.f32 %v2247, 0.0
    %v2251 = vld [vmem:[#allocation30] sm:$0x1]
    %v2252 = vld [vmem:[#allocation31] sm:$0x1]
    %v2253 = vsel %vm1880, %v2250, 0.0
    %2254 = vadd.xlane.f32.xlu0 %v2253
    %v2255 = vpop.xlane.xlu0 %2254
    %v2256 = vmul.f32 %v2255, %v1884
    %v2257 = vsub.f32 %v2250, %v2256
    %v2258 = vmul.f32 %v2257, %v2257
    %v2259 = vsel %vm1880, %v2258, 0.0
    %2260 = vadd.xlane.f32.xlu0 %v2259
    %v2261 = vpop.xlane.xlu0 %2260
    %v2262 = vmul.f32 %v2261, %v1884
    %v2263 = vadd.f32 %v2262, 1e-05
    %v2264 = vrsqrt.pop %v2263
    %v2265 = vmul.f32 %v2257, %v2264
    %v2267 = vlaneseq
    %v2268 = vshrl.u32 %v2267, 7
    %v2269 = vsub.s32 0, %v2268
    %v2270 = vrot.slane %v2251, %v2269
    %v2272 = vmul.f32 %v2265, %v2270
    %v2274 = vlaneseq
    %v2275 = vshrl.u32 %v2274, 7
    %v2276 = vsub.s32 0, %v2275
    %v2277 = vrot.slane %v2252, %v2276
    %v2279 = vadd.f32 %v2272, %v2277
    %v2280 = vld [vmem:[%s9] sm:$0xff]
    %v2281 = vld [vmem:[%s7] sm:$0xff]
    %2283 = vset.pattern.permute.xlu0 0
    %2284 = vperm.xlu0 %2283, %v2280
    %v2285 = vpop.permute.xlu0 %2284
    %v2287 = vmul.f32 %v2281, %v2285
    %v2288 = vld [vmem:[%s57] sm:$0xff]
    %v2289 = vld [vmem:[%s57 + $0x8] sm:$0xff]
    %v2290 = vld [vmem:[%s57 + $0x10] sm:$0xff]
    %v2291 = vld [vmem:[%s57 + $0x18] sm:$0xff]
    %v2292 = vld [vmem:[%s57 + $0x20] sm:$0xff]
    %v2293 = vld [vmem:[%s57 + $0x28] sm:$0xff]
    %v2294 = vld [vmem:[%s57 + $0x30] sm:$0xff]
    %v2295 = vld [vmem:[%s57 + $0x38] sm:$0xff]
    %v2296 = vld [vmem:[#allocation33] sm:$0xff]
    %v2297 = vld [vmem:[#allocation33 + $0x8] sm:$0xff]
    %v2298 = vld [vmem:[#allocation33 + $0x10] sm:$0xff]
    %v2299 = vld [vmem:[#allocation33 + $0x18] sm:$0xff]
    %v2301 = vsel %vm1880, %v2022, 0
    %2303 = vmatprep.subr.mxu0 0.0
    %2304 = vmatpush1.msra.mxu0 0.0
    %2305 = vmatprep.subr.mxu0 0.0
    %2306 = vmatpush1.msra.mxu0 0.0
    %2307 = vmatprep.subr.mxu0 0.0
    %2308 = vmatpush1.msra.mxu0 0.0
    %2309 = vmatprep.subr.mxu0 0.0
    %2310 = vmatpush1.msra.mxu0 0.0
    %2311 = vmatprep.subr.mxu0 0.0
    %2312 = vmatpush1.msra.mxu0 0.0
    %2313 = vmatprep.subr.mxu0 0.0
    %2314 = vmatpush1.msra.mxu0 0.0
    %2315 = vmatprep.subr.mxu0 0.0
    %2316 = vmatpush1.msra.mxu0 0.0
    %2317 = vmatprep.subr.mxu0 0.0
    %2318 = vmatpush1.msra.mxu0 0.0
    %2319 = vmatprep.subr.mxu0 0.0
    %2320 = vmatpush1.msra.mxu0 0.0
    %2321 = vmatprep.subr.mxu0 0.0
    %2322 = vmatpush1.msra.mxu0 0.0
    %2323 = vmatprep.subr.mxu0 0.0
    %2324 = vmatpush1.msra.mxu0 0.0
    %2325 = vmatprep.subr.mxu0 0.0
    %2326 = vmatpush1.msra.mxu0 0.0
    %2327 = vmatprep.subr.mxu0 0.0
    %2328 = vmatpush1.msra.mxu0 %v2299
    %2329 = vmatprep.subr.mxu0 0.0
    %2330 = vmatpush1.msra.mxu0 %v2298
    %2331 = vmatprep.subr.mxu0 0.0
    %2332 = vmatpush1.msra.mxu0 %v2297
    %2333 = vmatprep.subr.mxu0 0.0
    %2334 = vmatpush1.msra.mxu0 %v2296
    %2335 = vmatprep.subr.mxu0 0.0
    %2336 = vmatpush2.msra.mxu0 0.0
    %2337 = vmatprep.subr.mxu0 0.0
    %2338 = vmatpush2.msra.mxu0 0.0
    %2339 = vmatprep.subr.mxu0 0.0
    %2340 = vmatpush2.msra.mxu0 0.0
    %2341 = vmatprep.subr.mxu0 0.0
    %2342 = vmatpush2.msra.mxu0 0.0
    %2343 = vmatprep.subr.mxu0 0.0
    %2344 = vmatpush2.msra.mxu0 0.0
    %2345 = vmatprep.subr.mxu0 0.0
    %2346 = vmatpush2.msra.mxu0 0.0
    %2347 = vmatprep.subr.mxu0 0.0
    %2348 = vmatpush2.msra.mxu0 0.0
    %2349 = vmatprep.subr.mxu0 0.0
    %2350 = vmatpush2.msra.mxu0 0.0
    %2351 = vmatprep.subr.mxu0 0.0
    %2352 = vmatpush2.msra.mxu0 0.0
    %2353 = vmatprep.subr.mxu0 0.0
    %2354 = vmatpush2.msra.mxu0 0.0
    %2355 = vmatprep.subr.mxu0 0.0
    %2356 = vmatpush2.msra.mxu0 0.0
    %2357 = vmatprep.subr.mxu0 0.0
    %2358 = vmatpush2.msra.mxu0 0.0
    %2359 = vmatprep.subr.mxu0 0.0
    %2360 = vmatpush2.msra.mxu0 0.0
    %2361 = vmatprep.subr.mxu0 0.0
    %2362 = vmatpush2.msra.mxu0 0.0
    %2363 = vmatprep.subr.mxu0 0.0
    %2364 = vmatpush2.msra.mxu0 0.0
    %2365 = vmatprep.subr.mxu0 0.0
    %2366 = vmatpush2.msra.mxu0 0.0
    %2367 = vmatprep.mubr.f32.mxu0 0.0
    %2368 = vmatmul.mubr.f32.gmra.mxu0 %v2301
    %v2369 = vpop.f32.mrf.mxu0
    %v2370 = vadd.f32 0.0, %v2369
    %v2371 = vpop.f32.mrf.mxu0
    %2372 = vdwg.mxu0
    %v2374 = vsel %vm484, %v1759, 0
    %2376 = vmatprep.subr.mxu0 0.0
    %2377 = vmatpush1.msra.mxu0 0.0
    %2378 = vmatprep.subr.mxu0 0.0
    %2379 = vmatpush1.msra.mxu0 0.0
    %2380 = vmatprep.subr.mxu0 0.0
    %2381 = vmatpush1.msra.mxu0 0.0
    %2382 = vmatprep.subr.mxu0 0.0
    %2383 = vmatpush1.msra.mxu0 0.0
    %2384 = vmatprep.subr.mxu0 0.0
    %2385 = vmatpush1.msra.mxu0 0.0
    %2386 = vmatprep.subr.mxu0 0.0
    %2387 = vmatpush1.msra.mxu0 0.0
    %2388 = vmatprep.subr.mxu0 0.0
    %2389 = vmatpush1.msra.mxu0 0.0
    %2390 = vmatprep.subr.mxu0 0.0
    %2391 = vmatpush1.msra.mxu0 0.0
    %2392 = vmatprep.subr.mxu0 0.0
    %2393 = vmatpush1.msra.mxu0 %v2295
    %2394 = vmatprep.subr.mxu0 0.0
    %2395 = vmatpush1.msra.mxu0 %v2294
    %2396 = vmatprep.subr.mxu0 0.0
    %2397 = vmatpush1.msra.mxu0 %v2293
    %2398 = vmatprep.subr.mxu0 0.0
    %2399 = vmatpush1.msra.mxu0 %v2292
    %2400 = vmatprep.subr.mxu0 0.0
    %2401 = vmatpush1.msra.mxu0 %v2291
    %2402 = vmatprep.subr.mxu0 0.0
    %2403 = vmatpush1.msra.mxu0 %v2290
    %2404 = vmatprep.subr.mxu0 0.0
    %2405 = vmatpush1.msra.mxu0 %v2289
    %2406 = vmatprep.subr.mxu0 0.0
    %2407 = vmatpush1.msra.mxu0 %v2288
    %2408 = vmatprep.subr.mxu0 0.0
    %2409 = vmatpush2.msra.mxu0 0.0
    %2410 = vmatprep.subr.mxu0 0.0
    %2411 = vmatpush2.msra.mxu0 0.0
    %2412 = vmatprep.subr.mxu0 0.0
    %2413 = vmatpush2.msra.mxu0 0.0
    %2414 = vmatprep.subr.mxu0 0.0
    %2415 = vmatpush2.msra.mxu0 0.0
    %2416 = vmatprep.subr.mxu0 0.0
    %2417 = vmatpush2.msra.mxu0 0.0
    %2418 = vmatprep.subr.mxu0 0.0
    %2419 = vmatpush2.msra.mxu0 0.0
    %2420 = vmatprep.subr.mxu0 0.0
    %2421 = vmatpush2.msra.mxu0 0.0
    %2422 = vmatprep.subr.mxu0 0.0
    %2423 = vmatpush2.msra.mxu0 0.0
    %2424 = vmatprep.subr.mxu0 0.0
    %2425 = vmatpush2.msra.mxu0 0.0
    %2426 = vmatprep.subr.mxu0 0.0
    %2427 = vmatpush2.msra.mxu0 0.0
    %2428 = vmatprep.subr.mxu0 0.0
    %2429 = vmatpush2.msra.mxu0 0.0
    %2430 = vmatprep.subr.mxu0 0.0
    %2431 = vmatpush2.msra.mxu0 0.0
    %2432 = vmatprep.subr.mxu0 0.0
    %2433 = vmatpush2.msra.mxu0 0.0
    %2434 = vmatprep.subr.mxu0 0.0
    %2435 = vmatpush2.msra.mxu0 0.0
    %2436 = vmatprep.subr.mxu0 0.0
    %2437 = vmatpush2.msra.mxu0 0.0
    %2438 = vmatprep.subr.mxu0 0.0
    %2439 = vmatpush2.msra.mxu0 0.0
    %2440 = vmatprep.mubr.f32.mxu0 0.0
    %2441 = vmatmul.mubr.f32.gmra.mxu0 %v2374
    %v2442 = vpop.f32.mrf.mxu0
    %v2443 = vadd.f32 %v2370, %v2442
    %v2444 = vpop.f32.mrf.mxu0
    %2445 = vdwg.mxu0
    %v2446 = vld [vmem:[#allocation34] sm:$0xff]
    %v2447 = vld [vmem:[#allocation34 + $0x8] sm:$0xff]
    %v2448 = vld [vmem:[#allocation34 + $0x10] sm:$0xff]
    %v2449 = vld [vmem:[#allocation34 + $0x18] sm:$0xff]
    %v2451 = vsel %vm1880, %v2279, 0
    %2453 = vmatprep.subr.mxu0 0.0
    %2454 = vmatpush1.msra.mxu0 0.0
    %2455 = vmatprep.subr.mxu0 0.0
    %2456 = vmatpush1.msra.mxu0 0.0
    %2457 = vmatprep.subr.mxu0 0.0
    %2458 = vmatpush1.msra.mxu0 0.0
    %2459 = vmatprep.subr.mxu0 0.0
    %2460 = vmatpush1.msra.mxu0 0.0
    %2461 = vmatprep.subr.mxu0 0.0
    %2462 = vmatpush1.msra.mxu0 0.0
    %2463 = vmatprep.subr.mxu0 0.0
    %2464 = vmatpush1.msra.mxu0 0.0
    %2465 = vmatprep.subr.mxu0 0.0
    %2466 = vmatpush1.msra.mxu0 0.0
    %2467 = vmatprep.subr.mxu0 0.0
    %2468 = vmatpush1.msra.mxu0 0.0
    %2469 = vmatprep.subr.mxu0 0.0
    %2470 = vmatpush1.msra.mxu0 0.0
    %2471 = vmatprep.subr.mxu0 0.0
    %2472 = vmatpush1.msra.mxu0 0.0
    %2473 = vmatprep.subr.mxu0 0.0
    %2474 = vmatpush1.msra.mxu0 0.0
    %2475 = vmatprep.subr.mxu0 0.0
    %2476 = vmatpush1.msra.mxu0 0.0
    %2477 = vmatprep.subr.mxu0 0.0
    %2478 = vmatpush1.msra.mxu0 %v2449
    %2479 = vmatprep.subr.mxu0 0.0
    %2480 = vmatpush1.msra.mxu0 %v2448
    %2481 = vmatprep.subr.mxu0 0.0
    %2482 = vmatpush1.msra.mxu0 %v2447
    %2483 = vmatprep.subr.mxu0 0.0
    %2484 = vmatpush1.msra.mxu0 %v2446
    %2485 = vmatprep.subr.mxu0 0.0
    %2486 = vmatpush2.msra.mxu0 0.0
    %2487 = vmatprep.subr.mxu0 0.0
    %2488 = vmatpush2.msra.mxu0 0.0
    %2489 = vmatprep.subr.mxu0 0.0
    %2490 = vmatpush2.msra.mxu0 0.0
    %2491 = vmatprep.subr.mxu0 0.0
    %2492 = vmatpush2.msra.mxu0 0.0
    %2493 = vmatprep.subr.mxu0 0.0
    %2494 = vmatpush2.msra.mxu0 0.0
    %2495 = vmatprep.subr.mxu0 0.0
    %2496 = vmatpush2.msra.mxu0 0.0
    %2497 = vmatprep.subr.mxu0 0.0
    %2498 = vmatpush2.msra.mxu0 0.0
    %2499 = vmatprep.subr.mxu0 0.0
    %2500 = vmatpush2.msra.mxu0 0.0
    %2501 = vmatprep.subr.mxu0 0.0
    %2502 = vmatpush2.msra.mxu0 0.0
    %2503 = vmatprep.subr.mxu0 0.0
    %2504 = vmatpush2.msra.mxu0 0.0
    %2505 = vmatprep.subr.mxu0 0.0
    %2506 = vmatpush2.msra.mxu0 0.0
    %2507 = vmatprep.subr.mxu0 0.0
    %2508 = vmatpush2.msra.mxu0 0.0
    %2509 = vmatprep.subr.mxu0 0.0
    %2510 = vmatpush2.msra.mxu0 0.0
    %2511 = vmatprep.subr.mxu0 0.0
    %2512 = vmatpush2.msra.mxu0 0.0
    %2513 = vmatprep.subr.mxu0 0.0
    %2514 = vmatpush2.msra.mxu0 0.0
    %2515 = vmatprep.subr.mxu0 0.0
    %2516 = vmatpush2.msra.mxu0 0.0
    %2517 = vmatprep.mubr.f32.mxu0 0.0
    %2518 = vmatmul.mubr.f32.gmra.mxu0 %v2451
    %v2519 = vpop.f32.mrf.mxu0
    %v2520 = vadd.f32 0.0, %v2519
    %v2521 = vpop.f32.mrf.mxu0
    %2522 = vdwg.mxu0
    %v2523 = vadd.f32 %v2443, %v2520
    %v2524 = vld [vmem:[#allocation37] sm:$0x1]
    %v2526 = vlaneseq
    %v2527 = vshrl.u32 %v2526, 7
    %v2528 = vsub.s32 0, %v2527
    %v2529 = vrot.slane %v2524, %v2528
    %v2531 = vadd.f32 %v2523, %v2529
    %s2532 = scalar_lea.vmem %s57, 64
    %v2533 = vld [vmem:[%s2532] sm:$0xff]
    %v2534 = vld [vmem:[%s2532 + $0x8] sm:$0xff]
    %v2535 = vld [vmem:[%s2532 + $0x10] sm:$0xff]
    %v2536 = vld [vmem:[%s2532 + $0x18] sm:$0xff]
    %v2537 = vld [vmem:[%s2532 + $0x20] sm:$0xff]
    %v2538 = vld [vmem:[%s2532 + $0x28] sm:$0xff]
    %v2539 = vld [vmem:[%s2532 + $0x30] sm:$0xff]
    %v2540 = vld [vmem:[%s2532 + $0x38] sm:$0xff]
    %s2541 = scalar_lea.vmem [#allocation33], 32
    %v2542 = vld [vmem:[%s2541] sm:$0xff]
    %v2543 = vld [vmem:[%s2541 + $0x8] sm:$0xff]
    %v2544 = vld [vmem:[%s2541 + $0x10] sm:$0xff]
    %v2545 = vld [vmem:[%s2541 + $0x18] sm:$0xff]
    %2546 = vmatprep.subr.mxu0 0.0
    %2547 = vmatpush1.msra.mxu0 0.0
    %2548 = vmatprep.subr.mxu0 0.0
    %2549 = vmatpush1.msra.mxu0 0.0
    %2550 = vmatprep.subr.mxu0 0.0
    %2551 = vmatpush1.msra.mxu0 0.0
    %2552 = vmatprep.subr.mxu0 0.0
    %2553 = vmatpush1.msra.mxu0 0.0
    %2554 = vmatprep.subr.mxu0 0.0
    %2555 = vmatpush1.msra.mxu0 0.0
    %2556 = vmatprep.subr.mxu0 0.0
    %2557 = vmatpush1.msra.mxu0 0.0
    %2558 = vmatprep.subr.mxu0 0.0
    %2559 = vmatpush1.msra.mxu0 0.0
    %2560 = vmatprep.subr.mxu0 0.0
    %2561 = vmatpush1.msra.mxu0 0.0
    %2562 = vmatprep.subr.mxu0 0.0
    %2563 = vmatpush1.msra.mxu0 0.0
    %2564 = vmatprep.subr.mxu0 0.0
    %2565 = vmatpush1.msra.mxu0 0.0
    %2566 = vmatprep.subr.mxu0 0.0
    %2567 = vmatpush1.msra.mxu0 0.0
    %2568 = vmatprep.subr.mxu0 0.0
    %2569 = vmatpush1.msra.mxu0 0.0
    %2570 = vmatprep.subr.mxu0 0.0
    %2571 = vmatpush1.msra.mxu0 %v2545
    %2572 = vmatprep.subr.mxu0 0.0
    %2573 = vmatpush1.msra.mxu0 %v2544
    %2574 = vmatprep.subr.mxu0 0.0
    %2575 = vmatpush1.msra.mxu0 %v2543
    %2576 = vmatprep.subr.mxu0 0.0
    %2577 = vmatpush1.msra.mxu0 %v2542
    %2578 = vmatprep.subr.mxu0 0.0
    %2579 = vmatpush2.msra.mxu0 0.0
    %2580 = vmatprep.subr.mxu0 0.0
    %2581 = vmatpush2.msra.mxu0 0.0
    %2582 = vmatprep.subr.mxu0 0.0
    %2583 = vmatpush2.msra.mxu0 0.0
    %2584 = vmatprep.subr.mxu0 0.0
    %2585 = vmatpush2.msra.mxu0 0.0
    %2586 = vmatprep.subr.mxu0 0.0
    %2587 = vmatpush2.msra.mxu0 0.0
    %2588 = vmatprep.subr.mxu0 0.0
    %2589 = vmatpush2.msra.mxu0 0.0
    %2590 = vmatprep.subr.mxu0 0.0
    %2591 = vmatpush2.msra.mxu0 0.0
    %2592 = vmatprep.subr.mxu0 0.0
    %2593 = vmatpush2.msra.mxu0 0.0
    %2594 = vmatprep.subr.mxu0 0.0
    %2595 = vmatpush2.msra.mxu0 0.0
    %2596 = vmatprep.subr.mxu0 0.0
    %2597 = vmatpush2.msra.mxu0 0.0
    %2598 = vmatprep.subr.mxu0 0.0
    %2599 = vmatpush2.msra.mxu0 0.0
    %2600 = vmatprep.subr.mxu0 0.0
    %2601 = vmatpush2.msra.mxu0 0.0
    %2602 = vmatprep.subr.mxu0 0.0
    %2603 = vmatpush2.msra.mxu0 0.0
    %2604 = vmatprep.subr.mxu0 0.0
    %2605 = vmatpush2.msra.mxu0 0.0
    %2606 = vmatprep.subr.mxu0 0.0
    %2607 = vmatpush2.msra.mxu0 0.0
    %2608 = vmatprep.subr.mxu0 0.0
    %2609 = vmatpush2.msra.mxu0 0.0
    %2610 = vmatprep.mubr.f32.mxu0 0.0
    %2611 = vmatmul.mubr.f32.gmra.mxu0 %v2301
    %v2612 = vpop.f32.mrf.mxu0
    %v2613 = vadd.f32 0.0, %v2612
    %v2614 = vpop.f32.mrf.mxu0
    %2615 = vdwg.mxu0
    %2616 = vmatprep.subr.mxu0 0.0
    %2617 = vmatpush1.msra.mxu0 0.0
    %2618 = vmatprep.subr.mxu0 0.0
    %2619 = vmatpush1.msra.mxu0 0.0
    %2620 = vmatprep.subr.mxu0 0.0
    %2621 = vmatpush1.msra.mxu0 0.0
    %2622 = vmatprep.subr.mxu0 0.0
    %2623 = vmatpush1.msra.mxu0 0.0
    %2624 = vmatprep.subr.mxu0 0.0
    %2625 = vmatpush1.msra.mxu0 0.0
    %2626 = vmatprep.subr.mxu0 0.0
    %2627 = vmatpush1.msra.mxu0 0.0
    %2628 = vmatprep.subr.mxu0 0.0
    %2629 = vmatpush1.msra.mxu0 0.0
    %2630 = vmatprep.subr.mxu0 0.0
    %2631 = vmatpush1.msra.mxu0 0.0
    %2632 = vmatprep.subr.mxu0 0.0
    %2633 = vmatpush1.msra.mxu0 %v2540
    %2634 = vmatprep.subr.mxu0 0.0
    %2635 = vmatpush1.msra.mxu0 %v2539
    %2636 = vmatprep.subr.mxu0 0.0
    %2637 = vmatpush1.msra.mxu0 %v2538
    %2638 = vmatprep.subr.mxu0 0.0
    %2639 = vmatpush1.msra.mxu0 %v2537
    %2640 = vmatprep.subr.mxu0 0.0
    %2641 = vmatpush1.msra.mxu0 %v2536
    %2642 = vmatprep.subr.mxu0 0.0
    %2643 = vmatpush1.msra.mxu0 %v2535
    %2644 = vmatprep.subr.mxu0 0.0
    %2645 = vmatpush1.msra.mxu0 %v2534
    %2646 = vmatprep.subr.mxu0 0.0
    %2647 = vmatpush1.msra.mxu0 %v2533
    %2648 = vmatprep.subr.mxu0 0.0
    %2649 = vmatpush2.msra.mxu0 0.0
    %2650 = vmatprep.subr.mxu0 0.0
    %2651 = vmatpush2.msra.mxu0 0.0
    %2652 = vmatprep.subr.mxu0 0.0
    %2653 = vmatpush2.msra.mxu0 0.0
    %2654 = vmatprep.subr.mxu0 0.0
    %2655 = vmatpush2.msra.mxu0 0.0
    %2656 = vmatprep.subr.mxu0 0.0
    %2657 = vmatpush2.msra.mxu0 0.0
    %2658 = vmatprep.subr.mxu0 0.0
    %2659 = vmatpush2.msra.mxu0 0.0
    %2660 = vmatprep.subr.mxu0 0.0
    %2661 = vmatpush2.msra.mxu0 0.0
    %2662 = vmatprep.subr.mxu0 0.0
    %2663 = vmatpush2.msra.mxu0 0.0
    %2664 = vmatprep.subr.mxu0 0.0
    %2665 = vmatpush2.msra.mxu0 0.0
    %2666 = vmatprep.subr.mxu0 0.0
    %2667 = vmatpush2.msra.mxu0 0.0
    %2668 = vmatprep.subr.mxu0 0.0
    %2669 = vmatpush2.msra.mxu0 0.0
    %2670 = vmatprep.subr.mxu0 0.0
    %2671 = vmatpush2.msra.mxu0 0.0
    %2672 = vmatprep.subr.mxu0 0.0
    %2673 = vmatpush2.msra.mxu0 0.0
    %2674 = vmatprep.subr.mxu0 0.0
    %2675 = vmatpush2.msra.mxu0 0.0
    %2676 = vmatprep.subr.mxu0 0.0
    %2677 = vmatpush2.msra.mxu0 0.0
    %2678 = vmatprep.subr.mxu0 0.0
    %2679 = vmatpush2.msra.mxu0 0.0
    %2680 = vmatprep.mubr.f32.mxu0 0.0
    %2681 = vmatmul.mubr.f32.gmra.mxu0 %v2374
    %v2682 = vpop.f32.mrf.mxu0
    %v2683 = vadd.f32 %v2613, %v2682
    %v2684 = vpop.f32.mrf.mxu0
    %2685 = vdwg.mxu0
    %s2686 = scalar_lea.vmem [#allocation34], 32
    %v2687 = vld [vmem:[%s2686] sm:$0xff]
    %v2688 = vld [vmem:[%s2686 + $0x8] sm:$0xff]
    %v2689 = vld [vmem:[%s2686 + $0x10] sm:$0xff]
    %v2690 = vld [vmem:[%s2686 + $0x18] sm:$0xff]
    %2691 = vmatprep.subr.mxu0 0.0
    %2692 = vmatpush1.msra.mxu0 0.0
    %2693 = vmatprep.subr.mxu0 0.0
    %2694 = vmatpush1.msra.mxu0 0.0
    %2695 = vmatprep.subr.mxu0 0.0
    %2696 = vmatpush1.msra.mxu0 0.0
    %2697 = vmatprep.subr.mxu0 0.0
    %2698 = vmatpush1.msra.mxu0 0.0
    %2699 = vmatprep.subr.mxu0 0.0
    %2700 = vmatpush1.msra.mxu0 0.0
    %2701 = vmatprep.subr.mxu0 0.0
    %2702 = vmatpush1.msra.mxu0 0.0
    %2703 = vmatprep.subr.mxu0 0.0
    %2704 = vmatpush1.msra.mxu0 0.0
    %2705 = vmatprep.subr.mxu0 0.0
    %2706 = vmatpush1.msra.mxu0 0.0
    %2707 = vmatprep.subr.mxu0 0.0
    %2708 = vmatpush1.msra.mxu0 0.0
    %2709 = vmatprep.subr.mxu0 0.0
    %2710 = vmatpush1.msra.mxu0 0.0
    %2711 = vmatprep.subr.mxu0 0.0
    %2712 = vmatpush1.msra.mxu0 0.0
    %2713 = vmatprep.subr.mxu0 0.0
    %2714 = vmatpush1.msra.mxu0 0.0
    %2715 = vmatprep.subr.mxu0 0.0
    %2716 = vmatpush1.msra.mxu0 %v2690
    %2717 = vmatprep.subr.mxu0 0.0
    %2718 = vmatpush1.msra.mxu0 %v2689
    %2719 = vmatprep.subr.mxu0 0.0
    %2720 = vmatpush1.msra.mxu0 %v2688
    %2721 = vmatprep.subr.mxu0 0.0
    %2722 = vmatpush1.msra.mxu0 %v2687
    %2723 = vmatprep.subr.mxu0 0.0
    %2724 = vmatpush2.msra.mxu0 0.0
    %2725 = vmatprep.subr.mxu0 0.0
    %2726 = vmatpush2.msra.mxu0 0.0
    %2727 = vmatprep.subr.mxu0 0.0
    %2728 = vmatpush2.msra.mxu0 0.0
    %2729 = vmatprep.subr.mxu0 0.0
    %2730 = vmatpush2.msra.mxu0 0.0
    %2731 = vmatprep.subr.mxu0 0.0
    %2732 = vmatpush2.msra.mxu0 0.0
    %2733 = vmatprep.subr.mxu0 0.0
    %2734 = vmatpush2.msra.mxu0 0.0
    %2735 = vmatprep.subr.mxu0 0.0
    %2736 = vmatpush2.msra.mxu0 0.0
    %2737 = vmatprep.subr.mxu0 0.0
    %2738 = vmatpush2.msra.mxu0 0.0
    %2739 = vmatprep.subr.mxu0 0.0
    %2740 = vmatpush2.msra.mxu0 0.0
    %2741 = vmatprep.subr.mxu0 0.0
    %2742 = vmatpush2.msra.mxu0 0.0
    %2743 = vmatprep.subr.mxu0 0.0
    %2744 = vmatpush2.msra.mxu0 0.0
    %2745 = vmatprep.subr.mxu0 0.0
    %2746 = vmatpush2.msra.mxu0 0.0
    %2747 = vmatprep.subr.mxu0 0.0
    %2748 = vmatpush2.msra.mxu0 0.0
    %2749 = vmatprep.subr.mxu0 0.0
    %2750 = vmatpush2.msra.mxu0 0.0
    %2751 = vmatprep.subr.mxu0 0.0
    %2752 = vmatpush2.msra.mxu0 0.0
    %2753 = vmatprep.subr.mxu0 0.0
    %2754 = vmatpush2.msra.mxu0 0.0
    %2755 = vmatprep.mubr.f32.mxu0 0.0
    %2756 = vmatmul.mubr.f32.gmra.mxu0 %v2451
    %v2757 = vpop.f32.mrf.mxu0
    %v2758 = vadd.f32 0.0, %v2757
    %v2759 = vpop.f32.mrf.mxu0
    %2760 = vdwg.mxu0
    %v2761 = vadd.f32 %v2683, %v2758
    %s2762 = scalar_lea.vmem [#allocation37], 1
    %v2763 = vld [vmem:[%s2762] sm:$0x1]
    %v2765 = vlaneseq
    %v2766 = vshrl.u32 %v2765, 7
    %v2767 = vsub.s32 0, %v2766
    %v2768 = vrot.slane %v2763, %v2767
    %v2770 = vadd.f32 %v2761, %v2768
    %s2771 = scalar_lea.vmem %s57, 128
    %v2772 = vld [vmem:[%s2771] sm:$0xff]
    %v2773 = vld [vmem:[%s2771 + $0x8] sm:$0xff]
    %v2774 = vld [vmem:[%s2771 + $0x10] sm:$0xff]
    %v2775 = vld [vmem:[%s2771 + $0x18] sm:$0xff]
    %v2776 = vld [vmem:[%s2771 + $0x20] sm:$0xff]
    %v2777 = vld [vmem:[%s2771 + $0x28] sm:$0xff]
    %v2778 = vld [vmem:[%s2771 + $0x30] sm:$0xff]
    %v2779 = vld [vmem:[%s2771 + $0x38] sm:$0xff]
    %s2780 = scalar_lea.vmem [#allocation33], 64
    %v2781 = vld [vmem:[%s2780] sm:$0xff]
    %v2782 = vld [vmem:[%s2780 + $0x8] sm:$0xff]
    %v2783 = vld [vmem:[%s2780 + $0x10] sm:$0xff]
    %v2784 = vld [vmem:[%s2780 + $0x18] sm:$0xff]
    %2785 = vmatprep.subr.mxu0 0.0
    %2786 = vmatpush1.msra.mxu0 0.0
    %2787 = vmatprep.subr.mxu0 0.0
    %2788 = vmatpush1.msra.mxu0 0.0
    %2789 = vmatprep.subr.mxu0 0.0
    %2790 = vmatpush1.msra.mxu0 0.0
    %2791 = vmatprep.subr.mxu0 0.0
    %2792 = vmatpush1.msra.mxu0 0.0
    %2793 = vmatprep.subr.mxu0 0.0
    %2794 = vmatpush1.msra.mxu0 0.0
    %2795 = vmatprep.subr.mxu0 0.0
    %2796 = vmatpush1.msra.mxu0 0.0
    %2797 = vmatprep.subr.mxu0 0.0
    %2798 = vmatpush1.msra.mxu0 0.0
    %2799 = vmatprep.subr.mxu0 0.0
    %2800 = vmatpush1.msra.mxu0 0.0
    %2801 = vmatprep.subr.mxu0 0.0
    %2802 = vmatpush1.msra.mxu0 0.0
    %2803 = vmatprep.subr.mxu0 0.0
    %2804 = vmatpush1.msra.mxu0 0.0
    %2805 = vmatprep.subr.mxu0 0.0
    %2806 = vmatpush1.msra.mxu0 0.0
    %2807 = vmatprep.subr.mxu0 0.0
    %2808 = vmatpush1.msra.mxu0 0.0
    %2809 = vmatprep.subr.mxu0 0.0
    %2810 = vmatpush1.msra.mxu0 %v2784
    %2811 = vmatprep.subr.mxu0 0.0
    %2812 = vmatpush1.msra.mxu0 %v2783
    %2813 = vmatprep.subr.mxu0 0.0
    %2814 = vmatpush1.msra.mxu0 %v2782
    %2815 = vmatprep.subr.mxu0 0.0
    %2816 = vmatpush1.msra.mxu0 %v2781
    %2817 = vmatprep.subr.mxu0 0.0
    %2818 = vmatpush2.msra.mxu0 0.0
    %2819 = vmatprep.subr.mxu0 0.0
    %2820 = vmatpush2.msra.mxu0 0.0
    %2821 = vmatprep.subr.mxu0 0.0
    %2822 = vmatpush2.msra.mxu0 0.0
    %2823 = vmatprep.subr.mxu0 0.0
    %2824 = vmatpush2.msra.mxu0 0.0
    %2825 = vmatprep.subr.mxu0 0.0
    %2826 = vmatpush2.msra.mxu0 0.0
    %2827 = vmatprep.subr.mxu0 0.0
    %2828 = vmatpush2.msra.mxu0 0.0
    %2829 = vmatprep.subr.mxu0 0.0
    %2830 = vmatpush2.msra.mxu0 0.0
    %2831 = vmatprep.subr.mxu0 0.0
    %2832 = vmatpush2.msra.mxu0 0.0
    %2833 = vmatprep.subr.mxu0 0.0
    %2834 = vmatpush2.msra.mxu0 0.0
    %2835 = vmatprep.subr.mxu0 0.0
    %2836 = vmatpush2.msra.mxu0 0.0
    %2837 = vmatprep.subr.mxu0 0.0
    %2838 = vmatpush2.msra.mxu0 0.0
    %2839 = vmatprep.subr.mxu0 0.0
    %2840 = vmatpush2.msra.mxu0 0.0
    %2841 = vmatprep.subr.mxu0 0.0
    %2842 = vmatpush2.msra.mxu0 0.0
    %2843 = vmatprep.subr.mxu0 0.0
    %2844 = vmatpush2.msra.mxu0 0.0
    %2845 = vmatprep.subr.mxu0 0.0
    %2846 = vmatpush2.msra.mxu0 0.0
    %2847 = vmatprep.subr.mxu0 0.0
    %2848 = vmatpush2.msra.mxu0 0.0
    %2849 = vmatprep.mubr.f32.mxu0 0.0
    %2850 = vmatmul.mubr.f32.gmra.mxu0 %v2301
    %v2851 = vpop.f32.mrf.mxu0
    %v2852 = vadd.f32 0.0, %v2851
    %v2853 = vpop.f32.mrf.mxu0
    %2854 = vdwg.mxu0
    %2855 = vmatprep.subr.mxu0 0.0
    %2856 = vmatpush1.msra.mxu0 0.0
    %2857 = vmatprep.subr.mxu0 0.0
    %2858 = vmatpush1.msra.mxu0 0.0
    %2859 = vmatprep.subr.mxu0 0.0
    %2860 = vmatpush1.msra.mxu0 0.0
    %2861 = vmatprep.subr.mxu0 0.0
    %2862 = vmatpush1.msra.mxu0 0.0
    %2863 = vmatprep.subr.mxu0 0.0
    %2864 = vmatpush1.msra.mxu0 0.0
    %2865 = vmatprep.subr.mxu0 0.0
    %2866 = vmatpush1.msra.mxu0 0.0
    %2867 = vmatprep.subr.mxu0 0.0
    %2868 = vmatpush1.msra.mxu0 0.0
    %2869 = vmatprep.subr.mxu0 0.0
    %2870 = vmatpush1.msra.mxu0 0.0
    %2871 = vmatprep.subr.mxu0 0.0
    %2872 = vmatpush1.msra.mxu0 %v2779
    %2873 = vmatprep.subr.mxu0 0.0
    %2874 = vmatpush1.msra.mxu0 %v2778
    %2875 = vmatprep.subr.mxu0 0.0
    %2876 = vmatpush1.msra.mxu0 %v2777
    %2877 = vmatprep.subr.mxu0 0.0
    %2878 = vmatpush1.msra.mxu0 %v2776
    %2879 = vmatprep.subr.mxu0 0.0
    %2880 = vmatpush1.msra.mxu0 %v2775
    %2881 = vmatprep.subr.mxu0 0.0
    %2882 = vmatpush1.msra.mxu0 %v2774
    %2883 = vmatprep.subr.mxu0 0.0
    %2884 = vmatpush1.msra.mxu0 %v2773
    %2885 = vmatprep.subr.mxu0 0.0
    %2886 = vmatpush1.msra.mxu0 %v2772
    %2887 = vmatprep.subr.mxu0 0.0
    %2888 = vmatpush2.msra.mxu0 0.0
    %2889 = vmatprep.subr.mxu0 0.0
    %2890 = vmatpush2.msra.mxu0 0.0
    %2891 = vmatprep.subr.mxu0 0.0
    %2892 = vmatpush2.msra.mxu0 0.0
    %2893 = vmatprep.subr.mxu0 0.0
    %2894 = vmatpush2.msra.mxu0 0.0
    %2895 = vmatprep.subr.mxu0 0.0
    %2896 = vmatpush2.msra.mxu0 0.0
    %2897 = vmatprep.subr.mxu0 0.0
    %2898 = vmatpush2.msra.mxu0 0.0
    %2899 = vmatprep.subr.mxu0 0.0
    %2900 = vmatpush2.msra.mxu0 0.0
    %2901 = vmatprep.subr.mxu0 0.0
    %2902 = vmatpush2.msra.mxu0 0.0
    %2903 = vmatprep.subr.mxu0 0.0
    %2904 = vmatpush2.msra.mxu0 0.0
    %2905 = vmatprep.subr.mxu0 0.0
    %2906 = vmatpush2.msra.mxu0 0.0
    %2907 = vmatprep.subr.mxu0 0.0
    %2908 = vmatpush2.msra.mxu0 0.0
    %2909 = vmatprep.subr.mxu0 0.0
    %2910 = vmatpush2.msra.mxu0 0.0
    %2911 = vmatprep.subr.mxu0 0.0
    %2912 = vmatpush2.msra.mxu0 0.0
    %2913 = vmatprep.subr.mxu0 0.0
    %2914 = vmatpush2.msra.mxu0 0.0
    %2915 = vmatprep.subr.mxu0 0.0
    %2916 = vmatpush2.msra.mxu0 0.0
    %2917 = vmatprep.subr.mxu0 0.0
    %2918 = vmatpush2.msra.mxu0 0.0
    %2919 = vmatprep.mubr.f32.mxu0 0.0
    %2920 = vmatmul.mubr.f32.gmra.mxu0 %v2374
    %v2921 = vpop.f32.mrf.mxu0
    %v2922 = vadd.f32 %v2852, %v2921
    %v2923 = vpop.f32.mrf.mxu0
    %2924 = vdwg.mxu0
    %s2925 = scalar_lea.vmem [#allocation34], 64
    %v2926 = vld [vmem:[%s2925] sm:$0xff]
    %v2927 = vld [vmem:[%s2925 + $0x8] sm:$0xff]
    %v2928 = vld [vmem:[%s2925 + $0x10] sm:$0xff]
    %v2929 = vld [vmem:[%s2925 + $0x18] sm:$0xff]
    %2930 = vmatprep.subr.mxu0 0.0
    %2931 = vmatpush1.msra.mxu0 0.0
    %2932 = vmatprep.subr.mxu0 0.0
    %2933 = vmatpush1.msra.mxu0 0.0
    %2934 = vmatprep.subr.mxu0 0.0
    %2935 = vmatpush1.msra.mxu0 0.0
    %2936 = vmatprep.subr.mxu0 0.0
    %2937 = vmatpush1.msra.mxu0 0.0
    %2938 = vmatprep.subr.mxu0 0.0
    %2939 = vmatpush1.msra.mxu0 0.0
    %2940 = vmatprep.subr.mxu0 0.0
    %2941 = vmatpush1.msra.mxu0 0.0
    %2942 = vmatprep.subr.mxu0 0.0
    %2943 = vmatpush1.msra.mxu0 0.0
    %2944 = vmatprep.subr.mxu0 0.0
    %2945 = vmatpush1.msra.mxu0 0.0
    %2946 = vmatprep.subr.mxu0 0.0
    %2947 = vmatpush1.msra.mxu0 0.0
    %2948 = vmatprep.subr.mxu0 0.0
    %2949 = vmatpush1.msra.mxu0 0.0
    %2950 = vmatprep.subr.mxu0 0.0
    %2951 = vmatpush1.msra.mxu0 0.0
    %2952 = vmatprep.subr.mxu0 0.0
    %2953 = vmatpush1.msra.mxu0 0.0
    %2954 = vmatprep.subr.mxu0 0.0
    %2955 = vmatpush1.msra.mxu0 %v2929
    %2956 = vmatprep.subr.mxu0 0.0
    %2957 = vmatpush1.msra.mxu0 %v2928
    %2958 = vmatprep.subr.mxu0 0.0
    %2959 = vmatpush1.msra.mxu0 %v2927
    %2960 = vmatprep.subr.mxu0 0.0
    %2961 = vmatpush1.msra.mxu0 %v2926
    %2962 = vmatprep.subr.mxu0 0.0
    %2963 = vmatpush2.msra.mxu0 0.0
    %2964 = vmatprep.subr.mxu0 0.0
    %2965 = vmatpush2.msra.mxu0 0.0
    %2966 = vmatprep.subr.mxu0 0.0
    %2967 = vmatpush2.msra.mxu0 0.0
    %2968 = vmatprep.subr.mxu0 0.0
    %2969 = vmatpush2.msra.mxu0 0.0
    %2970 = vmatprep.subr.mxu0 0.0
    %2971 = vmatpush2.msra.mxu0 0.0
    %2972 = vmatprep.subr.mxu0 0.0
    %2973 = vmatpush2.msra.mxu0 0.0
    %2974 = vmatprep.subr.mxu0 0.0
    %2975 = vmatpush2.msra.mxu0 0.0
    %2976 = vmatprep.subr.mxu0 0.0
    %2977 = vmatpush2.msra.mxu0 0.0
    %2978 = vmatprep.subr.mxu0 0.0
    %2979 = vmatpush2.msra.mxu0 0.0
    %2980 = vmatprep.subr.mxu0 0.0
    %2981 = vmatpush2.msra.mxu0 0.0
    %2982 = vmatprep.subr.mxu0 0.0
    %2983 = vmatpush2.msra.mxu0 0.0
    %2984 = vmatprep.subr.mxu0 0.0
    %2985 = vmatpush2.msra.mxu0 0.0
    %2986 = vmatprep.subr.mxu0 0.0
    %2987 = vmatpush2.msra.mxu0 0.0
    %2988 = vmatprep.subr.mxu0 0.0
    %2989 = vmatpush2.msra.mxu0 0.0
    %2990 = vmatprep.subr.mxu0 0.0
    %2991 = vmatpush2.msra.mxu0 0.0
    %2992 = vmatprep.subr.mxu0 0.0
    %2993 = vmatpush2.msra.mxu0 0.0
    %2994 = vmatprep.mubr.f32.mxu0 0.0
    %2995 = vmatmul.mubr.f32.gmra.mxu0 %v2451
    %v2996 = vpop.f32.mrf.mxu0
    %v2997 = vadd.f32 0.0, %v2996
    %v2998 = vpop.f32.mrf.mxu0
    %2999 = vdwg.mxu0
    %v3000 = vadd.f32 %v2922, %v2997
    %s3001 = scalar_lea.vmem [#allocation37], 2
    %v3002 = vld [vmem:[%s3001] sm:$0x1]
    %v3004 = vlaneseq
    %v3005 = vshrl.u32 %v3004, 7
    %v3006 = vsub.s32 0, %v3005
    %v3007 = vrot.slane %v3002, %v3006
    %v3009 = vadd.f32 %v3000, %v3007
    %v3010 = vld [vmem:[#allocation36] sm:$0xff]
    %v3011 = vld [vmem:[#allocation36 + $0x8] sm:$0xff]
    %v3012 = vld [vmem:[#allocation36 + $0x10] sm:$0xff]
    %v3013 = vld [vmem:[#allocation36 + $0x18] sm:$0xff]
    %v3014 = vld [vmem:[#allocation39] sm:$0x1]
    %v3016 = vlaneseq
    %v3017 = vshrl.u32 %v3016, 7
    %v3018 = vsub.s32 0, %v3017
    %v3019 = vrot.slane %v3014, %v3018
    %v3022 = vsel %vm1880, %v2287, 0
    %3024 = vmatprep.subr.mxu0 0.0
    %3025 = vmatpush1.msra.mxu0 0.0
    %3026 = vmatprep.subr.mxu0 0.0
    %3027 = vmatpush1.msra.mxu0 0.0
    %3028 = vmatprep.subr.mxu0 0.0
    %3029 = vmatpush1.msra.mxu0 0.0
    %3030 = vmatprep.subr.mxu0 0.0
    %3031 = vmatpush1.msra.mxu0 0.0
    %3032 = vmatprep.subr.mxu0 0.0
    %3033 = vmatpush1.msra.mxu0 0.0
    %3034 = vmatprep.subr.mxu0 0.0
    %3035 = vmatpush1.msra.mxu0 0.0
    %3036 = vmatprep.subr.mxu0 0.0
    %3037 = vmatpush1.msra.mxu0 0.0
    %3038 = vmatprep.subr.mxu0 0.0
    %3039 = vmatpush1.msra.mxu0 0.0
    %3040 = vmatprep.subr.mxu0 0.0
    %3041 = vmatpush1.msra.mxu0 0.0
    %3042 = vmatprep.subr.mxu0 0.0
    %3043 = vmatpush1.msra.mxu0 0.0
    %3044 = vmatprep.subr.mxu0 0.0
    %3045 = vmatpush1.msra.mxu0 0.0
    %3046 = vmatprep.subr.mxu0 0.0
    %3047 = vmatpush1.msra.mxu0 0.0
    %3048 = vmatprep.subr.mxu0 0.0
    %3049 = vmatpush1.msra.mxu0 %v3013
    %3050 = vmatprep.subr.mxu0 0.0
    %3051 = vmatpush1.msra.mxu0 %v3012
    %3052 = vmatprep.subr.mxu0 0.0
    %3053 = vmatpush1.msra.mxu0 %v3011
    %3054 = vmatprep.subr.mxu0 0.0
    %3055 = vmatpush1.msra.mxu0 %v3010
    %3056 = vmatprep.subr.mxu0 0.0
    %3057 = vmatpush2.msra.mxu0 0.0
    %3058 = vmatprep.subr.mxu0 0.0
    %3059 = vmatpush2.msra.mxu0 0.0
    %3060 = vmatprep.subr.mxu0 0.0
    %3061 = vmatpush2.msra.mxu0 0.0
    %3062 = vmatprep.subr.mxu0 0.0
    %3063 = vmatpush2.msra.mxu0 0.0
    %3064 = vmatprep.subr.mxu0 0.0
    %3065 = vmatpush2.msra.mxu0 0.0
    %3066 = vmatprep.subr.mxu0 0.0
    %3067 = vmatpush2.msra.mxu0 0.0
    %3068 = vmatprep.subr.mxu0 0.0
    %3069 = vmatpush2.msra.mxu0 0.0
    %3070 = vmatprep.subr.mxu0 0.0
    %3071 = vmatpush2.msra.mxu0 0.0
    %3072 = vmatprep.subr.mxu0 0.0
    %3073 = vmatpush2.msra.mxu0 0.0
    %3074 = vmatprep.subr.mxu0 0.0
    %3075 = vmatpush2.msra.mxu0 0.0
    %3076 = vmatprep.subr.mxu0 0.0
    %3077 = vmatpush2.msra.mxu0 0.0
    %3078 = vmatprep.subr.mxu0 0.0
    %3079 = vmatpush2.msra.mxu0 0.0
    %3080 = vmatprep.subr.mxu0 0.0
    %3081 = vmatpush2.msra.mxu0 0.0
    %3082 = vmatprep.subr.mxu0 0.0
    %3083 = vmatpush2.msra.mxu0 0.0
    %3084 = vmatprep.subr.mxu0 0.0
    %3085 = vmatpush2.msra.mxu0 0.0
    %3086 = vmatprep.subr.mxu0 0.0
    %3087 = vmatpush2.msra.mxu0 0.0
    %3088 = vmatprep.mubr.f32.mxu0 0.0
    %3089 = vmatmul.mubr.f32.gmra.mxu0 %v3022
    %v3090 = vpop.f32.mrf.mxu0
    %v3091 = vadd.f32 %v3019, %v3090
    %v3092 = vpop.f32.mrf.mxu0
    %3093 = vdwg.mxu0
    %s3094 = scalar_lea.vmem [#allocation36], 32
    %v3095 = vld [vmem:[%s3094] sm:$0xff]
    %v3096 = vld [vmem:[%s3094 + $0x8] sm:$0xff]
    %v3097 = vld [vmem:[%s3094 + $0x10] sm:$0xff]
    %v3098 = vld [vmem:[%s3094 + $0x18] sm:$0xff]
    %s3099 = scalar_lea.vmem [#allocation39], 1
    %v3100 = vld [vmem:[%s3099] sm:$0x1]
    %v3102 = vlaneseq
    %v3103 = vshrl.u32 %v3102, 7
    %v3104 = vsub.s32 0, %v3103
    %v3105 = vrot.slane %v3100, %v3104
    %3107 = vmatprep.subr.mxu0 0.0
    %3108 = vmatpush1.msra.mxu0 0.0
    %3109 = vmatprep.subr.mxu0 0.0
    %3110 = vmatpush1.msra.mxu0 0.0
    %3111 = vmatprep.subr.mxu0 0.0
    %3112 = vmatpush1.msra.mxu0 0.0
    %3113 = vmatprep.subr.mxu0 0.0
    %3114 = vmatpush1.msra.mxu0 0.0
    %3115 = vmatprep.subr.mxu0 0.0
    %3116 = vmatpush1.msra.mxu0 0.0
    %3117 = vmatprep.subr.mxu0 0.0
    %3118 = vmatpush1.msra.mxu0 0.0
    %3119 = vmatprep.subr.mxu0 0.0
    %3120 = vmatpush1.msra.mxu0 0.0
    %3121 = vmatprep.subr.mxu0 0.0
    %3122 = vmatpush1.msra.mxu0 0.0
    %3123 = vmatprep.subr.mxu0 0.0
    %3124 = vmatpush1.msra.mxu0 0.0
    %3125 = vmatprep.subr.mxu0 0.0
    %3126 = vmatpush1.msra.mxu0 0.0
    %3127 = vmatprep.subr.mxu0 0.0
    %3128 = vmatpush1.msra.mxu0 0.0
    %3129 = vmatprep.subr.mxu0 0.0
    %3130 = vmatpush1.msra.mxu0 0.0
    %3131 = vmatprep.subr.mxu0 0.0
    %3132 = vmatpush1.msra.mxu0 %v3098
    %3133 = vmatprep.subr.mxu0 0.0
    %3134 = vmatpush1.msra.mxu0 %v3097
    %3135 = vmatprep.subr.mxu0 0.0
    %3136 = vmatpush1.msra.mxu0 %v3096
    %3137 = vmatprep.subr.mxu0 0.0
    %3138 = vmatpush1.msra.mxu0 %v3095
    %3139 = vmatprep.subr.mxu0 0.0
    %3140 = vmatpush2.msra.mxu0 0.0
    %3141 = vmatprep.subr.mxu0 0.0
    %3142 = vmatpush2.msra.mxu0 0.0
    %3143 = vmatprep.subr.mxu0 0.0
    %3144 = vmatpush2.msra.mxu0 0.0
    %3145 = vmatprep.subr.mxu0 0.0
    %3146 = vmatpush2.msra.mxu0 0.0
    %3147 = vmatprep.subr.mxu0 0.0
    %3148 = vmatpush2.msra.mxu0 0.0
    %3149 = vmatprep.subr.mxu0 0.0
    %3150 = vmatpush2.msra.mxu0 0.0
    %3151 = vmatprep.subr.mxu0 0.0
    %3152 = vmatpush2.msra.mxu0 0.0
    %3153 = vmatprep.subr.mxu0 0.0
    %3154 = vmatpush2.msra.mxu0 0.0
    %3155 = vmatprep.subr.mxu0 0.0
    %3156 = vmatpush2.msra.mxu0 0.0
    %3157 = vmatprep.subr.mxu0 0.0
    %3158 = vmatpush2.msra.mxu0 0.0
    %3159 = vmatprep.subr.mxu0 0.0
    %3160 = vmatpush2.msra.mxu0 0.0
    %3161 = vmatprep.subr.mxu0 0.0
    %3162 = vmatpush2.msra.mxu0 0.0
    %3163 = vmatprep.subr.mxu0 0.0
    %3164 = vmatpush2.msra.mxu0 0.0
    %3165 = vmatprep.subr.mxu0 0.0
    %3166 = vmatpush2.msra.mxu0 0.0
    %3167 = vmatprep.subr.mxu0 0.0
    %3168 = vmatpush2.msra.mxu0 0.0
    %3169 = vmatprep.subr.mxu0 0.0
    %3170 = vmatpush2.msra.mxu0 0.0
    %3171 = vmatprep.mubr.f32.mxu0 0.0
    %3172 = vmatmul.mubr.f32.gmra.mxu0 %v3022
    %v3173 = vpop.f32.mrf.mxu0
    %v3174 = vadd.f32 %v3105, %v3173
    %v3175 = vpop.f32.mrf.mxu0
    %3176 = vdwg.mxu0
    %s3177 = scalar_lea.vmem [#allocation36], 64
    %v3178 = vld [vmem:[%s3177] sm:$0xff]
    %v3179 = vld [vmem:[%s3177 + $0x8] sm:$0xff]
    %v3180 = vld [vmem:[%s3177 + $0x10] sm:$0xff]
    %v3181 = vld [vmem:[%s3177 + $0x18] sm:$0xff]
    %s3182 = scalar_lea.vmem [#allocation39], 2
    %v3183 = vld [vmem:[%s3182] sm:$0x1]
    %v3185 = vlaneseq
    %v3186 = vshrl.u32 %v3185, 7
    %v3187 = vsub.s32 0, %v3186
    %v3188 = vrot.slane %v3183, %v3187
    %3190 = vmatprep.subr.mxu0 0.0
    %3191 = vmatpush1.msra.mxu0 0.0
    %3192 = vmatprep.subr.mxu0 0.0
    %3193 = vmatpush1.msra.mxu0 0.0
    %3194 = vmatprep.subr.mxu0 0.0
    %3195 = vmatpush1.msra.mxu0 0.0
    %3196 = vmatprep.subr.mxu0 0.0
    %3197 = vmatpush1.msra.mxu0 0.0
    %3198 = vmatprep.subr.mxu0 0.0
    %3199 = vmatpush1.msra.mxu0 0.0
    %3200 = vmatprep.subr.mxu0 0.0
    %3201 = vmatpush1.msra.mxu0 0.0
    %3202 = vmatprep.subr.mxu0 0.0
    %3203 = vmatpush1.msra.mxu0 0.0
    %3204 = vmatprep.subr.mxu0 0.0
    %3205 = vmatpush1.msra.mxu0 0.0
    %3206 = vmatprep.subr.mxu0 0.0
    %3207 = vmatpush1.msra.mxu0 0.0
    %3208 = vmatprep.subr.mxu0 0.0
    %3209 = vmatpush1.msra.mxu0 0.0
    %3210 = vmatprep.subr.mxu0 0.0
    %3211 = vmatpush1.msra.mxu0 0.0
    %3212 = vmatprep.subr.mxu0 0.0
    %3213 = vmatpush1.msra.mxu0 0.0
    %3214 = vmatprep.subr.mxu0 0.0
    %3215 = vmatpush1.msra.mxu0 %v3181
    %3216 = vmatprep.subr.mxu0 0.0
    %3217 = vmatpush1.msra.mxu0 %v3180
    %3218 = vmatprep.subr.mxu0 0.0
    %3219 = vmatpush1.msra.mxu0 %v3179
    %3220 = vmatprep.subr.mxu0 0.0
    %3221 = vmatpush1.msra.mxu0 %v3178
    %3222 = vmatprep.subr.mxu0 0.0
    %3223 = vmatpush2.msra.mxu0 0.0
    %3224 = vmatprep.subr.mxu0 0.0
    %3225 = vmatpush2.msra.mxu0 0.0
    %3226 = vmatprep.subr.mxu0 0.0
    %3227 = vmatpush2.msra.mxu0 0.0
    %3228 = vmatprep.subr.mxu0 0.0
    %3229 = vmatpush2.msra.mxu0 0.0
    %3230 = vmatprep.subr.mxu0 0.0
    %3231 = vmatpush2.msra.mxu0 0.0
    %3232 = vmatprep.subr.mxu0 0.0
    %3233 = vmatpush2.msra.mxu0 0.0
    %3234 = vmatprep.subr.mxu0 0.0
    %3235 = vmatpush2.msra.mxu0 0.0
    %3236 = vmatprep.subr.mxu0 0.0
    %3237 = vmatpush2.msra.mxu0 0.0
    %3238 = vmatprep.subr.mxu0 0.0
    %3239 = vmatpush2.msra.mxu0 0.0
    %3240 = vmatprep.subr.mxu0 0.0
    %3241 = vmatpush2.msra.mxu0 0.0
    %3242 = vmatprep.subr.mxu0 0.0
    %3243 = vmatpush2.msra.mxu0 0.0
    %3244 = vmatprep.subr.mxu0 0.0
    %3245 = vmatpush2.msra.mxu0 0.0
    %3246 = vmatprep.subr.mxu0 0.0
    %3247 = vmatpush2.msra.mxu0 0.0
    %3248 = vmatprep.subr.mxu0 0.0
    %3249 = vmatpush2.msra.mxu0 0.0
    %3250 = vmatprep.subr.mxu0 0.0
    %3251 = vmatpush2.msra.mxu0 0.0
    %3252 = vmatprep.subr.mxu0 0.0
    %3253 = vmatpush2.msra.mxu0 0.0
    %3254 = vmatprep.mubr.f32.mxu0 0.0
    %3255 = vmatmul.mubr.f32.gmra.mxu0 %v3022
    %v3256 = vpop.f32.mrf.mxu0
    %v3257 = vadd.f32 %v3188, %v3256
    %v3258 = vpop.f32.mrf.mxu0
    %3259 = vdwg.mxu0
    %v3260 = vadd.f32 %v2531, %v3091
    %v3261 = vxor.u32 %v3260, 2147483648
    %v3262 = vmul.f32 %v3261, 1.442695
    %v3263 = vpow.pop %v3262
    %v3264 = vadd.f32 %v3263, 1.0
    %v3265 = vrcp.pop %v3264
    %v3266 = vmul.f32 1.0, %v3265
    %v3267 = vadd.f32 %v2770, %v3174
    %v3268 = vxor.u32 %v3267, 2147483648
    %v3269 = vmul.f32 %v3268, 1.442695
    %v3270 = vpow.pop %v3269
    %v3271 = vadd.f32 %v3270, 1.0
    %v3272 = vrcp.pop %v3271
    %v3273 = vmul.f32 1.0, %v3272
    %v3274 = vmul.f32 %v3266, %v3257
    %v3275 = vadd.f32 %v3009, %v3274
    %v3276 = vtanh.pop %v3275
    %v3277 = vsub.f32 1.0, %v3273
    %v3278 = vmul.f32 %v3277, %v3276
    %v3279 = vmul.f32 %v3273, %v2287
    %v3280 = vadd.f32 %v3278, %v3279
    %3281 = vst.msk [vmem:[%s81] sm:$0xff] %vm1880, %v3280
    %v3282 = vld [vmem:[%s69] sm:$0x1]
    %v3283 = vld [vmem:[%s71] sm:$0x1]
    %v3284 = vsel %vm1880, %v3280, 0.0
    %3285 = vadd.xlane.f32.xlu0 %v3284
    %v3286 = vpop.xlane.xlu0 %3285
    %v3287 = vmul.f32 %v3286, %v1884
    %v3288 = vsub.f32 %v3280, %v3287
    %v3289 = vmul.f32 %v3288, %v3288
    %v3290 = vsel %vm1880, %v3289, 0.0
    %3291 = vadd.xlane.f32.xlu0 %v3290
    %v3292 = vpop.xlane.xlu0 %3291
    %v3293 = vmul.f32 %v3292, %v1884
    %v3294 = vadd.f32 %v3293, 1e-05
    %v3295 = vrsqrt.pop %v3294
    %v3296 = vmul.f32 %v3288, %v3295
    %v3298 = vlaneseq
    %v3299 = vshrl.u32 %v3298, 7
    %v3300 = vsub.s32 0, %v3299
    %v3301 = vrot.slane %v3282, %v3300
    %v3303 = vmul.f32 %v3296, %v3301
    %v3305 = vlaneseq
    %v3306 = vshrl.u32 %v3305, 7
    %v3307 = vsub.s32 0, %v3306
    %v3308 = vrot.slane %v3283, %v3307
    %v3310 = vadd.f32 %v3303, %v3308
    %v3311 = vld [vmem:[%s73] sm:$0xff]
    %v3312 = vld [vmem:[%s73 + $0x8] sm:$0xff]
    %v3313 = vld [vmem:[%s73 + $0x10] sm:$0xff]
    %v3314 = vld [vmem:[%s73 + $0x18] sm:$0xff]
    %v3315 = vld [vmem:[%s75] sm:$0x1]
    %v3317 = vlaneseq
    %v3318 = vshrl.u32 %v3317, 7
    %v3319 = vsub.s32 0, %v3318
    %v3320 = vrot.slane %v3315, %v3319
    %v3323 = vsel %vm1880, %v3310, 0
    %3325 = vmatprep.subr.mxu0 0.0
    %3326 = vmatpush1.msra.mxu0 0.0
    %3327 = vmatprep.subr.mxu0 0.0
    %3328 = vmatpush1.msra.mxu0 0.0
    %3329 = vmatprep.subr.mxu0 0.0
    %3330 = vmatpush1.msra.mxu0 0.0
    %3331 = vmatprep.subr.mxu0 0.0
    %3332 = vmatpush1.msra.mxu0 0.0
    %3333 = vmatprep.subr.mxu0 0.0
    %3334 = vmatpush1.msra.mxu0 0.0
    %3335 = vmatprep.subr.mxu0 0.0
    %3336 = vmatpush1.msra.mxu0 0.0
    %3337 = vmatprep.subr.mxu0 0.0
    %3338 = vmatpush1.msra.mxu0 0.0
    %3339 = vmatprep.subr.mxu0 0.0
    %3340 = vmatpush1.msra.mxu0 0.0
    %3341 = vmatprep.subr.mxu0 0.0
    %3342 = vmatpush1.msra.mxu0 0.0
    %3343 = vmatprep.subr.mxu0 0.0
    %3344 = vmatpush1.msra.mxu0 0.0
    %3345 = vmatprep.subr.mxu0 0.0
    %3346 = vmatpush1.msra.mxu0 0.0
    %3347 = vmatprep.subr.mxu0 0.0
    %3348 = vmatpush1.msra.mxu0 0.0
    %3349 = vmatprep.subr.mxu0 0.0
    %3350 = vmatpush1.msra.mxu0 %v3314
    %3351 = vmatprep.subr.mxu0 0.0
    %3352 = vmatpush1.msra.mxu0 %v3313
    %3353 = vmatprep.subr.mxu0 0.0
    %3354 = vmatpush1.msra.mxu0 %v3312
    %3355 = vmatprep.subr.mxu0 0.0
    %3356 = vmatpush1.msra.mxu0 %v3311
    %3357 = vmatprep.subr.mxu0 0.0
    %3358 = vmatpush2.msra.mxu0 0.0
    %3359 = vmatprep.subr.mxu0 0.0
    %3360 = vmatpush2.msra.mxu0 0.0
    %3361 = vmatprep.subr.mxu0 0.0
    %3362 = vmatpush2.msra.mxu0 0.0
    %3363 = vmatprep.subr.mxu0 0.0
    %3364 = vmatpush2.msra.mxu0 0.0
    %3365 = vmatprep.subr.mxu0 0.0
    %3366 = vmatpush2.msra.mxu0 0.0
    %3367 = vmatprep.subr.mxu0 0.0
    %3368 = vmatpush2.msra.mxu0 0.0
    %3369 = vmatprep.subr.mxu0 0.0
    %3370 = vmatpush2.msra.mxu0 0.0
    %3371 = vmatprep.subr.mxu0 0.0
    %3372 = vmatpush2.msra.mxu0 0.0
    %3373 = vmatprep.subr.mxu0 0.0
    %3374 = vmatpush2.msra.mxu0 0.0
    %3375 = vmatprep.subr.mxu0 0.0
    %3376 = vmatpush2.msra.mxu0 0.0
    %3377 = vmatprep.subr.mxu0 0.0
    %3378 = vmatpush2.msra.mxu0 0.0
    %3379 = vmatprep.subr.mxu0 0.0
    %3380 = vmatpush2.msra.mxu0 0.0
    %3381 = vmatprep.subr.mxu0 0.0
    %3382 = vmatpush2.msra.mxu0 0.0
    %3383 = vmatprep.subr.mxu0 0.0
    %3384 = vmatpush2.msra.mxu0 0.0
    %3385 = vmatprep.subr.mxu0 0.0
    %3386 = vmatpush2.msra.mxu0 0.0
    %3387 = vmatprep.subr.mxu0 0.0
    %3388 = vmatpush2.msra.mxu0 0.0
    %3389 = vmatprep.mubr.f32.mxu0 0.0
    %3390 = vmatmul.mubr.f32.gmra.mxu0 %v3323
    %v3391 = vpop.f32.mrf.mxu0
    %v3392 = vadd.f32 %v3320, %v3391
    %v3393 = vpop.f32.mrf.mxu0
    %3394 = vdwg.mxu0
    %vm3395 = vcmask 39936
    %v3396 = vsel %vm3395, %v3392, -inf
    %3397 = vmax.xlane.f32.xlu0 %v3396
    %v3398 = vpop.xlane.xlu0 %3397
    %v3399 = vsub.f32 %v3392, %v3398
    %v3400 = vmul.f32 %v3399, 1.442695
    %v3401 = vpow.pop %v3400
    %v3402 = vsel %vm3395, %v3401, 0.0
    %3403 = vadd.xlane.f32.xlu0 %v3402
    %v3404 = vpop.xlane.xlu0 %3403
    %v3405 = vlog2.pop %v3404
    %v3406 = vmul.f32 %v3405, 0.6931472
    %v3407 = vadd.f32 %v3406, %v3398
    %v3408 = vlaneseq
    %v3409 = vand.u32 %v3408, 127
    %vm3410 = vcmp.eq.f32.partialorder %v3392, %v3398
    %v3411 = vsel %vm3410, %v3409, 1073741824
    %v3412 = vsel %vm3395, %v3411, 2147483647
    %v3413 = vand.u32 %v3412, 65535
    %v3414 = vshra.s32 %v3412, 16
    %v3415 = vcvt.s32.f32 %v3413
    %v3416 = vcvt.s32.f32 %v3414
    %3417 = vmin.xlane.f32.xlu0 %v3416
    %v3418 = vpop.xlane.xlu0 %3417
    %vm3419 = vcmp.eq.f32.partialorder %v3416, %v3418
    %v3420 = vsel %vm3419, %v3415, inf
    %3421 = vmin.xlane.f32.xlu0 %v3420
    %v3422 = vpop.xlane.xlu0 %3421
    %v3423 = vcvt.f32.s32 %v3422
    %v3424 = vcvt.f32.s32 %v3418
    %v3425 = vshll.u32 %v3424, 16
    %v3426 = vadd.s32 %v3425, %v3423
    %3427 = vst [vmem:[%s77] sm:$0xff] %v3426
    %v3428 = vsub.f32 %v3398, %v3407
    %3429 = vst [vmem:[%s79] sm:$0xff] %v3428
    // Predicated region
    $region254: #{r_actor_forward.1} parent=1 // pred_check
      _
    $region255: #{r_actor_forward.1} parent=1 // pred_check_branch
      %3431 = sbr.rel (0) target = $region257
    $region256: #{r_actor_forward.1} parent=1 // pred_region
      _
    $region257: #{r_actor_forward.1} parent=1 // pred_fallthru
      _
    // Predicated region
    $region258: #{r_actor_forward.1} parent=1 // pred_check
      _
    $region259: #{r_actor_forward.1} parent=1 // pred_check_branch
      %3433 = sbr.rel (0) target = $region261
    $region260: #{r_actor_forward.1} parent=1 // pred_region
      _
    $region261: #{r_actor_forward.1} parent=1 // pred_fallthru
      _
    // Predicated region
    $region262: #{r_actor_forward.1} parent=1 // pred_check
      _
    $region263: #{r_actor_forward.1} parent=1 // pred_check_branch
      %3435 = sbr.rel (0) target = $region265
    $region264: #{r_actor_forward.1} parent=1 // pred_region
      _
    $region265: #{r_actor_forward.1} parent=1 // pred_fallthru
      _
    // Predicated region
    $region266: #{r_actor_forward.1} parent=1 // pred_check
      _
    $region267: #{r_actor_forward.1} parent=1 // pred_check_branch
      %3437 = sbr.rel (0) target = $region269
    $region268: #{r_actor_forward.1} parent=1 // pred_region
      _
    $region269: #{r_actor_forward.1} parent=1 // pred_fallthru
      _
    // Predicated region
    $region270: #{r_actor_forward.1} parent=1 // pred_check
      _
    $region271: #{r_actor_forward.1} parent=1 // pred_check_branch
      %3439 = sbr.rel (0) target = $region273
    $region272: #{r_actor_forward.1} parent=1 // pred_region
      _
    $region273: #{r_actor_forward.1} parent=1 // pred_fallthru
      _
    // Predicated region
    $region274: #{r_actor_forward.1} parent=1 // pred_check
      _
    $region275: #{r_actor_forward.1} parent=1 // pred_check_branch
      %3441 = sbr.rel (0) target = $region277
    $region276: #{r_actor_forward.1} parent=1 // pred_region
      _
    $region277: #{r_actor_forward.1} parent=1 // pred_fallthru
      _
    %3442 = vsyncpa [#allocation3], 1
    %3443 = vsyncpa [#allocation5], 1
    %3444 = vsyncpa [#allocation8], 1
    %3445 = vsyncpa [#allocation11], 1
    %3446 = vsyncpa [#allocation14], 1
    %3447 = vsyncpa [#allocation17], 1
    %3448 = vsyncpa [#allocation20], 1
    %3449 = vsyncpa [#allocation23], 1
    %3450 = vsyncpa [#allocation26], 1
    %3451 = vsyncpa [#allocation29], 1
    %3452 = vsyncpa [#allocation32], 1
    %3453 = vsyncpa [#allocation35], 1
    %3454 = vsyncpa [#allocation38], 1

</llo_original>
